<compile_context>
chip_gen: v7x
topology: tpu7x:2x2x1
jax: 0.10.0
libtpu: 0.0.40
codegen_flags: <defaults>
</compile_context>

<pallas_src>
import functools

import jax
import jax.numpy as jnp
from jax import lax
from jax.experimental import pallas as pl
from jax.experimental.pallas import tpu as pltpu


def _round_up(x, m):
    return (x + m - 1) // m * m


def mutualatt_kernel(valid_l, bias_ref, textf_ref, mask_ref, w2b_ref, w1col_ref,
                     ctx_ref, att_ref):
    # Block shapes:
    #   bias_ref : (Bt, Hp) f32      textf_ref : (Bt*Lp, Hp) bf16
    #   mask_ref : (Bt, Lp) f32
    #   w2b_ref  : (Hp, Hp) bf16 (K,N, resident)
    #   w1col_ref: (Hp, 128) bf16 (only column 0 nonzero, resident)
    #   ctx_ref  : (Bt, Hp) f32      att_ref   : (Bt, Lp) f32 (lane dense)
    Bt, Hp = bias_ref.shape
    BtLp, _ = textf_ref.shape
    Lp = BtLp // Bt

    textf = textf_ref[...]                                                      # bf16

    # text @ W2b^T on the MXU: bf16 operands, f32 accumulation.
    part_txt = jnp.dot(textf, w2b_ref[...], preferred_element_type=jnp.float32)  # (Bt*Lp, Hp)

    # hidden = tanh(text@W2b^T + (in1@W2a^T + b2)); the in1 part is precomputed
    # wrapper-side, so no tiny (Bt,Hp)@(Hp,Hp) dot per grid step.  tanh in f32.
    hidden = jnp.tanh(part_txt.reshape(Bt, Lp, Hp) + bias_ref[...][:, None, :])  # (Bt,Lp,Hp) f32

    # linear1 on the MXU: (Bt*Lp, Hp) @ (Hp, 128) with w1 in column 0 only; the
    # lane-sum over the 128 result lanes (zeros elsewhere) recovers the score
    # exactly while keeping the multiply-accumulate off the VPU/XLU.
    hflat = hidden.reshape(Bt * Lp, Hp).astype(jnp.bfloat16)
    sflat = jnp.dot(hflat, w1col_ref[...], preferred_element_type=jnp.float32)   # (Bt*Lp, 128)
    score = jnp.sum(sflat.reshape(Bt, Lp, 128), axis=-1)                         # (Bt, Lp) f32
    # NOTE: linear1's bias b1 is a constant added to every position; softmax is
    # shift-invariant, so it is dropped (output is mathematically identical).

    # Padded L columns must not enter the softmax denominator (f32 path -> the
    # -1e30 sentinel is safe).
    lane = lax.broadcasted_iota(jnp.int32, score.shape, 1)
    score = jnp.where(lane < valid_l, score, -1e30)

    # softmax over L, mask, renormalize (matches torch exactly), all in f32.
    m = jnp.max(score, axis=-1, keepdims=True)
    e = jnp.exp(score - m)
    att = e * pl.reciprocal(jnp.sum(e, axis=-1, keepdims=True))                  # exact recip
    att = att * mask_ref[...]
    att = att * pl.reciprocal(jnp.sum(att, axis=-1, keepdims=True) + 1e-20)

    # context = att @ text as broadcast-multiply + sublane reduce (<0.2% of FLOPs;
    # deliberately NOT restructured as per-batch (1,Lp)@(Lp,Hp) MXU matvecs).
    text3 = textf.reshape(Bt, Lp, Hp).astype(jnp.float32)
    ctx = jnp.sum(att[:, :, None] * text3, axis=1)                               # (Bt, Hp) f32

    ctx_ref[...] = ctx.astype(ctx_ref.dtype)
    att_ref[...] = att.astype(att_ref.dtype)                                     # lane-dense store


def mutualatt_forward(in1, text, textmask, params, *, batch_tile=None):
    B, L, H = text.shape
    Hp = _round_up(H, 128)
    Lp = _round_up(L, 128)

    # Auto batch tile: keep >= 2 grid steps when the padded batch allows it (so
    # v7x's two TensorCores both get work), >= 8 sublanes, and cap at 16 so the
    # per-step text block + f32 temporaries stay inside v7x's 64 MiB VMEM.
    if batch_tile is None:
        bp8 = _round_up(B, 8)
        batch_tile = min(16, max(8, (bp8 // 2) // 8 * 8))
    Bt = batch_tile
    Bp = _round_up(B, Bt)

    w2, b2, w1 = params["w2"], params["b2"], params["w1"]
    # params["b1"] is intentionally unused: softmax is invariant to it.

    # Hoisted in1 projection: bias_eff = in1 @ W2a^T + b2 (f32, whole batch).
    bias_eff = in1 @ jnp.transpose(w2[:, :H]) + b2[None, :]                      # (B, H)
    bias_eff = jnp.pad(bias_eff, ((0, Bp - B), (0, Hp - H)))

    # W2b pre-transposed to (K, N), zero-padded, bf16 (f32 accumulation in-kernel).
    w2b_t = jnp.pad(jnp.transpose(w2[:, H:]),
                    ((0, Hp - H), (0, Hp - H))).astype(jnp.bfloat16)

    # w1 as an (Hp, 128) column matrix with w1 in column 0 only (bf16).
    w1col = jnp.zeros((Hp, 128), jnp.float32).at[:H, 0].set(
        w1.reshape(H)).astype(jnp.bfloat16)

    # text padded to hardware tiles, cast to bf16, flattened to one MXU operand.
    text_p = jnp.pad(text, ((0, Bp - B), (0, Lp - L), (0, Hp - H))).astype(jnp.bfloat16)
    text_flat = text_p.reshape(Bp * Lp, Hp)
    mask_p = jnp.pad(textmask.astype(jnp.float32), ((0, Bp - B), (0, Lp - L)))

    grid = (Bp // Bt,)
    kernel = functools.partial(mutualatt_kernel, L)

    ctx_p, att_p = pl.pallas_call(
        kernel,
        out_shape=(jax.ShapeDtypeStruct((Bp, Hp), jnp.float32),
                   jax.ShapeDtypeStruct((Bp, Lp), jnp.float32)),
        grid_spec=pltpu.PrefetchScalarGridSpec(
            num_scalar_prefetch=0,
            grid=grid,
            in_specs=[
                pl.BlockSpec((Bt, Hp), lambda i: (i, 0)),          # bias_eff (hoisted in1 proj)
                pl.BlockSpec((Bt * Lp, Hp), lambda i: (i, 0)),     # text (flattened B*L rows, bf16)
                pl.BlockSpec((Bt, Lp), lambda i: (i, 0)),          # textmask
                pl.BlockSpec((Hp, Hp), lambda i: (0, 0)),          # W2b^T (resident, bf16)
                pl.BlockSpec((Hp, 128), lambda i: (0, 0)),         # w1 column matrix (resident)
            ],
            out_specs=(
                pl.BlockSpec((Bt, Hp), lambda i: (i, 0)),          # context
                pl.BlockSpec((Bt, Lp), lambda i: (i, 0)),          # attention (lane-dense)
            ),
        ),
        compiler_params=pltpu.CompilerParams(
            dimension_semantics=("parallel",)),                    # megacore / v7x 2-TC
    )(bias_eff, text_flat, mask_p, w2b_t, w1col)

    ctx = ctx_p[:B, :H]
    att = att_p[:B, :L][:, None, :]
    return ctx, att


def mutualatt_reference(in1, text, textmask, params):
    """Pure-JAX f32 reference mirroring the PyTorch forward."""
    B, L, H = text.shape
    in1_rep = jnp.repeat(in1[:, None, :], L, axis=1)                 # (B, L, H)
    cat = jnp.concatenate([in1_rep, text], axis=-1)                  # (B, L, 2H)
    h = jnp.tanh(cat @ params["w2"].T + params["b2"])                # (B, L, H)
    att = (h @ params["w1"].T + params["b1"])[..., 0]                # (B, L)
    att = jax.nn.softmax(att, axis=-1) * textmask
    att = att / (att.sum(-1, keepdims=True) + 1e-20)
    att = att[:, None, :]                                            # (B, 1, L)
    ctx = jnp.squeeze(att @ text, axis=1)                            # (B, H)
    return ctx, att


if __name__ == "__main__":
    B, L, H = 2, 8, 32

    key = jax.random.PRNGKey(0)
    k_in1, k_text, k_w2, k_b2, k_w1, k_b1 = jax.random.split(key, 6)

    in1 = jax.random.normal(k_in1, (B, H), dtype=jnp.float32)
    text = jax.random.normal(k_text, (B, L, H), dtype=jnp.float32)
    # textmask: first batch fully valid, second batch has 5 valid tokens.
    lengths = jnp.array([L, 5], dtype=jnp.int32)
    textmask = (jnp.arange(L)[None, :] < lengths[:, None]).astype(jnp.float32)

    # Deterministic parameter init (PyTorch-Linear-like uniform scale).
    s2 = 1.0 / jnp.sqrt(2.0 * H)
    s1 = 1.0 / jnp.sqrt(1.0 * H)
    params = {
        "w2": jax.random.uniform(k_w2, (H, 2 * H), jnp.float32, -s2, s2),
        "b2": jax.random.uniform(k_b2, (H,), jnp.float32, -s2, s2),
        "w1": jax.random.uniform(k_w1, (1, H), jnp.float32, -s1, s1),
        "b1": jax.random.uniform(k_b1, (1,), jnp.float32, -s1, s1),
    }

    ctx, att = mutualatt_forward(in1, text, textmask, params)
    jax.block_until_ready((ctx, att))

    ctx_ref, att_ref = mutualatt_reference(in1, text, textmask, params)
    # Tolerance relaxed vs. the pure-f32 reference because the dominant matmuls run
    # in bf16 (with f32 accumulation) per the performance review.
    assert jnp.allclose(ctx, ctx_ref, atol=3e-2, rtol=3e-2), "context mismatch"
    assert jnp.allclose(att, att_ref, atol=3e-2, rtol=3e-2), "attention mismatch"

    print("KERNEL_OK")
</pallas_src>

<mosaic_0001>
module attributes {stable_mosaic.version = 11 : i64} {
  func.func @mutualatt_kernel(%arg0: i32, %arg1: memref<8x128xf32, #tpu.memory_space<vmem>>, %arg2: memref<1024x128xbf16, #tpu.memory_space<vmem>>, %arg3: memref<8x128xf32, #tpu.memory_space<vmem>>, %arg4: memref<128x128xbf16, #tpu.memory_space<vmem>>, %arg5: memref<128x128xbf16, #tpu.memory_space<vmem>>, %arg6: memref<8x128xf32, #tpu.memory_space<vmem>>, %arg7: memref<8x128xf32, #tpu.memory_space<vmem>>) attributes {dimension_semantics = [#tpu.dimension_semantics<parallel>], iteration_bounds = array<i64: 1>, scalar_prefetch = 0 : i64, scratch_operands = 0 : i64, tpu.core_type = #tpu.core_type<tc>, window_params = [{transform_indices = @transform_0, window_bounds = array<i64: 8, 128>}, {transform_indices = @transform_1, window_bounds = array<i64: 1024, 128>}, {transform_indices = @transform_2, window_bounds = array<i64: 8, 128>}, {pipeline_mode = #tpu.pipeline_mode<synchronous>, transform_indices = @transform_3, window_bounds = array<i64: 128, 128>}, {pipeline_mode = #tpu.pipeline_mode<synchronous>, transform_indices = @transform_4, window_bounds = array<i64: 128, 128>}, {transform_indices = @transform_5, window_bounds = array<i64: 8, 128>}, {transform_indices = @transform_6, window_bounds = array<i64: 8, 128>}]} {
    %c0 = arith.constant 0 : index
    %c0_0 = arith.constant 0 : index
    %0 = vector.load %arg2[%c0, %c0_0] : memref<1024x128xbf16, #tpu.memory_space<vmem>>, vector<1024x128xbf16>
    %c0_1 = arith.constant 0 : index
    %c0_2 = arith.constant 0 : index
    %1 = vector.load %arg4[%c0_1, %c0_2] : memref<128x128xbf16, #tpu.memory_space<vmem>>, vector<128x128xbf16>
    %cst = arith.constant dense<0.000000e+00> : vector<1024x128xf32>
    %2 = tpu.matmul %0, %1, %cst {dimension_numbers = #tpu.dot_dimension_numbers<[1], [0], [0], [1], [0, 0, 1, 1], [], []>} : vector<1024x128xbf16>, vector<128x128xbf16>, vector<1024x128xf32> -> vector<1024x128xf32>
    %3 = vector.shape_cast %2 : vector<1024x128xf32> to vector<8x128x128xf32>
    %c0_3 = arith.constant 0 : index
    %c0_4 = arith.constant 0 : index
    %4 = vector.load %arg1[%c0_3, %c0_4] : memref<8x128xf32, #tpu.memory_space<vmem>>, vector<8x128xf32>
    %5 = vector.shape_cast %4 : vector<8x128xf32> to vector<8x1x128xf32>
    %6 = vector.broadcast %5 : vector<8x1x128xf32> to vector<8x128x128xf32>
    %7 = arith.addf %3, %6 : vector<8x128x128xf32>
    %8 = math.tanh %7 : vector<8x128x128xf32>
    %9 = vector.shape_cast %8 : vector<8x128x128xf32> to vector<1024x128xf32>
    %10 = arith.truncf %9 : vector<1024x128xf32> to vector<1024x128xbf16>
    %c0_5 = arith.constant 0 : index
    %c0_6 = arith.constant 0 : index
    %11 = vector.load %arg5[%c0_5, %c0_6] : memref<128x128xbf16, #tpu.memory_space<vmem>>, vector<128x128xbf16>
    %cst_7 = arith.constant dense<0.000000e+00> : vector<1024x128xf32>
    %12 = tpu.matmul %10, %11, %cst_7 {dimension_numbers = #tpu.dot_dimension_numbers<[1], [0], [0], [1], [0, 0, 1, 1], [], []>} : vector<1024x128xbf16>, vector<128x128xbf16>, vector<1024x128xf32> -> vector<1024x128xf32>
    %13 = vector.shape_cast %12 : vector<1024x128xf32> to vector<8x128x128xf32>
    %cst_8 = arith.constant dense<0.000000e+00> : vector<8x128xf32>
    %14 = vector.multi_reduction <add>, %13, %cst_8 [2] : vector<8x128x128xf32> to vector<8x128xf32>
    %15 = tpu.iota {dimensions = array<i32: 1>} : vector<8x128xi32>
    %c8_i32 = arith.constant 8 : i32
    %16 = vector.broadcast %c8_i32 : i32 to vector<8x128xi32>
    %17 = arith.cmpi slt, %15, %16 : vector<8x128xi32>
    %cst_9 = arith.constant -1.000000e+30 : f32
    %18 = vector.broadcast %cst_9 : f32 to vector<8x128xf32>
    %19 = arith.select %17, %14, %18 : vector<8x128xi1>, vector<8x128xf32>
    %cst_10 = arith.constant dense<0xFF800000> : vector<8xf32>
    %20 = vector.multi_reduction <maximumf>, %19, %cst_10 [1] : vector<8x128xf32> to vector<8xf32>
    %21 = vector.shape_cast %20 : vector<8xf32> to vector<8x1xf32>
    %22 = vector.broadcast %21 : vector<8x1xf32> to vector<8x128xf32>
    %23 = arith.subf %19, %22 : vector<8x128xf32>
    %24 = math.exp %23 : vector<8x128xf32>
    %cst_11 = arith.constant dense<0.000000e+00> : vector<8xf32>
    %25 = vector.multi_reduction <add>, %24, %cst_11 [1] : vector<8x128xf32> to vector<8xf32>
    %26 = vector.shape_cast %25 : vector<8xf32> to vector<8x1xf32>
    %27 = tpu.reciprocal %26 : vector<8x1xf32> -> vector<8x1xf32>
    %28 = vector.broadcast %27 : vector<8x1xf32> to vector<8x128xf32>
    %29 = arith.mulf %24, %28 : vector<8x128xf32>
    %c0_12 = arith.constant 0 : index
    %c0_13 = arith.constant 0 : index
    %30 = vector.load %arg3[%c0_12, %c0_13] : memref<8x128xf32, #tpu.memory_space<vmem>>, vector<8x128xf32>
    %31 = arith.mulf %29, %30 : vector<8x128xf32>
    %cst_14 = arith.constant dense<0.000000e+00> : vector<8xf32>
    %32 = vector.multi_reduction <add>, %31, %cst_14 [1] : vector<8x128xf32> to vector<8xf32>
    %33 = vector.shape_cast %32 : vector<8xf32> to vector<8x1xf32>
    %cst_15 = arith.constant 9.99999968E-21 : f32
    %34 = vector.broadcast %cst_15 : f32 to vector<8x1xf32>
    %35 = arith.addf %33, %34 : vector<8x1xf32>
    %36 = tpu.reciprocal %35 : vector<8x1xf32> -> vector<8x1xf32>
    %37 = vector.broadcast %36 : vector<8x1xf32> to vector<8x128xf32>
    %38 = arith.mulf %31, %37 : vector<8x128xf32>
    %39 = vector.shape_cast %0 : vector<1024x128xbf16> to vector<8x128x128xbf16>
    %40 = arith.extf %39 : vector<8x128x128xbf16> to vector<8x128x128xf32>
    %41 = vector.shape_cast %38 : vector<8x128xf32> to vector<8x128x1xf32>
    %42 = vector.broadcast %41 : vector<8x128x1xf32> to vector<8x128x128xf32>
    %43 = arith.mulf %42, %40 : vector<8x128x128xf32>
    %cst_16 = arith.constant dense<0.000000e+00> : vector<8x128xf32>
    %44 = vector.multi_reduction <add>, %43, %cst_16 [1] : vector<8x128x128xf32> to vector<8x128xf32>
    %c0_17 = arith.constant 0 : index
    %c0_18 = arith.constant 0 : index
    %45 = vector.load %arg6[%c0_17, %c0_18] : memref<8x128xf32, #tpu.memory_space<vmem>>, vector<8x128xf32>
    tpu.vector_store %arg6[%c0_17, %c0_18], %44 {strides = array<i32>} : memref<8x128xf32, #tpu.memory_space<vmem>>, vector<8x128xf32>,
    %c0_19 = arith.constant 0 : index
    %c0_20 = arith.constant 0 : index
    %46 = vector.load %arg7[%c0_19, %c0_20] : memref<8x128xf32, #tpu.memory_space<vmem>>, vector<8x128xf32>
    tpu.vector_store %arg7[%c0_19, %c0_20], %38 {strides = array<i32>} : memref<8x128xf32, #tpu.memory_space<vmem>>, vector<8x128xf32>,
    return
  }
  func.func @transform_0(%arg0: i32) -> (i32, i32) {
    %c0_i32 = arith.constant 0 : i32
    %c0_i32_0 = arith.constant 0 : i32
    return %arg0, %c0_i32 : i32, i32
  }
  func.func @transform_1(%arg0: i32) -> (i32, i32) {
    %c0_i32 = arith.constant 0 : i32
    %c0_i32_0 = arith.constant 0 : i32
    return %arg0, %c0_i32 : i32, i32
  }
  func.func @transform_2(%arg0: i32) -> (i32, i32) {
    %c0_i32 = arith.constant 0 : i32
    %c0_i32_0 = arith.constant 0 : i32
    return %arg0, %c0_i32 : i32, i32
  }
  func.func @transform_3(%arg0: i32) -> (i32, i32) {
    %c0_i32 = arith.constant 0 : i32
    %c0_i32_0 = arith.constant 0 : i32
    %c0_i32_1 = arith.constant 0 : i32
    return %c0_i32, %c0_i32_0 : i32, i32
  }
  func.func @transform_4(%arg0: i32) -> (i32, i32) {
    %c0_i32 = arith.constant 0 : i32
    %c0_i32_0 = arith.constant 0 : i32
    %c0_i32_1 = arith.constant 0 : i32
    return %c0_i32, %c0_i32_0 : i32, i32
  }
  func.func @transform_5(%arg0: i32) -> (i32, i32) {
    %c0_i32 = arith.constant 0 : i32
    %c0_i32_0 = arith.constant 0 : i32
    return %arg0, %c0_i32 : i32, i32
  }
  func.func @transform_6(%arg0: i32) -> (i32, i32) {
    %c0_i32 = arith.constant 0 : i32
    %c0_i32_0 = arith.constant 0 : i32
    return %arg0, %c0_i32 : i32, i32
  }
}

</mosaic_0001>

<llo_original>
// kernel: tpu_custom_call.1
$region0: #{tpu_custom_call.1}
  #allocation0 [shape = 'u32[]', space=smem, size = 0x4, offset = 0x4, fixed_abs, tag = 'smem constant byte address 0x4 - core index']
  #allocation1 [shape = 'u32[144,128]{1,0:T(1,128)}', space=vmem, size = 0x12000, scoped, tag = 'internal scratch']
  %s0 = inlined_call_operand.hbm [shape: f32[8,128], index: 0, kind: input, shape index: {}]
  %s1 = inlined_call_operand.hbm [shape: bf16[1024,128], index: 1, kind: input, shape index: {}]
  %s2 = inlined_call_operand.hbm [shape: f32[8,128], index: 2, kind: input, shape index: {}]
  %s3 = inlined_call_operand.hbm [shape: bf16[128,128], index: 3, kind: input, shape index: {}]
  %s4 = inlined_call_operand.hbm [shape: bf16[128,128], index: 4, kind: input, shape index: {}]
  %s5 = inlined_call_operand.hbm [shape: f32[8,128], index: 5, kind: output, shape index: {0}]
  %s6 = inlined_call_operand.hbm [shape: f32[8,128], index: 6, kind: output, shape index: {1}]
  %7 = xla_tuple %s5, %s6
  %s8 = sld [smem:[#allocation0]]
  $region58: #{tpu_custom_call.1} parent=0
    _
  %s10 = ssub.s32 1, %s8
  %s11 = scalar_select 0, %s10, %s8
  $region1: #{tpu_custom_call.1} parent=0
    #allocation2 [shape = 'u8[4096]{0}', space=vmem, size = 0x1000, scoped, tag = 'input window, operand 0, single buffered']
    #allocation3 [shape = 's32[1]{0}', space=sflag, size = 0x4, scoped, tag = 'scoped memory for tpu_custom_call.1']
    #allocation4 [shape = 's32[1]{0}', space=sflag, size = 0x4, scoped, tag = 'scoped memory for tpu_custom_call.1']
    #allocation5 [shape = 'u8[262144]{0}', space=vmem, size = 0x40000, scoped, tag = 'input window, operand 1, single buffered']
    #allocation6 [shape = 's32[1]{0}', space=sflag, size = 0x4, scoped, tag = 'scoped memory for tpu_custom_call.1']
    #allocation7 [shape = 'u8[4096]{0}', space=vmem, size = 0x1000, scoped, tag = 'input window, operand 2, single buffered']
    #allocation8 [shape = 'u8[32768]{0}', space=vmem, size = 0x8000, scoped, tag = 'input window, operand 3, single buffered']
    #allocation9 [shape = 's32[1]{0}', space=sflag, size = 0x4, scoped, tag = 'scoped memory for tpu_custom_call.1']
    #allocation10 [shape = 'u8[32768]{0}', space=vmem, size = 0x8000, scoped, tag = 'input window, operand 4, single buffered']
    #allocation11 [shape = 'u8[4096]{0}', space=vmem, size = 0x1000, scoped, tag = 'output window, operand 0, single buffered']
    #allocation12 [shape = 'u8[4096]{0}', space=vmem, size = 0x1000, scoped, tag = 'output window, operand 1, single buffered']
    #allocation13 [shape = 's32[1]{0}', space=sflag, size = 0x4, scoped, tag = 'scoped memory for tpu_custom_call.1']
    %12 = vsyncpa [#allocation3], 0
    %13 = vsyncpa [#allocation6], 0
    %14 = vsyncpa [#allocation9], 0
    %15 = vsyncpa [#allocation4], 0
    %16 = vsyncpa [#allocation13], 0
    // Predicated region
    $region2: #{tpu_custom_call.1} parent=1 // pred_check
      _
    $region3: #{tpu_custom_call.1} parent=1 // pred_check_branch
      %18 = sbr.rel (0) target = $region5
    $region4: #{tpu_custom_call.1} parent=1 // pred_region
      %s20 = ssub.s32 128, 128
      %21 = vsyncadd [#allocation3], %s20
      %s23 = sshll.u32 [#allocation2], 4
      %s24 = int_to_ptr.vmem [resolvable:$true] %s23
      %26 = dma.hbm_to_vmem [thread:$0]  %s0, 128, %s24, [#allocation3]
    $region5: #{tpu_custom_call.1} parent=1 // pred_fallthru
      _
    // Predicated region
    $region6: #{tpu_custom_call.1} parent=1 // pred_check
      _
    $region7: #{tpu_custom_call.1} parent=1 // pred_check_branch
      %28 = sbr.rel (0) target = $region9
    $region8: #{tpu_custom_call.1} parent=1 // pred_region
      %s30 = ssub.s32 8192, 8192
      %31 = vsyncadd [#allocation6], %s30
      %s32 = sshll.u32 [#allocation5], 4
      %s33 = int_to_ptr.vmem [resolvable:$true] %s32
      %38 = dma.hbm_to_vmem [thread:$0]  %s1, 8192, %s33, [#allocation6], 64, 64, 4
    $region9: #{tpu_custom_call.1} parent=1 // pred_fallthru
      _
    // Predicated region
    $region10: #{tpu_custom_call.1} parent=1 // pred_check
      _
    $region11: #{tpu_custom_call.1} parent=1 // pred_check_branch
      %40 = sbr.rel (0) target = $region13
    $region12: #{tpu_custom_call.1} parent=1 // pred_region
      %s42 = ssub.s32 128, 128
      %43 = vsyncadd [#allocation6], %s42
      %s45 = sshll.u32 [#allocation7], 4
      %s46 = int_to_ptr.vmem [resolvable:$true] %s45
      %48 = dma.hbm_to_vmem [thread:$0]  %s2, 128, %s46, [#allocation6]
    $region13: #{tpu_custom_call.1} parent=1 // pred_fallthru
      _
    // Predicated region
    $region14: #{tpu_custom_call.1} parent=1 // pred_check
      _
    $region15: #{tpu_custom_call.1} parent=1 // pred_check_branch
      %50 = sbr.rel (0) target = $region17
    $region16: #{tpu_custom_call.1} parent=1 // pred_region
      %s52 = ssub.s32 1024, 1024
      %53 = vsyncadd [#allocation9], %s52
      %s54 = sshll.u32 [#allocation8], 4
      %s55 = int_to_ptr.vmem [resolvable:$true] %s54
      %60 = dma.hbm_to_vmem [thread:$0]  %s3, 1024, %s55, [#allocation9], 64, 64, 4
    $region17: #{tpu_custom_call.1} parent=1 // pred_fallthru
      _
    // Predicated region
    $region18: #{tpu_custom_call.1} parent=1 // pred_check
      _
    $region19: #{tpu_custom_call.1} parent=1 // pred_check_branch
      %62 = sbr.rel (0) target = $region21
    $region20: #{tpu_custom_call.1} parent=1 // pred_region
      %s64 = ssub.s32 1024, 1024
      %65 = vsyncadd [#allocation9], %s64
      %s66 = sshll.u32 [#allocation10], 4
      %s67 = int_to_ptr.vmem [resolvable:$true] %s66
      %72 = dma.hbm_to_vmem [thread:$0]  %s4, 1024, %s67, [#allocation9], 64, 64, 4
    $region21: #{tpu_custom_call.1} parent=1 // pred_fallthru
      _
    // Predicated region
    $region22: #{tpu_custom_call.1} parent=1 // pred_check
      _
    $region23: #{tpu_custom_call.1} parent=1 // pred_check_branch
      %74 = sbr.rel (0) target = $region25
    $region24: #{tpu_custom_call.1} parent=1 // pred_region
      %75 = dma.done [#allocation3], 128
    $region25: #{tpu_custom_call.1} parent=1 // pred_fallthru
      _
    // Predicated region
    $region26: #{tpu_custom_call.1} parent=1 // pred_check
      _
    $region27: #{tpu_custom_call.1} parent=1 // pred_check_branch
      %77 = sbr.rel (0) target = $region29
    $region28: #{tpu_custom_call.1} parent=1 // pred_region
      %78 = dma.done [#allocation6], 8192
    $region29: #{tpu_custom_call.1} parent=1 // pred_fallthru
      _
    // Predicated region
    $region30: #{tpu_custom_call.1} parent=1 // pred_check
      _
    $region31: #{tpu_custom_call.1} parent=1 // pred_check_branch
      %80 = sbr.rel (0) target = $region33
    $region32: #{tpu_custom_call.1} parent=1 // pred_region
      %81 = dma.done [#allocation6], 128
    $region33: #{tpu_custom_call.1} parent=1 // pred_fallthru
      _
    // Predicated region
    $region34: #{tpu_custom_call.1} parent=1 // pred_check
      _
    $region35: #{tpu_custom_call.1} parent=1 // pred_check_branch
      %83 = sbr.rel (0) target = $region37
    $region36: #{tpu_custom_call.1} parent=1 // pred_region
      %84 = dma.done [#allocation9], 1024
    $region37: #{tpu_custom_call.1} parent=1 // pred_fallthru
      _
    // Predicated region
    $region38: #{tpu_custom_call.1} parent=1 // pred_check
      _
    $region39: #{tpu_custom_call.1} parent=1 // pred_check_branch
      %86 = sbr.rel (0) target = $region41
    $region40: #{tpu_custom_call.1} parent=1 // pred_region
      %87 = dma.done [#allocation9], 1024
    $region41: #{tpu_custom_call.1} parent=1 // pred_fallthru
      _
    %v89 = vld [vmem:[#allocation5] sm:$0xf]
    %v90 = vld [vmem:[#allocation5 + $0x4] sm:$0xf]
    %v91 = vld [vmem:[#allocation5 + $0x8] sm:$0xf]
    %v92 = vld [vmem:[#allocation5 + $0xc] sm:$0xf]
    %v93 = vld [vmem:[#allocation5 + $0x10] sm:$0xf]
    %v94 = vld [vmem:[#allocation5 + $0x14] sm:$0xf]
    %v95 = vld [vmem:[#allocation5 + $0x18] sm:$0xf]
    %v96 = vld [vmem:[#allocation5 + $0x1c] sm:$0xf]
    %v97 = vld [vmem:[#allocation5 + $0x20] sm:$0xf]
    %v98 = vld [vmem:[#allocation5 + $0x24] sm:$0xf]
    %v99 = vld [vmem:[#allocation5 + $0x28] sm:$0xf]
    %v100 = vld [vmem:[#allocation5 + $0x2c] sm:$0xf]
    %v101 = vld [vmem:[#allocation5 + $0x30] sm:$0xf]
    %v102 = vld [vmem:[#allocation5 + $0x34] sm:$0xf]
    %v103 = vld [vmem:[#allocation5 + $0x38] sm:$0xf]
    %v104 = vld [vmem:[#allocation5 + $0x3c] sm:$0xf]
    %v105 = vld [vmem:[#allocation5 + $0x40] sm:$0xf]
    %v106 = vld [vmem:[#allocation5 + $0x44] sm:$0xf]
    %v107 = vld [vmem:[#allocation5 + $0x48] sm:$0xf]
    %v108 = vld [vmem:[#allocation5 + $0x4c] sm:$0xf]
    %v109 = vld [vmem:[#allocation5 + $0x50] sm:$0xf]
    %v110 = vld [vmem:[#allocation5 + $0x54] sm:$0xf]
    %v111 = vld [vmem:[#allocation5 + $0x58] sm:$0xf]
    %v112 = vld [vmem:[#allocation5 + $0x5c] sm:$0xf]
    %v113 = vld [vmem:[#allocation5 + $0x60] sm:$0xf]
    %v114 = vld [vmem:[#allocation5 + $0x64] sm:$0xf]
    %v115 = vld [vmem:[#allocation5 + $0x68] sm:$0xf]
    %v116 = vld [vmem:[#allocation5 + $0x6c] sm:$0xf]
    %v117 = vld [vmem:[#allocation5 + $0x70] sm:$0xf]
    %v118 = vld [vmem:[#allocation5 + $0x74] sm:$0xf]
    %v119 = vld [vmem:[#allocation5 + $0x78] sm:$0xf]
    %v120 = vld [vmem:[#allocation5 + $0x7c] sm:$0xf]
    %v121 = vld [vmem:[#allocation5 + $0x80] sm:$0xf]
    %v122 = vld [vmem:[#allocation5 + $0x84] sm:$0xf]
    %v123 = vld [vmem:[#allocation5 + $0x88] sm:$0xf]
    %v124 = vld [vmem:[#allocation5 + $0x8c] sm:$0xf]
    %v125 = vld [vmem:[#allocation5 + $0x90] sm:$0xf]
    %v126 = vld [vmem:[#allocation5 + $0x94] sm:$0xf]
    %v127 = vld [vmem:[#allocation5 + $0x98] sm:$0xf]
    %v128 = vld [vmem:[#allocation5 + $0x9c] sm:$0xf]
    %v129 = vld [vmem:[#allocation5 + $0xa0] sm:$0xf]
    %v130 = vld [vmem:[#allocation5 + $0xa4] sm:$0xf]
    %v131 = vld [vmem:[#allocation5 + $0xa8] sm:$0xf]
    %v132 = vld [vmem:[#allocation5 + $0xac] sm:$0xf]
    %v133 = vld [vmem:[#allocation5 + $0xb0] sm:$0xf]
    %v134 = vld [vmem:[#allocation5 + $0xb4] sm:$0xf]
    %v135 = vld [vmem:[#allocation5 + $0xb8] sm:$0xf]
    %v136 = vld [vmem:[#allocation5 + $0xbc] sm:$0xf]
    %v137 = vld [vmem:[#allocation5 + $0xc0] sm:$0xf]
    %v138 = vld [vmem:[#allocation5 + $0xc4] sm:$0xf]
    %v139 = vld [vmem:[#allocation5 + $0xc8] sm:$0xf]
    %v140 = vld [vmem:[#allocation5 + $0xcc] sm:$0xf]
    %v141 = vld [vmem:[#allocation5 + $0xd0] sm:$0xf]
    %v142 = vld [vmem:[#allocation5 + $0xd4] sm:$0xf]
    %v143 = vld [vmem:[#allocation5 + $0xd8] sm:$0xf]
    %v144 = vld [vmem:[#allocation5 + $0xdc] sm:$0xf]
    %v145 = vld [vmem:[#allocation5 + $0xe0] sm:$0xf]
    %v146 = vld [vmem:[#allocation5 + $0xe4] sm:$0xf]
    %v147 = vld [vmem:[#allocation5 + $0xe8] sm:$0xf]
    %v148 = vld [vmem:[#allocation5 + $0xec] sm:$0xf]
    %v149 = vld [vmem:[#allocation5 + $0xf0] sm:$0xf]
    %v150 = vld [vmem:[#allocation5 + $0xf4] sm:$0xf]
    %v151 = vld [vmem:[#allocation5 + $0xf8] sm:$0xf]
    %v152 = vld [vmem:[#allocation5 + $0xfc] sm:$0xf]
    %v153 = vld [vmem:[#allocation5 + $0x100] sm:$0xf]
    %v154 = vld [vmem:[#allocation5 + $0x104] sm:$0xf]
    %v155 = vld [vmem:[#allocation5 + $0x108] sm:$0xf]
    %v156 = vld [vmem:[#allocation5 + $0x10c] sm:$0xf]
    %v157 = vld [vmem:[#allocation5 + $0x110] sm:$0xf]
    %v158 = vld [vmem:[#allocation5 + $0x114] sm:$0xf]
    %v159 = vld [vmem:[#allocation5 + $0x118] sm:$0xf]
    %v160 = vld [vmem:[#allocation5 + $0x11c] sm:$0xf]
    %v161 = vld [vmem:[#allocation5 + $0x120] sm:$0xf]
    %v162 = vld [vmem:[#allocation5 + $0x124] sm:$0xf]
    %v163 = vld [vmem:[#allocation5 + $0x128] sm:$0xf]
    %v164 = vld [vmem:[#allocation5 + $0x12c] sm:$0xf]
    %v165 = vld [vmem:[#allocation5 + $0x130] sm:$0xf]
    %v166 = vld [vmem:[#allocation5 + $0x134] sm:$0xf]
    %v167 = vld [vmem:[#allocation5 + $0x138] sm:$0xf]
    %v168 = vld [vmem:[#allocation5 + $0x13c] sm:$0xf]
    %v169 = vld [vmem:[#allocation5 + $0x140] sm:$0xf]
    %v170 = vld [vmem:[#allocation5 + $0x144] sm:$0xf]
    %v171 = vld [vmem:[#allocation5 + $0x148] sm:$0xf]
    %v172 = vld [vmem:[#allocation5 + $0x14c] sm:$0xf]
    %v173 = vld [vmem:[#allocation5 + $0x150] sm:$0xf]
    %v174 = vld [vmem:[#allocation5 + $0x154] sm:$0xf]
    %v175 = vld [vmem:[#allocation5 + $0x158] sm:$0xf]
    %v176 = vld [vmem:[#allocation5 + $0x15c] sm:$0xf]
    %v177 = vld [vmem:[#allocation5 + $0x160] sm:$0xf]
    %v178 = vld [vmem:[#allocation5 + $0x164] sm:$0xf]
    %v179 = vld [vmem:[#allocation5 + $0x168] sm:$0xf]
    %v180 = vld [vmem:[#allocation5 + $0x16c] sm:$0xf]
    %v181 = vld [vmem:[#allocation5 + $0x170] sm:$0xf]
    %v182 = vld [vmem:[#allocation5 + $0x174] sm:$0xf]
    %v183 = vld [vmem:[#allocation5 + $0x178] sm:$0xf]
    %v184 = vld [vmem:[#allocation5 + $0x17c] sm:$0xf]
    %v185 = vld [vmem:[#allocation5 + $0x180] sm:$0xf]
    %v186 = vld [vmem:[#allocation5 + $0x184] sm:$0xf]
    %v187 = vld [vmem:[#allocation5 + $0x188] sm:$0xf]
    %v188 = vld [vmem:[#allocation5 + $0x18c] sm:$0xf]
    %v189 = vld [vmem:[#allocation5 + $0x190] sm:$0xf]
    %v190 = vld [vmem:[#allocation5 + $0x194] sm:$0xf]
    %v191 = vld [vmem:[#allocation5 + $0x198] sm:$0xf]
    %v192 = vld [vmem:[#allocation5 + $0x19c] sm:$0xf]
    %v193 = vld [vmem:[#allocation5 + $0x1a0] sm:$0xf]
    %v194 = vld [vmem:[#allocation5 + $0x1a4] sm:$0xf]
    %v195 = vld [vmem:[#allocation5 + $0x1a8] sm:$0xf]
    %v196 = vld [vmem:[#allocation5 + $0x1ac] sm:$0xf]
    %v197 = vld [vmem:[#allocation5 + $0x1b0] sm:$0xf]
    %v198 = vld [vmem:[#allocation5 + $0x1b4] sm:$0xf]
    %v199 = vld [vmem:[#allocation5 + $0x1b8] sm:$0xf]
    %v200 = vld [vmem:[#allocation5 + $0x1bc] sm:$0xf]
    %v201 = vld [vmem:[#allocation5 + $0x1c0] sm:$0xf]
    %v202 = vld [vmem:[#allocation5 + $0x1c4] sm:$0xf]
    %v203 = vld [vmem:[#allocation5 + $0x1c8] sm:$0xf]
    %v204 = vld [vmem:[#allocation5 + $0x1cc] sm:$0xf]
    %v205 = vld [vmem:[#allocation5 + $0x1d0] sm:$0xf]
    %v206 = vld [vmem:[#allocation5 + $0x1d4] sm:$0xf]
    %v207 = vld [vmem:[#allocation5 + $0x1d8] sm:$0xf]
    %v208 = vld [vmem:[#allocation5 + $0x1dc] sm:$0xf]
    %v209 = vld [vmem:[#allocation5 + $0x1e0] sm:$0xf]
    %v210 = vld [vmem:[#allocation5 + $0x1e4] sm:$0xf]
    %v211 = vld [vmem:[#allocation5 + $0x1e8] sm:$0xf]
    %v212 = vld [vmem:[#allocation5 + $0x1ec] sm:$0xf]
    %v213 = vld [vmem:[#allocation5 + $0x1f0] sm:$0xf]
    %v214 = vld [vmem:[#allocation5 + $0x1f4] sm:$0xf]
    %v215 = vld [vmem:[#allocation5 + $0x1f8] sm:$0xf]
    %v216 = vld [vmem:[#allocation5 + $0x1fc] sm:$0xf]
    %v217 = vld [vmem:[#allocation8] sm:$0xf]
    %v218 = vld [vmem:[#allocation8 + $0x4] sm:$0xf]
    %v219 = vld [vmem:[#allocation8 + $0x8] sm:$0xf]
    %v220 = vld [vmem:[#allocation8 + $0xc] sm:$0xf]
    %v221 = vld [vmem:[#allocation8 + $0x10] sm:$0xf]
    %v222 = vld [vmem:[#allocation8 + $0x14] sm:$0xf]
    %v223 = vld [vmem:[#allocation8 + $0x18] sm:$0xf]
    %v224 = vld [vmem:[#allocation8 + $0x1c] sm:$0xf]
    %v225 = vld [vmem:[#allocation8 + $0x20] sm:$0xf]
    %v226 = vld [vmem:[#allocation8 + $0x24] sm:$0xf]
    %v227 = vld [vmem:[#allocation8 + $0x28] sm:$0xf]
    %v228 = vld [vmem:[#allocation8 + $0x2c] sm:$0xf]
    %v229 = vld [vmem:[#allocation8 + $0x30] sm:$0xf]
    %v230 = vld [vmem:[#allocation8 + $0x34] sm:$0xf]
    %v231 = vld [vmem:[#allocation8 + $0x38] sm:$0xf]
    %v232 = vld [vmem:[#allocation8 + $0x3c] sm:$0xf]
    %v361 = vunpack.c.l.b16 %v89
    %v362 = vunpack.c.l.b16 %v90
    %v363 = vunpack.c.l.b16 %v91
    %v364 = vunpack.c.l.b16 %v92
    %v365 = vunpack.c.l.b16 %v93
    %v366 = vunpack.c.l.b16 %v94
    %v367 = vunpack.c.l.b16 %v95
    %v368 = vunpack.c.l.b16 %v96
    %v369 = vunpack.c.l.b16 %v97
    %v370 = vunpack.c.l.b16 %v98
    %v371 = vunpack.c.l.b16 %v99
    %v372 = vunpack.c.l.b16 %v100
    %v373 = vunpack.c.l.b16 %v101
    %v374 = vunpack.c.l.b16 %v102
    %v375 = vunpack.c.l.b16 %v103
    %v376 = vunpack.c.l.b16 %v104
    %v377 = vunpack.c.l.b16 %v105
    %v378 = vunpack.c.l.b16 %v106
    %v379 = vunpack.c.l.b16 %v107
    %v380 = vunpack.c.l.b16 %v108
    %v381 = vunpack.c.l.b16 %v109
    %v382 = vunpack.c.l.b16 %v110
    %v383 = vunpack.c.l.b16 %v111
    %v384 = vunpack.c.l.b16 %v112
    %v385 = vunpack.c.l.b16 %v113
    %v386 = vunpack.c.l.b16 %v114
    %v387 = vunpack.c.l.b16 %v115
    %v388 = vunpack.c.l.b16 %v116
    %v389 = vunpack.c.l.b16 %v117
    %v390 = vunpack.c.l.b16 %v118
    %v391 = vunpack.c.l.b16 %v119
    %v392 = vunpack.c.l.b16 %v120
    %v393 = vunpack.c.l.b16 %v121
    %v394 = vunpack.c.l.b16 %v122
    %v395 = vunpack.c.l.b16 %v123
    %v396 = vunpack.c.l.b16 %v124
    %v397 = vunpack.c.l.b16 %v125
    %v398 = vunpack.c.l.b16 %v126
    %v399 = vunpack.c.l.b16 %v127
    %v400 = vunpack.c.l.b16 %v128
    %v401 = vunpack.c.l.b16 %v129
    %v402 = vunpack.c.l.b16 %v130
    %v403 = vunpack.c.l.b16 %v131
    %v404 = vunpack.c.l.b16 %v132
    %v405 = vunpack.c.l.b16 %v133
    %v406 = vunpack.c.l.b16 %v134
    %v407 = vunpack.c.l.b16 %v135
    %v408 = vunpack.c.l.b16 %v136
    %v409 = vunpack.c.l.b16 %v137
    %v410 = vunpack.c.l.b16 %v138
    %v411 = vunpack.c.l.b16 %v139
    %v412 = vunpack.c.l.b16 %v140
    %v413 = vunpack.c.l.b16 %v141
    %v414 = vunpack.c.l.b16 %v142
    %v415 = vunpack.c.l.b16 %v143
    %v416 = vunpack.c.l.b16 %v144
    %v417 = vunpack.c.l.b16 %v145
    %v418 = vunpack.c.l.b16 %v146
    %v419 = vunpack.c.l.b16 %v147
    %v420 = vunpack.c.l.b16 %v148
    %v421 = vunpack.c.l.b16 %v149
    %v422 = vunpack.c.l.b16 %v150
    %v423 = vunpack.c.l.b16 %v151
    %v424 = vunpack.c.l.b16 %v152
    %v425 = vunpack.c.l.b16 %v153
    %v426 = vunpack.c.l.b16 %v154
    %v427 = vunpack.c.l.b16 %v155
    %v428 = vunpack.c.l.b16 %v156
    %v429 = vunpack.c.l.b16 %v157
    %v430 = vunpack.c.l.b16 %v158
    %v431 = vunpack.c.l.b16 %v159
    %v432 = vunpack.c.l.b16 %v160
    %v433 = vunpack.c.l.b16 %v161
    %v434 = vunpack.c.l.b16 %v162
    %v435 = vunpack.c.l.b16 %v163
    %v436 = vunpack.c.l.b16 %v164
    %v437 = vunpack.c.l.b16 %v165
    %v438 = vunpack.c.l.b16 %v166
    %v439 = vunpack.c.l.b16 %v167
    %v440 = vunpack.c.l.b16 %v168
    %v441 = vunpack.c.l.b16 %v169
    %v442 = vunpack.c.l.b16 %v170
    %v443 = vunpack.c.l.b16 %v171
    %v444 = vunpack.c.l.b16 %v172
    %v445 = vunpack.c.l.b16 %v173
    %v446 = vunpack.c.l.b16 %v174
    %v447 = vunpack.c.l.b16 %v175
    %v448 = vunpack.c.l.b16 %v176
    %v449 = vunpack.c.l.b16 %v177
    %v450 = vunpack.c.l.b16 %v178
    %v451 = vunpack.c.l.b16 %v179
    %v452 = vunpack.c.l.b16 %v180
    %v453 = vunpack.c.l.b16 %v181
    %v454 = vunpack.c.l.b16 %v182
    %v455 = vunpack.c.l.b16 %v183
    %v456 = vunpack.c.l.b16 %v184
    %v457 = vunpack.c.l.b16 %v185
    %v458 = vunpack.c.l.b16 %v186
    %v459 = vunpack.c.l.b16 %v187
    %v460 = vunpack.c.l.b16 %v188
    %v461 = vunpack.c.l.b16 %v189
    %v462 = vunpack.c.l.b16 %v190
    %v463 = vunpack.c.l.b16 %v191
    %v464 = vunpack.c.l.b16 %v192
    %v465 = vunpack.c.l.b16 %v193
    %v466 = vunpack.c.l.b16 %v194
    %v467 = vunpack.c.l.b16 %v195
    %v468 = vunpack.c.l.b16 %v196
    %v469 = vunpack.c.l.b16 %v197
    %v470 = vunpack.c.l.b16 %v198
    %v471 = vunpack.c.l.b16 %v199
    %v472 = vunpack.c.l.b16 %v200
    %v473 = vunpack.c.l.b16 %v201
    %v474 = vunpack.c.l.b16 %v202
    %v475 = vunpack.c.l.b16 %v203
    %v476 = vunpack.c.l.b16 %v204
    %v477 = vunpack.c.l.b16 %v205
    %v478 = vunpack.c.l.b16 %v206
    %v479 = vunpack.c.l.b16 %v207
    %v480 = vunpack.c.l.b16 %v208
    %v481 = vunpack.c.l.b16 %v209
    %v482 = vunpack.c.l.b16 %v210
    %v483 = vunpack.c.l.b16 %v211
    %v484 = vunpack.c.l.b16 %v212
    %v485 = vunpack.c.l.b16 %v213
    %v486 = vunpack.c.l.b16 %v214
    %v487 = vunpack.c.l.b16 %v215
    %v488 = vunpack.c.l.b16 %v216
    %v489 = vpack.c.b16 %v362, %v361
    %v490 = vpack.c.b16 %v364, %v363
    %v491 = vpack.c.b16 %v366, %v365
    %v492 = vpack.c.b16 %v368, %v367
    %v493 = vpack.c.b16 %v370, %v369
    %v494 = vpack.c.b16 %v372, %v371
    %v495 = vpack.c.b16 %v374, %v373
    %v496 = vpack.c.b16 %v376, %v375
    %v497 = vpack.c.b16 %v378, %v377
    %v498 = vpack.c.b16 %v380, %v379
    %v499 = vpack.c.b16 %v382, %v381
    %v500 = vpack.c.b16 %v384, %v383
    %v501 = vpack.c.b16 %v386, %v385
    %v502 = vpack.c.b16 %v388, %v387
    %v503 = vpack.c.b16 %v390, %v389
    %v504 = vpack.c.b16 %v392, %v391
    %v505 = vpack.c.b16 %v394, %v393
    %v506 = vpack.c.b16 %v396, %v395
    %v507 = vpack.c.b16 %v398, %v397
    %v508 = vpack.c.b16 %v400, %v399
    %v509 = vpack.c.b16 %v402, %v401
    %v510 = vpack.c.b16 %v404, %v403
    %v511 = vpack.c.b16 %v406, %v405
    %v512 = vpack.c.b16 %v408, %v407
    %v513 = vpack.c.b16 %v410, %v409
    %v514 = vpack.c.b16 %v412, %v411
    %v515 = vpack.c.b16 %v414, %v413
    %v516 = vpack.c.b16 %v416, %v415
    %v517 = vpack.c.b16 %v418, %v417
    %v518 = vpack.c.b16 %v420, %v419
    %v519 = vpack.c.b16 %v422, %v421
    %v520 = vpack.c.b16 %v424, %v423
    %v521 = vpack.c.b16 %v426, %v425
    %v522 = vpack.c.b16 %v428, %v427
    %v523 = vpack.c.b16 %v430, %v429
    %v524 = vpack.c.b16 %v432, %v431
    %v525 = vpack.c.b16 %v434, %v433
    %v526 = vpack.c.b16 %v436, %v435
    %v527 = vpack.c.b16 %v438, %v437
    %v528 = vpack.c.b16 %v440, %v439
    %v529 = vpack.c.b16 %v442, %v441
    %v530 = vpack.c.b16 %v444, %v443
    %v531 = vpack.c.b16 %v446, %v445
    %v532 = vpack.c.b16 %v448, %v447
    %v533 = vpack.c.b16 %v450, %v449
    %v534 = vpack.c.b16 %v452, %v451
    %v535 = vpack.c.b16 %v454, %v453
    %v536 = vpack.c.b16 %v456, %v455
    %v537 = vpack.c.b16 %v458, %v457
    %v538 = vpack.c.b16 %v460, %v459
    %v539 = vpack.c.b16 %v462, %v461
    %v540 = vpack.c.b16 %v464, %v463
    %v541 = vpack.c.b16 %v466, %v465
    %v542 = vpack.c.b16 %v468, %v467
    %v543 = vpack.c.b16 %v470, %v469
    %v544 = vpack.c.b16 %v472, %v471
    %v545 = vpack.c.b16 %v474, %v473
    %v546 = vpack.c.b16 %v476, %v475
    %v547 = vpack.c.b16 %v478, %v477
    %v548 = vpack.c.b16 %v480, %v479
    %v549 = vpack.c.b16 %v482, %v481
    %v550 = vpack.c.b16 %v484, %v483
    %v551 = vpack.c.b16 %v486, %v485
    %v552 = vpack.c.b16 %v488, %v487
    %v633 = vunpack.c.l.b16 %v217
    %v634 = vunpack.c.l.b16 %v218
    %v635 = vunpack.c.l.b16 %v219
    %v636 = vunpack.c.l.b16 %v220
    %v637 = vunpack.c.l.b16 %v221
    %v638 = vunpack.c.l.b16 %v222
    %v639 = vunpack.c.l.b16 %v223
    %v640 = vunpack.c.l.b16 %v224
    %v641 = vunpack.c.l.b16 %v225
    %v642 = vunpack.c.l.b16 %v226
    %v643 = vunpack.c.l.b16 %v227
    %v644 = vunpack.c.l.b16 %v228
    %v645 = vunpack.c.l.b16 %v229
    %v646 = vunpack.c.l.b16 %v230
    %v647 = vunpack.c.l.b16 %v231
    %v648 = vunpack.c.l.b16 %v232
    %v649 = vpack.c.b16 %v634, %v633
    %v650 = vpack.c.b16 %v636, %v635
    %v651 = vpack.c.b16 %v638, %v637
    %v652 = vpack.c.b16 %v640, %v639
    %v653 = vpack.c.b16 %v642, %v641
    %v654 = vpack.c.b16 %v644, %v643
    %v655 = vpack.c.b16 %v646, %v645
    %v656 = vpack.c.b16 %v648, %v647
    %665 = vmatprep.subr.bf16.mxu0 0
    %666 = vmatpush1.bf16.msra.mxu0 %v649
    %667 = vmatprep.subr.bf16.mxu0 0
    %668 = vmatpush1.bf16.msra.mxu0 %v650
    %669 = vmatprep.subr.bf16.mxu0 0
    %670 = vmatpush1.bf16.msra.mxu0 %v651
    %671 = vmatprep.subr.bf16.mxu0 0
    %672 = vmatpush1.bf16.msra.mxu0 %v652
    %673 = vmatprep.subr.bf16.mxu0 0
    %674 = vmatpush1.bf16.msra.mxu0 %v653
    %675 = vmatprep.subr.bf16.mxu0 0
    %676 = vmatpush1.bf16.msra.mxu0 %v654
    %677 = vmatprep.subr.bf16.mxu0 0
    %678 = vmatpush1.bf16.msra.mxu0 %v655
    %679 = vmatprep.subr.bf16.mxu0 0
    %680 = vmatpush1.bf16.msra.mxu0 %v656
    %681 = vmatprep.subr.bf16.mxu0 0
    %682 = vmatpush1.bf16.msra.mxu0 0
    %683 = vmatprep.subr.bf16.mxu0 0
    %684 = vmatpush1.bf16.msra.mxu0 0
    %685 = vmatprep.subr.bf16.mxu0 0
    %686 = vmatpush1.bf16.msra.mxu0 0
    %687 = vmatprep.subr.bf16.mxu0 0
    %688 = vmatpush1.bf16.msra.mxu0 0
    %689 = vmatprep.subr.bf16.mxu0 0
    %690 = vmatpush1.bf16.msra.mxu0 0
    %691 = vmatprep.subr.bf16.mxu0 0
    %692 = vmatpush1.bf16.msra.mxu0 0
    %693 = vmatprep.subr.bf16.mxu0 0
    %694 = vmatpush1.bf16.msra.mxu0 0
    %695 = vmatprep.subr.bf16.mxu0 0
    %696 = vmatpush1.bf16.msra.mxu0 0
    %697 = vmatprep.mubr.bf16.mxu0 0
    %698 = vmatmul.mubr.bf16.gmra.mrb[0].mxu0 %v489
    %v699 = vpop.f32.mrb[0].mxu0
    %v700 = vadd.f32 0.0, %v699
    %v701 = vpop.f32.mrb[0].mxu0
    %v702 = vpop.f32.mrb[0].mxu0
    %v703 = vadd.f32 0.0, %v702
    %v704 = vpop.f32.mrb[0].mxu0
    %705 = vmatprep.mubr.bf16.mxu0 0
    %706 = vmatmul.mubr.bf16.gmra.mrb[0].mxu0 %v490
    %v707 = vpop.f32.mrb[0].mxu0
    %v708 = vadd.f32 0.0, %v707
    %v709 = vpop.f32.mrb[0].mxu0
    %v710 = vpop.f32.mrb[0].mxu0
    %v711 = vadd.f32 0.0, %v710
    %v712 = vpop.f32.mrb[0].mxu0
    %713 = vmatprep.mubr.bf16.mxu0 0
    %714 = vmatmul.mubr.bf16.gmra.mrb[0].mxu0 %v491
    %v715 = vpop.f32.mrb[0].mxu0
    %v716 = vadd.f32 0.0, %v715
    %v717 = vpop.f32.mrb[0].mxu0
    %v718 = vpop.f32.mrb[0].mxu0
    %v719 = vadd.f32 0.0, %v718
    %v720 = vpop.f32.mrb[0].mxu0
    %721 = vmatprep.mubr.bf16.mxu0 0
    %722 = vmatmul.mubr.bf16.gmra.mrb[0].mxu0 %v492
    %v723 = vpop.f32.mrb[0].mxu0
    %v724 = vadd.f32 0.0, %v723
    %v725 = vpop.f32.mrb[0].mxu0
    %v726 = vpop.f32.mrb[0].mxu0
    %v727 = vadd.f32 0.0, %v726
    %v728 = vpop.f32.mrb[0].mxu0
    %729 = vmatprep.mubr.bf16.mxu0 0
    %730 = vmatmul.mubr.bf16.gmra.mrb[0].mxu0 %v493
    %v731 = vpop.f32.mrb[0].mxu0
    %v732 = vadd.f32 0.0, %v731
    %v733 = vpop.f32.mrb[0].mxu0
    %v734 = vpop.f32.mrb[0].mxu0
    %v735 = vadd.f32 0.0, %v734
    %v736 = vpop.f32.mrb[0].mxu0
    %737 = vmatprep.mubr.bf16.mxu0 0
    %738 = vmatmul.mubr.bf16.gmra.mrb[0].mxu0 %v494
    %v739 = vpop.f32.mrb[0].mxu0
    %v740 = vadd.f32 0.0, %v739
    %v741 = vpop.f32.mrb[0].mxu0
    %v742 = vpop.f32.mrb[0].mxu0
    %v743 = vadd.f32 0.0, %v742
    %v744 = vpop.f32.mrb[0].mxu0
    %745 = vmatprep.mubr.bf16.mxu0 0
    %746 = vmatmul.mubr.bf16.gmra.mrb[0].mxu0 %v495
    %v747 = vpop.f32.mrb[0].mxu0
    %v748 = vadd.f32 0.0, %v747
    %v749 = vpop.f32.mrb[0].mxu0
    %v750 = vpop.f32.mrb[0].mxu0
    %v751 = vadd.f32 0.0, %v750
    %v752 = vpop.f32.mrb[0].mxu0
    %753 = vmatprep.mubr.bf16.mxu0 0
    %754 = vmatmul.mubr.bf16.gmra.mrb[0].mxu0 %v496
    %v755 = vpop.f32.mrb[0].mxu0
    %v756 = vadd.f32 0.0, %v755
    %v757 = vpop.f32.mrb[0].mxu0
    %v758 = vpop.f32.mrb[0].mxu0
    %v759 = vadd.f32 0.0, %v758
    %v760 = vpop.f32.mrb[0].mxu0
    %761 = vmatprep.mubr.bf16.mxu0 0
    %762 = vmatmul.mubr.bf16.gmra.mrb[0].mxu0 %v497
    %v763 = vpop.f32.mrb[0].mxu0
    %v764 = vadd.f32 0.0, %v763
    %v765 = vpop.f32.mrb[0].mxu0
    %v766 = vpop.f32.mrb[0].mxu0
    %v767 = vadd.f32 0.0, %v766
    %v768 = vpop.f32.mrb[0].mxu0
    %769 = vmatprep.mubr.bf16.mxu0 0
    %770 = vmatmul.mubr.bf16.gmra.mrb[0].mxu0 %v498
    %v771 = vpop.f32.mrb[0].mxu0
    %v772 = vadd.f32 0.0, %v771
    %v773 = vpop.f32.mrb[0].mxu0
    %v774 = vpop.f32.mrb[0].mxu0
    %v775 = vadd.f32 0.0, %v774
    %v776 = vpop.f32.mrb[0].mxu0
    %777 = vmatprep.mubr.bf16.mxu0 0
    %778 = vmatmul.mubr.bf16.gmra.mrb[0].mxu0 %v499
    %v779 = vpop.f32.mrb[0].mxu0
    %v780 = vadd.f32 0.0, %v779
    %v781 = vpop.f32.mrb[0].mxu0
    %v782 = vpop.f32.mrb[0].mxu0
    %v783 = vadd.f32 0.0, %v782
    %v784 = vpop.f32.mrb[0].mxu0
    %785 = vmatprep.mubr.bf16.mxu0 0
    %786 = vmatmul.mubr.bf16.gmra.mrb[0].mxu0 %v500
    %v787 = vpop.f32.mrb[0].mxu0
    %v788 = vadd.f32 0.0, %v787
    %v789 = vpop.f32.mrb[0].mxu0
    %v790 = vpop.f32.mrb[0].mxu0
    %v791 = vadd.f32 0.0, %v790
    %v792 = vpop.f32.mrb[0].mxu0
    %793 = vmatprep.mubr.bf16.mxu0 0
    %794 = vmatmul.mubr.bf16.gmra.mrb[0].mxu0 %v501
    %v795 = vpop.f32.mrb[0].mxu0
    %v796 = vadd.f32 0.0, %v795
    %v797 = vpop.f32.mrb[0].mxu0
    %v798 = vpop.f32.mrb[0].mxu0
    %v799 = vadd.f32 0.0, %v798
    %v800 = vpop.f32.mrb[0].mxu0
    %801 = vmatprep.mubr.bf16.mxu0 0
    %802 = vmatmul.mubr.bf16.gmra.mrb[0].mxu0 %v502
    %v803 = vpop.f32.mrb[0].mxu0
    %v804 = vadd.f32 0.0, %v803
    %v805 = vpop.f32.mrb[0].mxu0
    %v806 = vpop.f32.mrb[0].mxu0
    %v807 = vadd.f32 0.0, %v806
    %v808 = vpop.f32.mrb[0].mxu0
    %809 = vmatprep.mubr.bf16.mxu0 0
    %810 = vmatmul.mubr.bf16.gmra.mrb[0].mxu0 %v503
    %v811 = vpop.f32.mrb[0].mxu0
    %v812 = vadd.f32 0.0, %v811
    %v813 = vpop.f32.mrb[0].mxu0
    %v814 = vpop.f32.mrb[0].mxu0
    %v815 = vadd.f32 0.0, %v814
    %v816 = vpop.f32.mrb[0].mxu0
    %817 = vmatprep.mubr.bf16.mxu0 0
    %818 = vmatmul.mubr.bf16.gmra.mrb[0].mxu0 %v504
    %v819 = vpop.f32.mrb[0].mxu0
    %v820 = vadd.f32 0.0, %v819
    %v821 = vpop.f32.mrb[0].mxu0
    %v822 = vpop.f32.mrb[0].mxu0
    %v823 = vadd.f32 0.0, %v822
    %v824 = vpop.f32.mrb[0].mxu0
    %825 = vmatprep.mubr.bf16.mxu0 0
    %826 = vmatmul.mubr.bf16.gmra.mrb[0].mxu0 %v505
    %v827 = vpop.f32.mrb[0].mxu0
    %v828 = vadd.f32 0.0, %v827
    %v829 = vpop.f32.mrb[0].mxu0
    %v830 = vpop.f32.mrb[0].mxu0
    %v831 = vadd.f32 0.0, %v830
    %v832 = vpop.f32.mrb[0].mxu0
    %833 = vmatprep.mubr.bf16.mxu0 0
    %834 = vmatmul.mubr.bf16.gmra.mrb[0].mxu0 %v506
    %v835 = vpop.f32.mrb[0].mxu0
    %v836 = vadd.f32 0.0, %v835
    %v837 = vpop.f32.mrb[0].mxu0
    %v838 = vpop.f32.mrb[0].mxu0
    %v839 = vadd.f32 0.0, %v838
    %v840 = vpop.f32.mrb[0].mxu0
    %841 = vmatprep.mubr.bf16.mxu0 0
    %842 = vmatmul.mubr.bf16.gmra.mrb[0].mxu0 %v507
    %v843 = vpop.f32.mrb[0].mxu0
    %v844 = vadd.f32 0.0, %v843
    %v845 = vpop.f32.mrb[0].mxu0
    %v846 = vpop.f32.mrb[0].mxu0
    %v847 = vadd.f32 0.0, %v846
    %v848 = vpop.f32.mrb[0].mxu0
    %849 = vmatprep.mubr.bf16.mxu0 0
    %850 = vmatmul.mubr.bf16.gmra.mrb[0].mxu0 %v508
    %v851 = vpop.f32.mrb[0].mxu0
    %v852 = vadd.f32 0.0, %v851
    %v853 = vpop.f32.mrb[0].mxu0
    %v854 = vpop.f32.mrb[0].mxu0
    %v855 = vadd.f32 0.0, %v854
    %v856 = vpop.f32.mrb[0].mxu0
    %857 = vmatprep.mubr.bf16.mxu0 0
    %858 = vmatmul.mubr.bf16.gmra.mrb[0].mxu0 %v509
    %v859 = vpop.f32.mrb[0].mxu0
    %v860 = vadd.f32 0.0, %v859
    %v861 = vpop.f32.mrb[0].mxu0
    %v862 = vpop.f32.mrb[0].mxu0
    %v863 = vadd.f32 0.0, %v862
    %v864 = vpop.f32.mrb[0].mxu0
    %865 = vmatprep.mubr.bf16.mxu0 0
    %866 = vmatmul.mubr.bf16.gmra.mrb[0].mxu0 %v510
    %v867 = vpop.f32.mrb[0].mxu0
    %v868 = vadd.f32 0.0, %v867
    %v869 = vpop.f32.mrb[0].mxu0
    %v870 = vpop.f32.mrb[0].mxu0
    %v871 = vadd.f32 0.0, %v870
    %v872 = vpop.f32.mrb[0].mxu0
    %873 = vmatprep.mubr.bf16.mxu0 0
    %874 = vmatmul.mubr.bf16.gmra.mrb[0].mxu0 %v511
    %v875 = vpop.f32.mrb[0].mxu0
    %v876 = vadd.f32 0.0, %v875
    %v877 = vpop.f32.mrb[0].mxu0
    %v878 = vpop.f32.mrb[0].mxu0
    %v879 = vadd.f32 0.0, %v878
    %v880 = vpop.f32.mrb[0].mxu0
    %881 = vmatprep.mubr.bf16.mxu0 0
    %882 = vmatmul.mubr.bf16.gmra.mrb[0].mxu0 %v512
    %v883 = vpop.f32.mrb[0].mxu0
    %v884 = vadd.f32 0.0, %v883
    %v885 = vpop.f32.mrb[0].mxu0
    %v886 = vpop.f32.mrb[0].mxu0
    %v887 = vadd.f32 0.0, %v886
    %v888 = vpop.f32.mrb[0].mxu0
    %889 = vmatprep.mubr.bf16.mxu0 0
    %890 = vmatmul.mubr.bf16.gmra.mrb[0].mxu0 %v513
    %v891 = vpop.f32.mrb[0].mxu0
    %v892 = vadd.f32 0.0, %v891
    %v893 = vpop.f32.mrb[0].mxu0
    %v894 = vpop.f32.mrb[0].mxu0
    %v895 = vadd.f32 0.0, %v894
    %v896 = vpop.f32.mrb[0].mxu0
    %897 = vmatprep.mubr.bf16.mxu0 0
    %898 = vmatmul.mubr.bf16.gmra.mrb[0].mxu0 %v514
    %v899 = vpop.f32.mrb[0].mxu0
    %v900 = vadd.f32 0.0, %v899
    %v901 = vpop.f32.mrb[0].mxu0
    %v902 = vpop.f32.mrb[0].mxu0
    %v903 = vadd.f32 0.0, %v902
    %v904 = vpop.f32.mrb[0].mxu0
    %905 = vmatprep.mubr.bf16.mxu0 0
    %906 = vmatmul.mubr.bf16.gmra.mrb[0].mxu0 %v515
    %v907 = vpop.f32.mrb[0].mxu0
    %v908 = vadd.f32 0.0, %v907
    %v909 = vpop.f32.mrb[0].mxu0
    %v910 = vpop.f32.mrb[0].mxu0
    %v911 = vadd.f32 0.0, %v910
    %v912 = vpop.f32.mrb[0].mxu0
    %913 = vmatprep.mubr.bf16.mxu0 0
    %914 = vmatmul.mubr.bf16.gmra.mrb[0].mxu0 %v516
    %v915 = vpop.f32.mrb[0].mxu0
    %v916 = vadd.f32 0.0, %v915
    %v917 = vpop.f32.mrb[0].mxu0
    %v918 = vpop.f32.mrb[0].mxu0
    %v919 = vadd.f32 0.0, %v918
    %v920 = vpop.f32.mrb[0].mxu0
    %921 = vmatprep.mubr.bf16.mxu0 0
    %922 = vmatmul.mubr.bf16.gmra.mrb[0].mxu0 %v517
    %v923 = vpop.f32.mrb[0].mxu0
    %v924 = vadd.f32 0.0, %v923
    %v925 = vpop.f32.mrb[0].mxu0
    %v926 = vpop.f32.mrb[0].mxu0
    %v927 = vadd.f32 0.0, %v926
    %v928 = vpop.f32.mrb[0].mxu0
    %929 = vmatprep.mubr.bf16.mxu0 0
    %930 = vmatmul.mubr.bf16.gmra.mrb[0].mxu0 %v518
    %v931 = vpop.f32.mrb[0].mxu0
    %v932 = vadd.f32 0.0, %v931
    %v933 = vpop.f32.mrb[0].mxu0
    %v934 = vpop.f32.mrb[0].mxu0
    %v935 = vadd.f32 0.0, %v934
    %v936 = vpop.f32.mrb[0].mxu0
    %937 = vmatprep.mubr.bf16.mxu0 0
    %938 = vmatmul.mubr.bf16.gmra.mrb[0].mxu0 %v519
    %v939 = vpop.f32.mrb[0].mxu0
    %v940 = vadd.f32 0.0, %v939
    %v941 = vpop.f32.mrb[0].mxu0
    %v942 = vpop.f32.mrb[0].mxu0
    %v943 = vadd.f32 0.0, %v942
    %v944 = vpop.f32.mrb[0].mxu0
    %945 = vmatprep.mubr.bf16.mxu0 0
    %946 = vmatmul.mubr.bf16.gmra.mrb[0].mxu0 %v520
    %v947 = vpop.f32.mrb[0].mxu0
    %v948 = vadd.f32 0.0, %v947
    %v949 = vpop.f32.mrb[0].mxu0
    %v950 = vpop.f32.mrb[0].mxu0
    %v951 = vadd.f32 0.0, %v950
    %v952 = vpop.f32.mrb[0].mxu0
    %953 = vmatprep.mubr.bf16.mxu0 0
    %954 = vmatmul.mubr.bf16.gmra.mrb[0].mxu0 %v521
    %v955 = vpop.f32.mrb[0].mxu0
    %v956 = vadd.f32 0.0, %v955
    %v957 = vpop.f32.mrb[0].mxu0
    %v958 = vpop.f32.mrb[0].mxu0
    %v959 = vadd.f32 0.0, %v958
    %v960 = vpop.f32.mrb[0].mxu0
    %961 = vmatprep.mubr.bf16.mxu0 0
    %962 = vmatmul.mubr.bf16.gmra.mrb[0].mxu0 %v522
    %v963 = vpop.f32.mrb[0].mxu0
    %v964 = vadd.f32 0.0, %v963
    %v965 = vpop.f32.mrb[0].mxu0
    %v966 = vpop.f32.mrb[0].mxu0
    %v967 = vadd.f32 0.0, %v966
    %v968 = vpop.f32.mrb[0].mxu0
    %969 = vmatprep.mubr.bf16.mxu0 0
    %970 = vmatmul.mubr.bf16.gmra.mrb[0].mxu0 %v523
    %v971 = vpop.f32.mrb[0].mxu0
    %v972 = vadd.f32 0.0, %v971
    %v973 = vpop.f32.mrb[0].mxu0
    %v974 = vpop.f32.mrb[0].mxu0
    %v975 = vadd.f32 0.0, %v974
    %v976 = vpop.f32.mrb[0].mxu0
    %977 = vmatprep.mubr.bf16.mxu0 0
    %978 = vmatmul.mubr.bf16.gmra.mrb[0].mxu0 %v524
    %v979 = vpop.f32.mrb[0].mxu0
    %v980 = vadd.f32 0.0, %v979
    %v981 = vpop.f32.mrb[0].mxu0
    %v982 = vpop.f32.mrb[0].mxu0
    %v983 = vadd.f32 0.0, %v982
    %v984 = vpop.f32.mrb[0].mxu0
    %985 = vmatprep.mubr.bf16.mxu0 0
    %986 = vmatmul.mubr.bf16.gmra.mrb[0].mxu0 %v525
    %v987 = vpop.f32.mrb[0].mxu0
    %v988 = vadd.f32 0.0, %v987
    %v989 = vpop.f32.mrb[0].mxu0
    %v990 = vpop.f32.mrb[0].mxu0
    %v991 = vadd.f32 0.0, %v990
    %v992 = vpop.f32.mrb[0].mxu0
    %993 = vmatprep.mubr.bf16.mxu0 0
    %994 = vmatmul.mubr.bf16.gmra.mrb[0].mxu0 %v526
    %v995 = vpop.f32.mrb[0].mxu0
    %v996 = vadd.f32 0.0, %v995
    %v997 = vpop.f32.mrb[0].mxu0
    %v998 = vpop.f32.mrb[0].mxu0
    %v999 = vadd.f32 0.0, %v998
    %v1000 = vpop.f32.mrb[0].mxu0
    %1001 = vmatprep.mubr.bf16.mxu0 0
    %1002 = vmatmul.mubr.bf16.gmra.mrb[0].mxu0 %v527
    %v1003 = vpop.f32.mrb[0].mxu0
    %v1004 = vadd.f32 0.0, %v1003
    %v1005 = vpop.f32.mrb[0].mxu0
    %v1006 = vpop.f32.mrb[0].mxu0
    %v1007 = vadd.f32 0.0, %v1006
    %v1008 = vpop.f32.mrb[0].mxu0
    %1009 = vmatprep.mubr.bf16.mxu0 0
    %1010 = vmatmul.mubr.bf16.gmra.mrb[0].mxu0 %v528
    %v1011 = vpop.f32.mrb[0].mxu0
    %v1012 = vadd.f32 0.0, %v1011
    %v1013 = vpop.f32.mrb[0].mxu0
    %v1014 = vpop.f32.mrb[0].mxu0
    %v1015 = vadd.f32 0.0, %v1014
    %v1016 = vpop.f32.mrb[0].mxu0
    %1017 = vmatprep.mubr.bf16.mxu0 0
    %1018 = vmatmul.mubr.bf16.gmra.mrb[0].mxu0 %v529
    %v1019 = vpop.f32.mrb[0].mxu0
    %v1020 = vadd.f32 0.0, %v1019
    %v1021 = vpop.f32.mrb[0].mxu0
    %v1022 = vpop.f32.mrb[0].mxu0
    %v1023 = vadd.f32 0.0, %v1022
    %v1024 = vpop.f32.mrb[0].mxu0
    %1025 = vmatprep.mubr.bf16.mxu0 0
    %1026 = vmatmul.mubr.bf16.gmra.mrb[0].mxu0 %v530
    %v1027 = vpop.f32.mrb[0].mxu0
    %v1028 = vadd.f32 0.0, %v1027
    %v1029 = vpop.f32.mrb[0].mxu0
    %v1030 = vpop.f32.mrb[0].mxu0
    %v1031 = vadd.f32 0.0, %v1030
    %v1032 = vpop.f32.mrb[0].mxu0
    %1033 = vmatprep.mubr.bf16.mxu0 0
    %1034 = vmatmul.mubr.bf16.gmra.mrb[0].mxu0 %v531
    %v1035 = vpop.f32.mrb[0].mxu0
    %v1036 = vadd.f32 0.0, %v1035
    %v1037 = vpop.f32.mrb[0].mxu0
    %v1038 = vpop.f32.mrb[0].mxu0
    %v1039 = vadd.f32 0.0, %v1038
    %v1040 = vpop.f32.mrb[0].mxu0
    %1041 = vmatprep.mubr.bf16.mxu0 0
    %1042 = vmatmul.mubr.bf16.gmra.mrb[0].mxu0 %v532
    %v1043 = vpop.f32.mrb[0].mxu0
    %v1044 = vadd.f32 0.0, %v1043
    %v1045 = vpop.f32.mrb[0].mxu0
    %v1046 = vpop.f32.mrb[0].mxu0
    %v1047 = vadd.f32 0.0, %v1046
    %v1048 = vpop.f32.mrb[0].mxu0
    %1049 = vmatprep.mubr.bf16.mxu0 0
    %1050 = vmatmul.mubr.bf16.gmra.mrb[0].mxu0 %v533
    %v1051 = vpop.f32.mrb[0].mxu0
    %v1052 = vadd.f32 0.0, %v1051
    %v1053 = vpop.f32.mrb[0].mxu0
    %v1054 = vpop.f32.mrb[0].mxu0
    %v1055 = vadd.f32 0.0, %v1054
    %v1056 = vpop.f32.mrb[0].mxu0
    %1057 = vmatprep.mubr.bf16.mxu0 0
    %1058 = vmatmul.mubr.bf16.gmra.mrb[0].mxu0 %v534
    %v1059 = vpop.f32.mrb[0].mxu0
    %v1060 = vadd.f32 0.0, %v1059
    %v1061 = vpop.f32.mrb[0].mxu0
    %v1062 = vpop.f32.mrb[0].mxu0
    %v1063 = vadd.f32 0.0, %v1062
    %v1064 = vpop.f32.mrb[0].mxu0
    %1065 = vmatprep.mubr.bf16.mxu0 0
    %1066 = vmatmul.mubr.bf16.gmra.mrb[0].mxu0 %v535
    %v1067 = vpop.f32.mrb[0].mxu0
    %v1068 = vadd.f32 0.0, %v1067
    %v1069 = vpop.f32.mrb[0].mxu0
    %v1070 = vpop.f32.mrb[0].mxu0
    %v1071 = vadd.f32 0.0, %v1070
    %v1072 = vpop.f32.mrb[0].mxu0
    %1073 = vmatprep.mubr.bf16.mxu0 0
    %1074 = vmatmul.mubr.bf16.gmra.mrb[0].mxu0 %v536
    %v1075 = vpop.f32.mrb[0].mxu0
    %v1076 = vadd.f32 0.0, %v1075
    %v1077 = vpop.f32.mrb[0].mxu0
    %v1078 = vpop.f32.mrb[0].mxu0
    %v1079 = vadd.f32 0.0, %v1078
    %v1080 = vpop.f32.mrb[0].mxu0
    %1081 = vmatprep.mubr.bf16.mxu0 0
    %1082 = vmatmul.mubr.bf16.gmra.mrb[0].mxu0 %v537
    %v1083 = vpop.f32.mrb[0].mxu0
    %v1084 = vadd.f32 0.0, %v1083
    %v1085 = vpop.f32.mrb[0].mxu0
    %v1086 = vpop.f32.mrb[0].mxu0
    %v1087 = vadd.f32 0.0, %v1086
    %v1088 = vpop.f32.mrb[0].mxu0
    %1089 = vmatprep.mubr.bf16.mxu0 0
    %1090 = vmatmul.mubr.bf16.gmra.mrb[0].mxu0 %v538
    %v1091 = vpop.f32.mrb[0].mxu0
    %v1092 = vadd.f32 0.0, %v1091
    %v1093 = vpop.f32.mrb[0].mxu0
    %v1094 = vpop.f32.mrb[0].mxu0
    %v1095 = vadd.f32 0.0, %v1094
    %v1096 = vpop.f32.mrb[0].mxu0
    %1097 = vmatprep.mubr.bf16.mxu0 0
    %1098 = vmatmul.mubr.bf16.gmra.mrb[0].mxu0 %v539
    %v1099 = vpop.f32.mrb[0].mxu0
    %v1100 = vadd.f32 0.0, %v1099
    %v1101 = vpop.f32.mrb[0].mxu0
    %v1102 = vpop.f32.mrb[0].mxu0
    %v1103 = vadd.f32 0.0, %v1102
    %v1104 = vpop.f32.mrb[0].mxu0
    %1105 = vmatprep.mubr.bf16.mxu0 0
    %1106 = vmatmul.mubr.bf16.gmra.mrb[0].mxu0 %v540
    %v1107 = vpop.f32.mrb[0].mxu0
    %v1108 = vadd.f32 0.0, %v1107
    %v1109 = vpop.f32.mrb[0].mxu0
    %v1110 = vpop.f32.mrb[0].mxu0
    %v1111 = vadd.f32 0.0, %v1110
    %v1112 = vpop.f32.mrb[0].mxu0
    %1113 = vmatprep.mubr.bf16.mxu0 0
    %1114 = vmatmul.mubr.bf16.gmra.mrb[0].mxu0 %v541
    %v1115 = vpop.f32.mrb[0].mxu0
    %v1116 = vadd.f32 0.0, %v1115
    %v1117 = vpop.f32.mrb[0].mxu0
    %v1118 = vpop.f32.mrb[0].mxu0
    %v1119 = vadd.f32 0.0, %v1118
    %v1120 = vpop.f32.mrb[0].mxu0
    %1121 = vmatprep.mubr.bf16.mxu0 0
    %1122 = vmatmul.mubr.bf16.gmra.mrb[0].mxu0 %v542
    %v1123 = vpop.f32.mrb[0].mxu0
    %v1124 = vadd.f32 0.0, %v1123
    %v1125 = vpop.f32.mrb[0].mxu0
    %v1126 = vpop.f32.mrb[0].mxu0
    %v1127 = vadd.f32 0.0, %v1126
    %v1128 = vpop.f32.mrb[0].mxu0
    %1129 = vmatprep.mubr.bf16.mxu0 0
    %1130 = vmatmul.mubr.bf16.gmra.mrb[0].mxu0 %v543
    %v1131 = vpop.f32.mrb[0].mxu0
    %v1132 = vadd.f32 0.0, %v1131
    %v1133 = vpop.f32.mrb[0].mxu0
    %v1134 = vpop.f32.mrb[0].mxu0
    %v1135 = vadd.f32 0.0, %v1134
    %v1136 = vpop.f32.mrb[0].mxu0
    %1137 = vmatprep.mubr.bf16.mxu0 0
    %1138 = vmatmul.mubr.bf16.gmra.mrb[0].mxu0 %v544
    %v1139 = vpop.f32.mrb[0].mxu0
    %v1140 = vadd.f32 0.0, %v1139
    %v1141 = vpop.f32.mrb[0].mxu0
    %v1142 = vpop.f32.mrb[0].mxu0
    %v1143 = vadd.f32 0.0, %v1142
    %v1144 = vpop.f32.mrb[0].mxu0
    %1145 = vmatprep.mubr.bf16.mxu0 0
    %1146 = vmatmul.mubr.bf16.gmra.mrb[0].mxu0 %v545
    %v1147 = vpop.f32.mrb[0].mxu0
    %v1148 = vadd.f32 0.0, %v1147
    %v1149 = vpop.f32.mrb[0].mxu0
    %v1150 = vpop.f32.mrb[0].mxu0
    %v1151 = vadd.f32 0.0, %v1150
    %v1152 = vpop.f32.mrb[0].mxu0
    %1153 = vmatprep.mubr.bf16.mxu0 0
    %1154 = vmatmul.mubr.bf16.gmra.mrb[0].mxu0 %v546
    %v1155 = vpop.f32.mrb[0].mxu0
    %v1156 = vadd.f32 0.0, %v1155
    %v1157 = vpop.f32.mrb[0].mxu0
    %v1158 = vpop.f32.mrb[0].mxu0
    %v1159 = vadd.f32 0.0, %v1158
    %v1160 = vpop.f32.mrb[0].mxu0
    %1161 = vmatprep.mubr.bf16.mxu0 0
    %1162 = vmatmul.mubr.bf16.gmra.mrb[0].mxu0 %v547
    %v1163 = vpop.f32.mrb[0].mxu0
    %v1164 = vadd.f32 0.0, %v1163
    %v1165 = vpop.f32.mrb[0].mxu0
    %v1166 = vpop.f32.mrb[0].mxu0
    %v1167 = vadd.f32 0.0, %v1166
    %v1168 = vpop.f32.mrb[0].mxu0
    %1169 = vmatprep.mubr.bf16.mxu0 0
    %1170 = vmatmul.mubr.bf16.gmra.mrb[0].mxu0 %v548
    %v1171 = vpop.f32.mrb[0].mxu0
    %v1172 = vadd.f32 0.0, %v1171
    %v1173 = vpop.f32.mrb[0].mxu0
    %v1174 = vpop.f32.mrb[0].mxu0
    %v1175 = vadd.f32 0.0, %v1174
    %v1176 = vpop.f32.mrb[0].mxu0
    %1177 = vmatprep.mubr.bf16.mxu0 0
    %1178 = vmatmul.mubr.bf16.gmra.mrb[0].mxu0 %v549
    %v1179 = vpop.f32.mrb[0].mxu0
    %v1180 = vadd.f32 0.0, %v1179
    %v1181 = vpop.f32.mrb[0].mxu0
    %v1182 = vpop.f32.mrb[0].mxu0
    %v1183 = vadd.f32 0.0, %v1182
    %v1184 = vpop.f32.mrb[0].mxu0
    %1185 = vmatprep.mubr.bf16.mxu0 0
    %1186 = vmatmul.mubr.bf16.gmra.mrb[0].mxu0 %v550
    %v1187 = vpop.f32.mrb[0].mxu0
    %v1188 = vadd.f32 0.0, %v1187
    %v1189 = vpop.f32.mrb[0].mxu0
    %v1190 = vpop.f32.mrb[0].mxu0
    %v1191 = vadd.f32 0.0, %v1190
    %v1192 = vpop.f32.mrb[0].mxu0
    %1193 = vmatprep.mubr.bf16.mxu0 0
    %1194 = vmatmul.mubr.bf16.gmra.mrb[0].mxu0 %v551
    %v1195 = vpop.f32.mrb[0].mxu0
    %v1196 = vadd.f32 0.0, %v1195
    %v1197 = vpop.f32.mrb[0].mxu0
    %v1198 = vpop.f32.mrb[0].mxu0
    %v1199 = vadd.f32 0.0, %v1198
    %v1200 = vpop.f32.mrb[0].mxu0
    %1201 = vmatprep.mubr.bf16.mxu0 0
    %1202 = vmatmul.mubr.bf16.gmra.mrb[0].mxu0 %v552
    %v1203 = vpop.f32.mrb[0].mxu0
    %v1204 = vadd.f32 0.0, %v1203
    %v1205 = vpop.f32.mrb[0].mxu0
    %v1206 = vpop.f32.mrb[0].mxu0
    %v1207 = vadd.f32 0.0, %v1206
    %v1208 = vpop.f32.mrb[0].mxu0
    %1209 = vdwg.mxu0
    %v1210 = vld [vmem:[#allocation2] sm:$0xff]
    %v1212 = vcombine.high %v1210, %v1210
    %v1214 = vunpack.c.l.s4 1966171168
    %v1215 = vunpack.c.0.s8 %v1214
    %v1216 = vlaneseq
    %v1217 = vshrl.u32 %v1216, 7
    %v1218 = vsub.s32 %v1215, %v1217
    %v1219 = vrot.slane %v1210, %v1218
    %v1221 = vunpack.c.l.s4 1966171168
    %v1222 = vunpack.c.0.s8 %v1221
    %v1223 = vlaneseq
    %v1224 = vshrl.u32 %v1223, 7
    %v1225 = vsub.s32 %v1222, %v1224
    %v1226 = vrot.slane %v1212, %v1225
    %v1227 = vcombine.high %v1219, %v1219
    %v1228 = vcombine.high %v1226, %v1226
    %v1230 = vunpack.c.l.s4 1966171168
    %v1231 = vunpack.c.0.s8 %v1230
    %v1232 = vlaneseq
    %v1233 = vshrl.u32 %v1232, 7
    %v1234 = vsub.s32 %v1231, %v1233
    %v1235 = vrot.slane %v1219, %v1234
    %v1237 = vunpack.c.l.s4 1966171168
    %v1238 = vunpack.c.0.s8 %v1237
    %v1239 = vlaneseq
    %v1240 = vshrl.u32 %v1239, 7
    %v1241 = vsub.s32 %v1238, %v1240
    %v1242 = vrot.slane %v1226, %v1241
    %v1244 = vunpack.c.l.s4 1966171168
    %v1245 = vunpack.c.0.s8 %v1244
    %v1246 = vlaneseq
    %v1247 = vshrl.u32 %v1246, 7
    %v1248 = vsub.s32 %v1245, %v1247
    %v1249 = vrot.slane %v1227, %v1248
    %v1251 = vunpack.c.l.s4 1966171168
    %v1252 = vunpack.c.0.s8 %v1251
    %v1253 = vlaneseq
    %v1254 = vshrl.u32 %v1253, 7
    %v1255 = vsub.s32 %v1252, %v1254
    %v1256 = vrot.slane %v1228, %v1255
    %v1257 = vcombine.high %v1235, %v1235
    %v1258 = vcombine.high %v1242, %v1242
    %v1259 = vcombine.high %v1249, %v1249
    %v1260 = vcombine.high %v1256, %v1256
    %v1261 = vlaneseq
    %v1262 = vshrl.u32 %v1261, 7
    %v1263 = vsub.s32 0, %v1262
    %v1264 = vrot.slane %v1235, %v1263
    %v1265 = vlaneseq
    %v1266 = vshrl.u32 %v1265, 7
    %v1267 = vsub.s32 0, %v1266
    %v1268 = vrot.slane %v1249, %v1267
    %v1269 = vlaneseq
    %v1270 = vshrl.u32 %v1269, 7
    %v1271 = vsub.s32 0, %v1270
    %v1272 = vrot.slane %v1257, %v1271
    %v1273 = vlaneseq
    %v1274 = vshrl.u32 %v1273, 7
    %v1275 = vsub.s32 0, %v1274
    %v1276 = vrot.slane %v1259, %v1275
    %v1277 = vlaneseq
    %v1278 = vshrl.u32 %v1277, 7
    %v1279 = vsub.s32 0, %v1278
    %v1280 = vrot.slane %v1242, %v1279
    %v1281 = vlaneseq
    %v1282 = vshrl.u32 %v1281, 7
    %v1283 = vsub.s32 0, %v1282
    %v1284 = vrot.slane %v1256, %v1283
    %v1285 = vlaneseq
    %v1286 = vshrl.u32 %v1285, 7
    %v1287 = vsub.s32 0, %v1286
    %v1288 = vrot.slane %v1258, %v1287
    %v1289 = vlaneseq
    %v1290 = vshrl.u32 %v1289, 7
    %v1291 = vsub.s32 0, %v1290
    %v1292 = vrot.slane %v1260, %v1291
    %v1301 = vadd.f32 %v700, %v1264
    %v1302 = vadd.f32 %v703, %v1264
    %v1303 = vadd.f32 %v708, %v1264
    %v1304 = vadd.f32 %v711, %v1264
    %v1305 = vadd.f32 %v716, %v1264
    %v1306 = vadd.f32 %v719, %v1264
    %v1307 = vadd.f32 %v724, %v1264
    %v1308 = vadd.f32 %v727, %v1264
    %v1309 = vadd.f32 %v732, %v1264
    %v1310 = vadd.f32 %v735, %v1264
    %v1311 = vadd.f32 %v740, %v1264
    %v1312 = vadd.f32 %v743, %v1264
    %v1313 = vadd.f32 %v748, %v1264
    %v1314 = vadd.f32 %v751, %v1264
    %v1315 = vadd.f32 %v756, %v1264
    %v1316 = vadd.f32 %v759, %v1264
    %v1317 = vadd.f32 %v764, %v1268
    %v1318 = vadd.f32 %v767, %v1268
    %v1319 = vadd.f32 %v772, %v1268
    %v1320 = vadd.f32 %v775, %v1268
    %v1321 = vadd.f32 %v780, %v1268
    %v1322 = vadd.f32 %v783, %v1268
    %v1323 = vadd.f32 %v788, %v1268
    %v1324 = vadd.f32 %v791, %v1268
    %v1325 = vadd.f32 %v796, %v1268
    %v1326 = vadd.f32 %v799, %v1268
    %v1327 = vadd.f32 %v804, %v1268
    %v1328 = vadd.f32 %v807, %v1268
    %v1329 = vadd.f32 %v812, %v1268
    %v1330 = vadd.f32 %v815, %v1268
    %v1331 = vadd.f32 %v820, %v1268
    %v1332 = vadd.f32 %v823, %v1268
    %v1333 = vadd.f32 %v828, %v1272
    %v1334 = vadd.f32 %v831, %v1272
    %v1335 = vadd.f32 %v836, %v1272
    %v1336 = vadd.f32 %v839, %v1272
    %v1337 = vadd.f32 %v844, %v1272
    %v1338 = vadd.f32 %v847, %v1272
    %v1339 = vadd.f32 %v852, %v1272
    %v1340 = vadd.f32 %v855, %v1272
    %v1341 = vadd.f32 %v860, %v1272
    %v1342 = vadd.f32 %v863, %v1272
    %v1343 = vadd.f32 %v868, %v1272
    %v1344 = vadd.f32 %v871, %v1272
    %v1345 = vadd.f32 %v876, %v1272
    %v1346 = vadd.f32 %v879, %v1272
    %v1347 = vadd.f32 %v884, %v1272
    %v1348 = vadd.f32 %v887, %v1272
    %v1349 = vadd.f32 %v892, %v1276
    %v1350 = vadd.f32 %v895, %v1276
    %v1351 = vadd.f32 %v900, %v1276
    %v1352 = vadd.f32 %v903, %v1276
    %v1353 = vadd.f32 %v908, %v1276
    %v1354 = vadd.f32 %v911, %v1276
    %v1355 = vadd.f32 %v916, %v1276
    %v1356 = vadd.f32 %v919, %v1276
    %v1357 = vadd.f32 %v924, %v1276
    %v1358 = vadd.f32 %v927, %v1276
    %v1359 = vadd.f32 %v932, %v1276
    %v1360 = vadd.f32 %v935, %v1276
    %v1361 = vadd.f32 %v940, %v1276
    %v1362 = vadd.f32 %v943, %v1276
    %v1363 = vadd.f32 %v948, %v1276
    %v1364 = vadd.f32 %v951, %v1276
    %v1365 = vadd.f32 %v956, %v1280
    %v1366 = vadd.f32 %v959, %v1280
    %v1367 = vadd.f32 %v964, %v1280
    %v1368 = vadd.f32 %v967, %v1280
    %v1369 = vadd.f32 %v972, %v1280
    %v1370 = vadd.f32 %v975, %v1280
    %v1371 = vadd.f32 %v980, %v1280
    %v1372 = vadd.f32 %v983, %v1280
    %v1373 = vadd.f32 %v988, %v1280
    %v1374 = vadd.f32 %v991, %v1280
    %v1375 = vadd.f32 %v996, %v1280
    %v1376 = vadd.f32 %v999, %v1280
    %v1377 = vadd.f32 %v1004, %v1280
    %v1378 = vadd.f32 %v1007, %v1280
    %v1379 = vadd.f32 %v1012, %v1280
    %v1380 = vadd.f32 %v1015, %v1280
    %v1381 = vadd.f32 %v1020, %v1284
    %v1382 = vadd.f32 %v1023, %v1284
    %v1383 = vadd.f32 %v1028, %v1284
    %v1384 = vadd.f32 %v1031, %v1284
    %v1385 = vadd.f32 %v1036, %v1284
    %v1386 = vadd.f32 %v1039, %v1284
    %v1387 = vadd.f32 %v1044, %v1284
    %v1388 = vadd.f32 %v1047, %v1284
    %v1389 = vadd.f32 %v1052, %v1284
    %v1390 = vadd.f32 %v1055, %v1284
    %v1391 = vadd.f32 %v1060, %v1284
    %v1392 = vadd.f32 %v1063, %v1284
    %v1393 = vadd.f32 %v1068, %v1284
    %v1394 = vadd.f32 %v1071, %v1284
    %v1395 = vadd.f32 %v1076, %v1284
    %v1396 = vadd.f32 %v1079, %v1284
    %v1397 = vadd.f32 %v1084, %v1288
    %v1398 = vadd.f32 %v1087, %v1288
    %v1399 = vadd.f32 %v1092, %v1288
    %v1400 = vadd.f32 %v1095, %v1288
    %v1401 = vadd.f32 %v1100, %v1288
    %v1402 = vadd.f32 %v1103, %v1288
    %v1403 = vadd.f32 %v1108, %v1288
    %v1404 = vadd.f32 %v1111, %v1288
    %v1405 = vadd.f32 %v1116, %v1288
    %v1406 = vadd.f32 %v1119, %v1288
    %v1407 = vadd.f32 %v1124, %v1288
    %v1408 = vadd.f32 %v1127, %v1288
    %v1409 = vadd.f32 %v1132, %v1288
    %v1410 = vadd.f32 %v1135, %v1288
    %v1411 = vadd.f32 %v1140, %v1288
    %v1412 = vadd.f32 %v1143, %v1288
    %v1413 = vadd.f32 %v1148, %v1292
    %v1414 = vadd.f32 %v1151, %v1292
    %v1415 = vadd.f32 %v1156, %v1292
    %v1416 = vadd.f32 %v1159, %v1292
    %v1417 = vadd.f32 %v1164, %v1292
    %v1418 = vadd.f32 %v1167, %v1292
    %v1419 = vadd.f32 %v1172, %v1292
    %v1420 = vadd.f32 %v1175, %v1292
    %v1421 = vadd.f32 %v1180, %v1292
    %v1422 = vadd.f32 %v1183, %v1292
    %v1423 = vadd.f32 %v1188, %v1292
    %v1424 = vadd.f32 %v1191, %v1292
    %v1425 = vadd.f32 %v1196, %v1292
    %v1426 = vadd.f32 %v1199, %v1292
    %v1427 = vadd.f32 %v1204, %v1292
    %v1428 = vadd.f32 %v1207, %v1292
    %v1429 = vtanh.pop %v1301
    %v1430 = vtanh.pop %v1302
    %v1431 = vtanh.pop %v1303
    %v1432 = vtanh.pop %v1304
    %v1433 = vtanh.pop %v1305
    %v1434 = vtanh.pop %v1306
    %v1435 = vtanh.pop %v1307
    %v1436 = vtanh.pop %v1308
    %v1437 = vtanh.pop %v1309
    %v1438 = vtanh.pop %v1310
    %v1439 = vtanh.pop %v1311
    %v1440 = vtanh.pop %v1312
    %v1441 = vtanh.pop %v1313
    %v1442 = vtanh.pop %v1314
    %v1443 = vtanh.pop %v1315
    %v1444 = vtanh.pop %v1316
    %v1445 = vtanh.pop %v1317
    %v1446 = vtanh.pop %v1318
    %v1447 = vtanh.pop %v1319
    %v1448 = vtanh.pop %v1320
    %v1449 = vtanh.pop %v1321
    %v1450 = vtanh.pop %v1322
    %v1451 = vtanh.pop %v1323
    %v1452 = vtanh.pop %v1324
    %v1453 = vtanh.pop %v1325
    %v1454 = vtanh.pop %v1326
    %v1455 = vtanh.pop %v1327
    %v1456 = vtanh.pop %v1328
    %v1457 = vtanh.pop %v1329
    %v1458 = vtanh.pop %v1330
    %v1459 = vtanh.pop %v1331
    %v1460 = vtanh.pop %v1332
    %v1461 = vtanh.pop %v1333
    %v1462 = vtanh.pop %v1334
    %v1463 = vtanh.pop %v1335
    %v1464 = vtanh.pop %v1336
    %v1465 = vtanh.pop %v1337
    %v1466 = vtanh.pop %v1338
    %v1467 = vtanh.pop %v1339
    %v1468 = vtanh.pop %v1340
    %v1469 = vtanh.pop %v1341
    %v1470 = vtanh.pop %v1342
    %v1471 = vtanh.pop %v1343
    %v1472 = vtanh.pop %v1344
    %v1473 = vtanh.pop %v1345
    %v1474 = vtanh.pop %v1346
    %v1475 = vtanh.pop %v1347
    %v1476 = vtanh.pop %v1348
    %v1477 = vtanh.pop %v1349
    %v1478 = vtanh.pop %v1350
    %v1479 = vtanh.pop %v1351
    %v1480 = vtanh.pop %v1352
    %v1481 = vtanh.pop %v1353
    %v1482 = vtanh.pop %v1354
    %v1483 = vtanh.pop %v1355
    %v1484 = vtanh.pop %v1356
    %v1485 = vtanh.pop %v1357
    %v1486 = vtanh.pop %v1358
    %v1487 = vtanh.pop %v1359
    %v1488 = vtanh.pop %v1360
    %v1489 = vtanh.pop %v1361
    %v1490 = vtanh.pop %v1362
    %v1491 = vtanh.pop %v1363
    %v1492 = vtanh.pop %v1364
    %v1493 = vtanh.pop %v1365
    %v1494 = vtanh.pop %v1366
    %v1495 = vtanh.pop %v1367
    %v1496 = vtanh.pop %v1368
    %v1497 = vtanh.pop %v1369
    %v1498 = vtanh.pop %v1370
    %v1499 = vtanh.pop %v1371
    %v1500 = vtanh.pop %v1372
    %v1501 = vtanh.pop %v1373
    %v1502 = vtanh.pop %v1374
    %v1503 = vtanh.pop %v1375
    %v1504 = vtanh.pop %v1376
    %v1505 = vtanh.pop %v1377
    %v1506 = vtanh.pop %v1378
    %v1507 = vtanh.pop %v1379
    %v1508 = vtanh.pop %v1380
    %v1509 = vtanh.pop %v1381
    %v1510 = vtanh.pop %v1382
    %v1511 = vtanh.pop %v1383
    %v1512 = vtanh.pop %v1384
    %v1513 = vtanh.pop %v1385
    %v1514 = vtanh.pop %v1386
    %v1515 = vtanh.pop %v1387
    %v1516 = vtanh.pop %v1388
    %v1517 = vtanh.pop %v1389
    %v1518 = vtanh.pop %v1390
    %v1519 = vtanh.pop %v1391
    %v1520 = vtanh.pop %v1392
    %v1521 = vtanh.pop %v1393
    %v1522 = vtanh.pop %v1394
    %v1523 = vtanh.pop %v1395
    %v1524 = vtanh.pop %v1396
    %v1525 = vtanh.pop %v1397
    %v1526 = vtanh.pop %v1398
    %v1527 = vtanh.pop %v1399
    %v1528 = vtanh.pop %v1400
    %v1529 = vtanh.pop %v1401
    %v1530 = vtanh.pop %v1402
    %v1531 = vtanh.pop %v1403
    %v1532 = vtanh.pop %v1404
    %v1533 = vtanh.pop %v1405
    %v1534 = vtanh.pop %v1406
    %v1535 = vtanh.pop %v1407
    %v1536 = vtanh.pop %v1408
    %v1537 = vtanh.pop %v1409
    %v1538 = vtanh.pop %v1410
    %v1539 = vtanh.pop %v1411
    %v1540 = vtanh.pop %v1412
    %v1541 = vtanh.pop %v1413
    %v1542 = vtanh.pop %v1414
    %v1543 = vtanh.pop %v1415
    %v1544 = vtanh.pop %v1416
    %v1545 = vtanh.pop %v1417
    %v1546 = vtanh.pop %v1418
    %v1547 = vtanh.pop %v1419
    %v1548 = vtanh.pop %v1420
    %v1549 = vtanh.pop %v1421
    %v1550 = vtanh.pop %v1422
    %v1551 = vtanh.pop %v1423
    %v1552 = vtanh.pop %v1424
    %v1553 = vtanh.pop %v1425
    %v1554 = vtanh.pop %v1426
    %v1555 = vtanh.pop %v1427
    %v1556 = vtanh.pop %v1428
    %v1557 = vpack.c.bf16 %v1430, %v1429
    %v1558 = vpack.c.bf16 %v1432, %v1431
    %v1559 = vpack.c.bf16 %v1434, %v1433
    %v1560 = vpack.c.bf16 %v1436, %v1435
    %v1561 = vpack.c.bf16 %v1438, %v1437
    %v1562 = vpack.c.bf16 %v1440, %v1439
    %v1563 = vpack.c.bf16 %v1442, %v1441
    %v1564 = vpack.c.bf16 %v1444, %v1443
    %v1565 = vpack.c.bf16 %v1446, %v1445
    %v1566 = vpack.c.bf16 %v1448, %v1447
    %v1567 = vpack.c.bf16 %v1450, %v1449
    %v1568 = vpack.c.bf16 %v1452, %v1451
    %v1569 = vpack.c.bf16 %v1454, %v1453
    %v1570 = vpack.c.bf16 %v1456, %v1455
    %v1571 = vpack.c.bf16 %v1458, %v1457
    %v1572 = vpack.c.bf16 %v1460, %v1459
    %v1573 = vpack.c.bf16 %v1462, %v1461
    %v1574 = vpack.c.bf16 %v1464, %v1463
    %v1575 = vpack.c.bf16 %v1466, %v1465
    %v1576 = vpack.c.bf16 %v1468, %v1467
    %v1577 = vpack.c.bf16 %v1470, %v1469
    %v1578 = vpack.c.bf16 %v1472, %v1471
    %v1579 = vpack.c.bf16 %v1474, %v1473
    %v1580 = vpack.c.bf16 %v1476, %v1475
    %v1581 = vpack.c.bf16 %v1478, %v1477
    %v1582 = vpack.c.bf16 %v1480, %v1479
    %v1583 = vpack.c.bf16 %v1482, %v1481
    %v1584 = vpack.c.bf16 %v1484, %v1483
    %v1585 = vpack.c.bf16 %v1486, %v1485
    %v1586 = vpack.c.bf16 %v1488, %v1487
    %v1587 = vpack.c.bf16 %v1490, %v1489
    %v1588 = vpack.c.bf16 %v1492, %v1491
    %v1589 = vpack.c.bf16 %v1494, %v1493
    %v1590 = vpack.c.bf16 %v1496, %v1495
    %v1591 = vpack.c.bf16 %v1498, %v1497
    %v1592 = vpack.c.bf16 %v1500, %v1499
    %v1593 = vpack.c.bf16 %v1502, %v1501
    %v1594 = vpack.c.bf16 %v1504, %v1503
    %v1595 = vpack.c.bf16 %v1506, %v1505
    %v1596 = vpack.c.bf16 %v1508, %v1507
    %v1597 = vpack.c.bf16 %v1510, %v1509
    %v1598 = vpack.c.bf16 %v1512, %v1511
    %v1599 = vpack.c.bf16 %v1514, %v1513
    %v1600 = vpack.c.bf16 %v1516, %v1515
    %v1601 = vpack.c.bf16 %v1518, %v1517
    %v1602 = vpack.c.bf16 %v1520, %v1519
    %v1603 = vpack.c.bf16 %v1522, %v1521
    %v1604 = vpack.c.bf16 %v1524, %v1523
    %v1605 = vpack.c.bf16 %v1526, %v1525
    %v1606 = vpack.c.bf16 %v1528, %v1527
    %v1607 = vpack.c.bf16 %v1530, %v1529
    %v1608 = vpack.c.bf16 %v1532, %v1531
    %v1609 = vpack.c.bf16 %v1534, %v1533
    %v1610 = vpack.c.bf16 %v1536, %v1535
    %v1611 = vpack.c.bf16 %v1538, %v1537
    %v1612 = vpack.c.bf16 %v1540, %v1539
    %v1613 = vpack.c.bf16 %v1542, %v1541
    %v1614 = vpack.c.bf16 %v1544, %v1543
    %v1615 = vpack.c.bf16 %v1546, %v1545
    %v1616 = vpack.c.bf16 %v1548, %v1547
    %v1617 = vpack.c.bf16 %v1550, %v1549
    %v1618 = vpack.c.bf16 %v1552, %v1551
    %v1619 = vpack.c.bf16 %v1554, %v1553
    %v1620 = vpack.c.bf16 %v1556, %v1555
    %v1621 = vld [vmem:[#allocation10] sm:$0xf]
    %v1622 = vld [vmem:[#allocation10 + $0x4] sm:$0xf]
    %v1623 = vld [vmem:[#allocation10 + $0x8] sm:$0xf]
    %v1624 = vld [vmem:[#allocation10 + $0xc] sm:$0xf]
    %v1625 = vld [vmem:[#allocation10 + $0x10] sm:$0xf]
    %v1626 = vld [vmem:[#allocation10 + $0x14] sm:$0xf]
    %v1627 = vld [vmem:[#allocation10 + $0x18] sm:$0xf]
    %v1628 = vld [vmem:[#allocation10 + $0x1c] sm:$0xf]
    %v1629 = vld [vmem:[#allocation10 + $0x20] sm:$0xf]
    %v1630 = vld [vmem:[#allocation10 + $0x24] sm:$0xf]
    %v1631 = vld [vmem:[#allocation10 + $0x28] sm:$0xf]
    %v1632 = vld [vmem:[#allocation10 + $0x2c] sm:$0xf]
    %v1633 = vld [vmem:[#allocation10 + $0x30] sm:$0xf]
    %v1634 = vld [vmem:[#allocation10 + $0x34] sm:$0xf]
    %v1635 = vld [vmem:[#allocation10 + $0x38] sm:$0xf]
    %v1636 = vld [vmem:[#allocation10 + $0x3c] sm:$0xf]
    %v1653 = vunpack.c.l.b16 %v1621
    %v1654 = vunpack.c.l.b16 %v1622
    %v1655 = vunpack.c.l.b16 %v1623
    %v1656 = vunpack.c.l.b16 %v1624
    %v1657 = vunpack.c.l.b16 %v1625
    %v1658 = vunpack.c.l.b16 %v1626
    %v1659 = vunpack.c.l.b16 %v1627
    %v1660 = vunpack.c.l.b16 %v1628
    %v1661 = vunpack.c.l.b16 %v1629
    %v1662 = vunpack.c.l.b16 %v1630
    %v1663 = vunpack.c.l.b16 %v1631
    %v1664 = vunpack.c.l.b16 %v1632
    %v1665 = vunpack.c.l.b16 %v1633
    %v1666 = vunpack.c.l.b16 %v1634
    %v1667 = vunpack.c.l.b16 %v1635
    %v1668 = vunpack.c.l.b16 %v1636
    %v1669 = vpack.c.b16 %v1654, %v1653
    %v1670 = vpack.c.b16 %v1656, %v1655
    %v1671 = vpack.c.b16 %v1658, %v1657
    %v1672 = vpack.c.b16 %v1660, %v1659
    %v1673 = vpack.c.b16 %v1662, %v1661
    %v1674 = vpack.c.b16 %v1664, %v1663
    %v1675 = vpack.c.b16 %v1666, %v1665
    %v1676 = vpack.c.b16 %v1668, %v1667
    %1685 = vmatprep.subr.bf16.mxu0 0
    %1686 = vmatpush1.bf16.msra.mxu0 %v1669
    %1687 = vmatprep.subr.bf16.mxu0 0
    %1688 = vmatpush1.bf16.msra.mxu0 %v1670
    %1689 = vmatprep.subr.bf16.mxu0 0
    %1690 = vmatpush1.bf16.msra.mxu0 %v1671
    %1691 = vmatprep.subr.bf16.mxu0 0
    %1692 = vmatpush1.bf16.msra.mxu0 %v1672
    %1693 = vmatprep.subr.bf16.mxu0 0
    %1694 = vmatpush1.bf16.msra.mxu0 %v1673
    %1695 = vmatprep.subr.bf16.mxu0 0
    %1696 = vmatpush1.bf16.msra.mxu0 %v1674
    %1697 = vmatprep.subr.bf16.mxu0 0
    %1698 = vmatpush1.bf16.msra.mxu0 %v1675
    %1699 = vmatprep.subr.bf16.mxu0 0
    %1700 = vmatpush1.bf16.msra.mxu0 %v1676
    %1701 = vmatprep.subr.bf16.mxu0 0
    %1702 = vmatpush1.bf16.msra.mxu0 0
    %1703 = vmatprep.subr.bf16.mxu0 0
    %1704 = vmatpush1.bf16.msra.mxu0 0
    %1705 = vmatprep.subr.bf16.mxu0 0
    %1706 = vmatpush1.bf16.msra.mxu0 0
    %1707 = vmatprep.subr.bf16.mxu0 0
    %1708 = vmatpush1.bf16.msra.mxu0 0
    %1709 = vmatprep.subr.bf16.mxu0 0
    %1710 = vmatpush1.bf16.msra.mxu0 0
    %1711 = vmatprep.subr.bf16.mxu0 0
    %1712 = vmatpush1.bf16.msra.mxu0 0
    %1713 = vmatprep.subr.bf16.mxu0 0
    %1714 = vmatpush1.bf16.msra.mxu0 0
    %1715 = vmatprep.subr.bf16.mxu0 0
    %1716 = vmatpush1.bf16.msra.mxu0 0
    %1717 = vmatprep.mubr.bf16.mxu0 0
    %1718 = vmatmul.mubr.bf16.gmra.mrb[0].mxu0 %v1557
    %v1719 = vpop.f32.mrb[0].mxu0
    %v1720 = vadd.f32 0.0, %v1719
    %v1721 = vpop.f32.mrb[0].mxu0
    %v1722 = vpop.f32.mrb[0].mxu0
    %v1723 = vadd.f32 0.0, %v1722
    %v1724 = vpop.f32.mrb[0].mxu0
    %1725 = vmatprep.mubr.bf16.mxu0 0
    %1726 = vmatmul.mubr.bf16.gmra.mrb[0].mxu0 %v1558
    %v1727 = vpop.f32.mrb[0].mxu0
    %v1728 = vadd.f32 0.0, %v1727
    %v1729 = vpop.f32.mrb[0].mxu0
    %v1730 = vpop.f32.mrb[0].mxu0
    %v1731 = vadd.f32 0.0, %v1730
    %v1732 = vpop.f32.mrb[0].mxu0
    %1733 = vmatprep.mubr.bf16.mxu0 0
    %1734 = vmatmul.mubr.bf16.gmra.mrb[0].mxu0 %v1559
    %v1735 = vpop.f32.mrb[0].mxu0
    %v1736 = vadd.f32 0.0, %v1735
    %v1737 = vpop.f32.mrb[0].mxu0
    %v1738 = vpop.f32.mrb[0].mxu0
    %v1739 = vadd.f32 0.0, %v1738
    %v1740 = vpop.f32.mrb[0].mxu0
    %1741 = vmatprep.mubr.bf16.mxu0 0
    %1742 = vmatmul.mubr.bf16.gmra.mrb[0].mxu0 %v1560
    %v1743 = vpop.f32.mrb[0].mxu0
    %v1744 = vadd.f32 0.0, %v1743
    %v1745 = vpop.f32.mrb[0].mxu0
    %v1746 = vpop.f32.mrb[0].mxu0
    %v1747 = vadd.f32 0.0, %v1746
    %v1748 = vpop.f32.mrb[0].mxu0
    %1749 = vmatprep.mubr.bf16.mxu0 0
    %1750 = vmatmul.mubr.bf16.gmra.mrb[0].mxu0 %v1561
    %v1751 = vpop.f32.mrb[0].mxu0
    %v1752 = vadd.f32 0.0, %v1751
    %v1753 = vpop.f32.mrb[0].mxu0
    %v1754 = vpop.f32.mrb[0].mxu0
    %v1755 = vadd.f32 0.0, %v1754
    %v1756 = vpop.f32.mrb[0].mxu0
    %1757 = vmatprep.mubr.bf16.mxu0 0
    %1758 = vmatmul.mubr.bf16.gmra.mrb[0].mxu0 %v1562
    %v1759 = vpop.f32.mrb[0].mxu0
    %v1760 = vadd.f32 0.0, %v1759
    %v1761 = vpop.f32.mrb[0].mxu0
    %v1762 = vpop.f32.mrb[0].mxu0
    %v1763 = vadd.f32 0.0, %v1762
    %v1764 = vpop.f32.mrb[0].mxu0
    %1765 = vmatprep.mubr.bf16.mxu0 0
    %1766 = vmatmul.mubr.bf16.gmra.mrb[0].mxu0 %v1563
    %v1767 = vpop.f32.mrb[0].mxu0
    %v1768 = vadd.f32 0.0, %v1767
    %v1769 = vpop.f32.mrb[0].mxu0
    %v1770 = vpop.f32.mrb[0].mxu0
    %v1771 = vadd.f32 0.0, %v1770
    %v1772 = vpop.f32.mrb[0].mxu0
    %1773 = vmatprep.mubr.bf16.mxu0 0
    %1774 = vmatmul.mubr.bf16.gmra.mrb[0].mxu0 %v1564
    %v1775 = vpop.f32.mrb[0].mxu0
    %v1776 = vadd.f32 0.0, %v1775
    %v1777 = vpop.f32.mrb[0].mxu0
    %v1778 = vpop.f32.mrb[0].mxu0
    %v1779 = vadd.f32 0.0, %v1778
    %v1780 = vpop.f32.mrb[0].mxu0
    %1781 = vmatprep.mubr.bf16.mxu0 0
    %1782 = vmatmul.mubr.bf16.gmra.mrb[0].mxu0 %v1565
    %v1783 = vpop.f32.mrb[0].mxu0
    %v1784 = vadd.f32 0.0, %v1783
    %v1785 = vpop.f32.mrb[0].mxu0
    %v1786 = vpop.f32.mrb[0].mxu0
    %v1787 = vadd.f32 0.0, %v1786
    %v1788 = vpop.f32.mrb[0].mxu0
    %1789 = vmatprep.mubr.bf16.mxu0 0
    %1790 = vmatmul.mubr.bf16.gmra.mrb[0].mxu0 %v1566
    %v1791 = vpop.f32.mrb[0].mxu0
    %v1792 = vadd.f32 0.0, %v1791
    %v1793 = vpop.f32.mrb[0].mxu0
    %v1794 = vpop.f32.mrb[0].mxu0
    %v1795 = vadd.f32 0.0, %v1794
    %v1796 = vpop.f32.mrb[0].mxu0
    %1797 = vmatprep.mubr.bf16.mxu0 0
    %1798 = vmatmul.mubr.bf16.gmra.mrb[0].mxu0 %v1567
    %v1799 = vpop.f32.mrb[0].mxu0
    %v1800 = vadd.f32 0.0, %v1799
    %v1801 = vpop.f32.mrb[0].mxu0
    %v1802 = vpop.f32.mrb[0].mxu0
    %v1803 = vadd.f32 0.0, %v1802
    %v1804 = vpop.f32.mrb[0].mxu0
    %1805 = vmatprep.mubr.bf16.mxu0 0
    %1806 = vmatmul.mubr.bf16.gmra.mrb[0].mxu0 %v1568
    %v1807 = vpop.f32.mrb[0].mxu0
    %v1808 = vadd.f32 0.0, %v1807
    %v1809 = vpop.f32.mrb[0].mxu0
    %v1810 = vpop.f32.mrb[0].mxu0
    %v1811 = vadd.f32 0.0, %v1810
    %v1812 = vpop.f32.mrb[0].mxu0
    %1813 = vmatprep.mubr.bf16.mxu0 0
    %1814 = vmatmul.mubr.bf16.gmra.mrb[0].mxu0 %v1569
    %v1815 = vpop.f32.mrb[0].mxu0
    %v1816 = vadd.f32 0.0, %v1815
    %v1817 = vpop.f32.mrb[0].mxu0
    %v1818 = vpop.f32.mrb[0].mxu0
    %v1819 = vadd.f32 0.0, %v1818
    %v1820 = vpop.f32.mrb[0].mxu0
    %1821 = vmatprep.mubr.bf16.mxu0 0
    %1822 = vmatmul.mubr.bf16.gmra.mrb[0].mxu0 %v1570
    %v1823 = vpop.f32.mrb[0].mxu0
    %v1824 = vadd.f32 0.0, %v1823
    %v1825 = vpop.f32.mrb[0].mxu0
    %v1826 = vpop.f32.mrb[0].mxu0
    %v1827 = vadd.f32 0.0, %v1826
    %v1828 = vpop.f32.mrb[0].mxu0
    %1829 = vmatprep.mubr.bf16.mxu0 0
    %1830 = vmatmul.mubr.bf16.gmra.mrb[0].mxu0 %v1571
    %v1831 = vpop.f32.mrb[0].mxu0
    %v1832 = vadd.f32 0.0, %v1831
    %v1833 = vpop.f32.mrb[0].mxu0
    %v1834 = vpop.f32.mrb[0].mxu0
    %v1835 = vadd.f32 0.0, %v1834
    %v1836 = vpop.f32.mrb[0].mxu0
    %1837 = vmatprep.mubr.bf16.mxu0 0
    %1838 = vmatmul.mubr.bf16.gmra.mrb[0].mxu0 %v1572
    %v1839 = vpop.f32.mrb[0].mxu0
    %v1840 = vadd.f32 0.0, %v1839
    %v1841 = vpop.f32.mrb[0].mxu0
    %v1842 = vpop.f32.mrb[0].mxu0
    %v1843 = vadd.f32 0.0, %v1842
    %v1844 = vpop.f32.mrb[0].mxu0
    %1845 = vmatprep.mubr.bf16.mxu0 0
    %1846 = vmatmul.mubr.bf16.gmra.mrb[0].mxu0 %v1573
    %v1847 = vpop.f32.mrb[0].mxu0
    %v1848 = vadd.f32 0.0, %v1847
    %v1849 = vpop.f32.mrb[0].mxu0
    %v1850 = vpop.f32.mrb[0].mxu0
    %v1851 = vadd.f32 0.0, %v1850
    %v1852 = vpop.f32.mrb[0].mxu0
    %1853 = vmatprep.mubr.bf16.mxu0 0
    %1854 = vmatmul.mubr.bf16.gmra.mrb[0].mxu0 %v1574
    %v1855 = vpop.f32.mrb[0].mxu0
    %v1856 = vadd.f32 0.0, %v1855
    %v1857 = vpop.f32.mrb[0].mxu0
    %v1858 = vpop.f32.mrb[0].mxu0
    %v1859 = vadd.f32 0.0, %v1858
    %v1860 = vpop.f32.mrb[0].mxu0
    %1861 = vmatprep.mubr.bf16.mxu0 0
    %1862 = vmatmul.mubr.bf16.gmra.mrb[0].mxu0 %v1575
    %v1863 = vpop.f32.mrb[0].mxu0
    %v1864 = vadd.f32 0.0, %v1863
    %v1865 = vpop.f32.mrb[0].mxu0
    %v1866 = vpop.f32.mrb[0].mxu0
    %v1867 = vadd.f32 0.0, %v1866
    %v1868 = vpop.f32.mrb[0].mxu0
    %1869 = vmatprep.mubr.bf16.mxu0 0
    %1870 = vmatmul.mubr.bf16.gmra.mrb[0].mxu0 %v1576
    %v1871 = vpop.f32.mrb[0].mxu0
    %v1872 = vadd.f32 0.0, %v1871
    %v1873 = vpop.f32.mrb[0].mxu0
    %v1874 = vpop.f32.mrb[0].mxu0
    %v1875 = vadd.f32 0.0, %v1874
    %v1876 = vpop.f32.mrb[0].mxu0
    %1877 = vmatprep.mubr.bf16.mxu0 0
    %1878 = vmatmul.mubr.bf16.gmra.mrb[0].mxu0 %v1577
    %v1879 = vpop.f32.mrb[0].mxu0
    %v1880 = vadd.f32 0.0, %v1879
    %v1881 = vpop.f32.mrb[0].mxu0
    %v1882 = vpop.f32.mrb[0].mxu0
    %v1883 = vadd.f32 0.0, %v1882
    %v1884 = vpop.f32.mrb[0].mxu0
    %1885 = vmatprep.mubr.bf16.mxu0 0
    %1886 = vmatmul.mubr.bf16.gmra.mrb[0].mxu0 %v1578
    %v1887 = vpop.f32.mrb[0].mxu0
    %v1888 = vadd.f32 0.0, %v1887
    %v1889 = vpop.f32.mrb[0].mxu0
    %v1890 = vpop.f32.mrb[0].mxu0
    %v1891 = vadd.f32 0.0, %v1890
    %v1892 = vpop.f32.mrb[0].mxu0
    %1893 = vmatprep.mubr.bf16.mxu0 0
    %1894 = vmatmul.mubr.bf16.gmra.mrb[0].mxu0 %v1579
    %v1895 = vpop.f32.mrb[0].mxu0
    %v1896 = vadd.f32 0.0, %v1895
    %v1897 = vpop.f32.mrb[0].mxu0
    %v1898 = vpop.f32.mrb[0].mxu0
    %v1899 = vadd.f32 0.0, %v1898
    %v1900 = vpop.f32.mrb[0].mxu0
    %1901 = vmatprep.mubr.bf16.mxu0 0
    %1902 = vmatmul.mubr.bf16.gmra.mrb[0].mxu0 %v1580
    %v1903 = vpop.f32.mrb[0].mxu0
    %v1904 = vadd.f32 0.0, %v1903
    %v1905 = vpop.f32.mrb[0].mxu0
    %v1906 = vpop.f32.mrb[0].mxu0
    %v1907 = vadd.f32 0.0, %v1906
    %v1908 = vpop.f32.mrb[0].mxu0
    %1909 = vmatprep.mubr.bf16.mxu0 0
    %1910 = vmatmul.mubr.bf16.gmra.mrb[0].mxu0 %v1581
    %v1911 = vpop.f32.mrb[0].mxu0
    %v1912 = vadd.f32 0.0, %v1911
    %v1913 = vpop.f32.mrb[0].mxu0
    %v1914 = vpop.f32.mrb[0].mxu0
    %v1915 = vadd.f32 0.0, %v1914
    %v1916 = vpop.f32.mrb[0].mxu0
    %1917 = vmatprep.mubr.bf16.mxu0 0
    %1918 = vmatmul.mubr.bf16.gmra.mrb[0].mxu0 %v1582
    %v1919 = vpop.f32.mrb[0].mxu0
    %v1920 = vadd.f32 0.0, %v1919
    %v1921 = vpop.f32.mrb[0].mxu0
    %v1922 = vpop.f32.mrb[0].mxu0
    %v1923 = vadd.f32 0.0, %v1922
    %v1924 = vpop.f32.mrb[0].mxu0
    %1925 = vmatprep.mubr.bf16.mxu0 0
    %1926 = vmatmul.mubr.bf16.gmra.mrb[0].mxu0 %v1583
    %v1927 = vpop.f32.mrb[0].mxu0
    %v1928 = vadd.f32 0.0, %v1927
    %v1929 = vpop.f32.mrb[0].mxu0
    %v1930 = vpop.f32.mrb[0].mxu0
    %v1931 = vadd.f32 0.0, %v1930
    %v1932 = vpop.f32.mrb[0].mxu0
    %1933 = vmatprep.mubr.bf16.mxu0 0
    %1934 = vmatmul.mubr.bf16.gmra.mrb[0].mxu0 %v1584
    %v1935 = vpop.f32.mrb[0].mxu0
    %v1936 = vadd.f32 0.0, %v1935
    %v1937 = vpop.f32.mrb[0].mxu0
    %v1938 = vpop.f32.mrb[0].mxu0
    %v1939 = vadd.f32 0.0, %v1938
    %v1940 = vpop.f32.mrb[0].mxu0
    %1941 = vmatprep.mubr.bf16.mxu0 0
    %1942 = vmatmul.mubr.bf16.gmra.mrb[0].mxu0 %v1585
    %v1943 = vpop.f32.mrb[0].mxu0
    %v1944 = vadd.f32 0.0, %v1943
    %v1945 = vpop.f32.mrb[0].mxu0
    %v1946 = vpop.f32.mrb[0].mxu0
    %v1947 = vadd.f32 0.0, %v1946
    %v1948 = vpop.f32.mrb[0].mxu0
    %1949 = vmatprep.mubr.bf16.mxu0 0
    %1950 = vmatmul.mubr.bf16.gmra.mrb[0].mxu0 %v1586
    %v1951 = vpop.f32.mrb[0].mxu0
    %v1952 = vadd.f32 0.0, %v1951
    %v1953 = vpop.f32.mrb[0].mxu0
    %v1954 = vpop.f32.mrb[0].mxu0
    %v1955 = vadd.f32 0.0, %v1954
    %v1956 = vpop.f32.mrb[0].mxu0
    %1957 = vmatprep.mubr.bf16.mxu0 0
    %1958 = vmatmul.mubr.bf16.gmra.mrb[0].mxu0 %v1587
    %v1959 = vpop.f32.mrb[0].mxu0
    %v1960 = vadd.f32 0.0, %v1959
    %v1961 = vpop.f32.mrb[0].mxu0
    %v1962 = vpop.f32.mrb[0].mxu0
    %v1963 = vadd.f32 0.0, %v1962
    %v1964 = vpop.f32.mrb[0].mxu0
    %1965 = vmatprep.mubr.bf16.mxu0 0
    %1966 = vmatmul.mubr.bf16.gmra.mrb[0].mxu0 %v1588
    %v1967 = vpop.f32.mrb[0].mxu0
    %v1968 = vadd.f32 0.0, %v1967
    %v1969 = vpop.f32.mrb[0].mxu0
    %v1970 = vpop.f32.mrb[0].mxu0
    %v1971 = vadd.f32 0.0, %v1970
    %v1972 = vpop.f32.mrb[0].mxu0
    %1973 = vmatprep.mubr.bf16.mxu0 0
    %1974 = vmatmul.mubr.bf16.gmra.mrb[0].mxu0 %v1589
    %v1975 = vpop.f32.mrb[0].mxu0
    %v1976 = vadd.f32 0.0, %v1975
    %v1977 = vpop.f32.mrb[0].mxu0
    %v1978 = vpop.f32.mrb[0].mxu0
    %v1979 = vadd.f32 0.0, %v1978
    %v1980 = vpop.f32.mrb[0].mxu0
    %1981 = vmatprep.mubr.bf16.mxu0 0
    %1982 = vmatmul.mubr.bf16.gmra.mrb[0].mxu0 %v1590
    %v1983 = vpop.f32.mrb[0].mxu0
    %v1984 = vadd.f32 0.0, %v1983
    %v1985 = vpop.f32.mrb[0].mxu0
    %v1986 = vpop.f32.mrb[0].mxu0
    %v1987 = vadd.f32 0.0, %v1986
    %v1988 = vpop.f32.mrb[0].mxu0
    %1989 = vmatprep.mubr.bf16.mxu0 0
    %1990 = vmatmul.mubr.bf16.gmra.mrb[0].mxu0 %v1591
    %v1991 = vpop.f32.mrb[0].mxu0
    %v1992 = vadd.f32 0.0, %v1991
    %v1993 = vpop.f32.mrb[0].mxu0
    %v1994 = vpop.f32.mrb[0].mxu0
    %v1995 = vadd.f32 0.0, %v1994
    %v1996 = vpop.f32.mrb[0].mxu0
    %1997 = vmatprep.mubr.bf16.mxu0 0
    %1998 = vmatmul.mubr.bf16.gmra.mrb[0].mxu0 %v1592
    %v1999 = vpop.f32.mrb[0].mxu0
    %v2000 = vadd.f32 0.0, %v1999
    %v2001 = vpop.f32.mrb[0].mxu0
    %v2002 = vpop.f32.mrb[0].mxu0
    %v2003 = vadd.f32 0.0, %v2002
    %v2004 = vpop.f32.mrb[0].mxu0
    %2005 = vmatprep.mubr.bf16.mxu0 0
    %2006 = vmatmul.mubr.bf16.gmra.mrb[0].mxu0 %v1593
    %v2007 = vpop.f32.mrb[0].mxu0
    %v2008 = vadd.f32 0.0, %v2007
    %v2009 = vpop.f32.mrb[0].mxu0
    %v2010 = vpop.f32.mrb[0].mxu0
    %v2011 = vadd.f32 0.0, %v2010
    %v2012 = vpop.f32.mrb[0].mxu0
    %2013 = vmatprep.mubr.bf16.mxu0 0
    %2014 = vmatmul.mubr.bf16.gmra.mrb[0].mxu0 %v1594
    %v2015 = vpop.f32.mrb[0].mxu0
    %v2016 = vadd.f32 0.0, %v2015
    %v2017 = vpop.f32.mrb[0].mxu0
    %v2018 = vpop.f32.mrb[0].mxu0
    %v2019 = vadd.f32 0.0, %v2018
    %v2020 = vpop.f32.mrb[0].mxu0
    %2021 = vmatprep.mubr.bf16.mxu0 0
    %2022 = vmatmul.mubr.bf16.gmra.mrb[0].mxu0 %v1595
    %v2023 = vpop.f32.mrb[0].mxu0
    %v2024 = vadd.f32 0.0, %v2023
    %v2025 = vpop.f32.mrb[0].mxu0
    %v2026 = vpop.f32.mrb[0].mxu0
    %v2027 = vadd.f32 0.0, %v2026
    %v2028 = vpop.f32.mrb[0].mxu0
    %2029 = vmatprep.mubr.bf16.mxu0 0
    %2030 = vmatmul.mubr.bf16.gmra.mrb[0].mxu0 %v1596
    %v2031 = vpop.f32.mrb[0].mxu0
    %v2032 = vadd.f32 0.0, %v2031
    %v2033 = vpop.f32.mrb[0].mxu0
    %v2034 = vpop.f32.mrb[0].mxu0
    %v2035 = vadd.f32 0.0, %v2034
    %v2036 = vpop.f32.mrb[0].mxu0
    %2037 = vmatprep.mubr.bf16.mxu0 0
    %2038 = vmatmul.mubr.bf16.gmra.mrb[0].mxu0 %v1597
    %v2039 = vpop.f32.mrb[0].mxu0
    %v2040 = vadd.f32 0.0, %v2039
    %v2041 = vpop.f32.mrb[0].mxu0
    %v2042 = vpop.f32.mrb[0].mxu0
    %v2043 = vadd.f32 0.0, %v2042
    %v2044 = vpop.f32.mrb[0].mxu0
    %2045 = vmatprep.mubr.bf16.mxu0 0
    %2046 = vmatmul.mubr.bf16.gmra.mrb[0].mxu0 %v1598
    %v2047 = vpop.f32.mrb[0].mxu0
    %v2048 = vadd.f32 0.0, %v2047
    %v2049 = vpop.f32.mrb[0].mxu0
    %v2050 = vpop.f32.mrb[0].mxu0
    %v2051 = vadd.f32 0.0, %v2050
    %v2052 = vpop.f32.mrb[0].mxu0
    %2053 = vmatprep.mubr.bf16.mxu0 0
    %2054 = vmatmul.mubr.bf16.gmra.mrb[0].mxu0 %v1599
    %v2055 = vpop.f32.mrb[0].mxu0
    %v2056 = vadd.f32 0.0, %v2055
    %v2057 = vpop.f32.mrb[0].mxu0
    %v2058 = vpop.f32.mrb[0].mxu0
    %v2059 = vadd.f32 0.0, %v2058
    %v2060 = vpop.f32.mrb[0].mxu0
    %2061 = vmatprep.mubr.bf16.mxu0 0
    %2062 = vmatmul.mubr.bf16.gmra.mrb[0].mxu0 %v1600
    %v2063 = vpop.f32.mrb[0].mxu0
    %v2064 = vadd.f32 0.0, %v2063
    %v2065 = vpop.f32.mrb[0].mxu0
    %v2066 = vpop.f32.mrb[0].mxu0
    %v2067 = vadd.f32 0.0, %v2066
    %v2068 = vpop.f32.mrb[0].mxu0
    %2069 = vmatprep.mubr.bf16.mxu0 0
    %2070 = vmatmul.mubr.bf16.gmra.mrb[0].mxu0 %v1601
    %v2071 = vpop.f32.mrb[0].mxu0
    %v2072 = vadd.f32 0.0, %v2071
    %v2073 = vpop.f32.mrb[0].mxu0
    %v2074 = vpop.f32.mrb[0].mxu0
    %v2075 = vadd.f32 0.0, %v2074
    %v2076 = vpop.f32.mrb[0].mxu0
    %2077 = vmatprep.mubr.bf16.mxu0 0
    %2078 = vmatmul.mubr.bf16.gmra.mrb[0].mxu0 %v1602
    %v2079 = vpop.f32.mrb[0].mxu0
    %v2080 = vadd.f32 0.0, %v2079
    %v2081 = vpop.f32.mrb[0].mxu0
    %v2082 = vpop.f32.mrb[0].mxu0
    %v2083 = vadd.f32 0.0, %v2082
    %v2084 = vpop.f32.mrb[0].mxu0
    %2085 = vmatprep.mubr.bf16.mxu0 0
    %2086 = vmatmul.mubr.bf16.gmra.mrb[0].mxu0 %v1603
    %v2087 = vpop.f32.mrb[0].mxu0
    %v2088 = vadd.f32 0.0, %v2087
    %v2089 = vpop.f32.mrb[0].mxu0
    %v2090 = vpop.f32.mrb[0].mxu0
    %v2091 = vadd.f32 0.0, %v2090
    %v2092 = vpop.f32.mrb[0].mxu0
    %2093 = vmatprep.mubr.bf16.mxu0 0
    %2094 = vmatmul.mubr.bf16.gmra.mrb[0].mxu0 %v1604
    %v2095 = vpop.f32.mrb[0].mxu0
    %v2096 = vadd.f32 0.0, %v2095
    %v2097 = vpop.f32.mrb[0].mxu0
    %v2098 = vpop.f32.mrb[0].mxu0
    %v2099 = vadd.f32 0.0, %v2098
    %v2100 = vpop.f32.mrb[0].mxu0
    %2101 = vmatprep.mubr.bf16.mxu0 0
    %2102 = vmatmul.mubr.bf16.gmra.mrb[0].mxu0 %v1605
    %v2103 = vpop.f32.mrb[0].mxu0
    %v2104 = vadd.f32 0.0, %v2103
    %v2105 = vpop.f32.mrb[0].mxu0
    %v2106 = vpop.f32.mrb[0].mxu0
    %v2107 = vadd.f32 0.0, %v2106
    %v2108 = vpop.f32.mrb[0].mxu0
    %2109 = vmatprep.mubr.bf16.mxu0 0
    %2110 = vmatmul.mubr.bf16.gmra.mrb[0].mxu0 %v1606
    %v2111 = vpop.f32.mrb[0].mxu0
    %v2112 = vadd.f32 0.0, %v2111
    %v2113 = vpop.f32.mrb[0].mxu0
    %v2114 = vpop.f32.mrb[0].mxu0
    %v2115 = vadd.f32 0.0, %v2114
    %v2116 = vpop.f32.mrb[0].mxu0
    %2117 = vmatprep.mubr.bf16.mxu0 0
    %2118 = vmatmul.mubr.bf16.gmra.mrb[0].mxu0 %v1607
    %v2119 = vpop.f32.mrb[0].mxu0
    %v2120 = vadd.f32 0.0, %v2119
    %v2121 = vpop.f32.mrb[0].mxu0
    %v2122 = vpop.f32.mrb[0].mxu0
    %v2123 = vadd.f32 0.0, %v2122
    %v2124 = vpop.f32.mrb[0].mxu0
    %2125 = vmatprep.mubr.bf16.mxu0 0
    %2126 = vmatmul.mubr.bf16.gmra.mrb[0].mxu0 %v1608
    %v2127 = vpop.f32.mrb[0].mxu0
    %v2128 = vadd.f32 0.0, %v2127
    %v2129 = vpop.f32.mrb[0].mxu0
    %v2130 = vpop.f32.mrb[0].mxu0
    %v2131 = vadd.f32 0.0, %v2130
    %v2132 = vpop.f32.mrb[0].mxu0
    %2133 = vmatprep.mubr.bf16.mxu0 0
    %2134 = vmatmul.mubr.bf16.gmra.mrb[0].mxu0 %v1609
    %v2135 = vpop.f32.mrb[0].mxu0
    %v2136 = vadd.f32 0.0, %v2135
    %v2137 = vpop.f32.mrb[0].mxu0
    %v2138 = vpop.f32.mrb[0].mxu0
    %v2139 = vadd.f32 0.0, %v2138
    %v2140 = vpop.f32.mrb[0].mxu0
    %2141 = vmatprep.mubr.bf16.mxu0 0
    %2142 = vmatmul.mubr.bf16.gmra.mrb[0].mxu0 %v1610
    %v2143 = vpop.f32.mrb[0].mxu0
    %v2144 = vadd.f32 0.0, %v2143
    %v2145 = vpop.f32.mrb[0].mxu0
    %v2146 = vpop.f32.mrb[0].mxu0
    %v2147 = vadd.f32 0.0, %v2146
    %v2148 = vpop.f32.mrb[0].mxu0
    %2149 = vmatprep.mubr.bf16.mxu0 0
    %2150 = vmatmul.mubr.bf16.gmra.mrb[0].mxu0 %v1611
    %v2151 = vpop.f32.mrb[0].mxu0
    %v2152 = vadd.f32 0.0, %v2151
    %v2153 = vpop.f32.mrb[0].mxu0
    %v2154 = vpop.f32.mrb[0].mxu0
    %v2155 = vadd.f32 0.0, %v2154
    %v2156 = vpop.f32.mrb[0].mxu0
    %2157 = vmatprep.mubr.bf16.mxu0 0
    %2158 = vmatmul.mubr.bf16.gmra.mrb[0].mxu0 %v1612
    %v2159 = vpop.f32.mrb[0].mxu0
    %v2160 = vadd.f32 0.0, %v2159
    %v2161 = vpop.f32.mrb[0].mxu0
    %v2162 = vpop.f32.mrb[0].mxu0
    %v2163 = vadd.f32 0.0, %v2162
    %v2164 = vpop.f32.mrb[0].mxu0
    %2165 = vmatprep.mubr.bf16.mxu0 0
    %2166 = vmatmul.mubr.bf16.gmra.mrb[0].mxu0 %v1613
    %v2167 = vpop.f32.mrb[0].mxu0
    %v2168 = vadd.f32 0.0, %v2167
    %v2169 = vpop.f32.mrb[0].mxu0
    %v2170 = vpop.f32.mrb[0].mxu0
    %v2171 = vadd.f32 0.0, %v2170
    %v2172 = vpop.f32.mrb[0].mxu0
    %2173 = vmatprep.mubr.bf16.mxu0 0
    %2174 = vmatmul.mubr.bf16.gmra.mrb[0].mxu0 %v1614
    %v2175 = vpop.f32.mrb[0].mxu0
    %v2176 = vadd.f32 0.0, %v2175
    %v2177 = vpop.f32.mrb[0].mxu0
    %v2178 = vpop.f32.mrb[0].mxu0
    %v2179 = vadd.f32 0.0, %v2178
    %v2180 = vpop.f32.mrb[0].mxu0
    %2181 = vmatprep.mubr.bf16.mxu0 0
    %2182 = vmatmul.mubr.bf16.gmra.mrb[0].mxu0 %v1615
    %v2183 = vpop.f32.mrb[0].mxu0
    %v2184 = vadd.f32 0.0, %v2183
    %v2185 = vpop.f32.mrb[0].mxu0
    %v2186 = vpop.f32.mrb[0].mxu0
    %v2187 = vadd.f32 0.0, %v2186
    %v2188 = vpop.f32.mrb[0].mxu0
    %2189 = vmatprep.mubr.bf16.mxu0 0
    %2190 = vmatmul.mubr.bf16.gmra.mrb[0].mxu0 %v1616
    %v2191 = vpop.f32.mrb[0].mxu0
    %v2192 = vadd.f32 0.0, %v2191
    %v2193 = vpop.f32.mrb[0].mxu0
    %v2194 = vpop.f32.mrb[0].mxu0
    %v2195 = vadd.f32 0.0, %v2194
    %v2196 = vpop.f32.mrb[0].mxu0
    %2197 = vmatprep.mubr.bf16.mxu0 0
    %2198 = vmatmul.mubr.bf16.gmra.mrb[0].mxu0 %v1617
    %v2199 = vpop.f32.mrb[0].mxu0
    %v2200 = vadd.f32 0.0, %v2199
    %v2201 = vpop.f32.mrb[0].mxu0
    %v2202 = vpop.f32.mrb[0].mxu0
    %v2203 = vadd.f32 0.0, %v2202
    %v2204 = vpop.f32.mrb[0].mxu0
    %2205 = vmatprep.mubr.bf16.mxu0 0
    %2206 = vmatmul.mubr.bf16.gmra.mrb[0].mxu0 %v1618
    %v2207 = vpop.f32.mrb[0].mxu0
    %v2208 = vadd.f32 0.0, %v2207
    %v2209 = vpop.f32.mrb[0].mxu0
    %v2210 = vpop.f32.mrb[0].mxu0
    %v2211 = vadd.f32 0.0, %v2210
    %v2212 = vpop.f32.mrb[0].mxu0
    %2213 = vmatprep.mubr.bf16.mxu0 0
    %2214 = vmatmul.mubr.bf16.gmra.mrb[0].mxu0 %v1619
    %v2215 = vpop.f32.mrb[0].mxu0
    %v2216 = vadd.f32 0.0, %v2215
    %v2217 = vpop.f32.mrb[0].mxu0
    %v2218 = vpop.f32.mrb[0].mxu0
    %v2219 = vadd.f32 0.0, %v2218
    %v2220 = vpop.f32.mrb[0].mxu0
    %2221 = vmatprep.mubr.bf16.mxu0 0
    %2222 = vmatmul.mubr.bf16.gmra.mrb[0].mxu0 %v1620
    %v2223 = vpop.f32.mrb[0].mxu0
    %v2224 = vadd.f32 0.0, %v2223
    %v2225 = vpop.f32.mrb[0].mxu0
    %v2226 = vpop.f32.mrb[0].mxu0
    %v2227 = vadd.f32 0.0, %v2226
    %v2228 = vpop.f32.mrb[0].mxu0
    %2229 = vdwg.mxu0
    %2230 = vadd.xlane.f32.xlu0 %v1720
    %v2231 = vpop.xlane.xlu0 %2230
    %2232 = vadd.xlane.f32.xlu0 %v1723
    %v2233 = vpop.xlane.xlu0 %2232
    %2234 = vadd.xlane.f32.xlu0 %v1728
    %v2235 = vpop.xlane.xlu0 %2234
    %2236 = vadd.xlane.f32.xlu0 %v1731
    %v2237 = vpop.xlane.xlu0 %2236
    %2238 = vadd.xlane.f32.xlu0 %v1736
    %v2239 = vpop.xlane.xlu0 %2238
    %2240 = vadd.xlane.f32.xlu0 %v1739
    %v2241 = vpop.xlane.xlu0 %2240
    %2242 = vadd.xlane.f32.xlu0 %v1744
    %v2243 = vpop.xlane.xlu0 %2242
    %2244 = vadd.xlane.f32.xlu0 %v1747
    %v2245 = vpop.xlane.xlu0 %2244
    %2246 = vadd.xlane.f32.xlu0 %v1752
    %v2247 = vpop.xlane.xlu0 %2246
    %2248 = vadd.xlane.f32.xlu0 %v1755
    %v2249 = vpop.xlane.xlu0 %2248
    %2250 = vadd.xlane.f32.xlu0 %v1760
    %v2251 = vpop.xlane.xlu0 %2250
    %2252 = vadd.xlane.f32.xlu0 %v1763
    %v2253 = vpop.xlane.xlu0 %2252
    %2254 = vadd.xlane.f32.xlu0 %v1768
    %v2255 = vpop.xlane.xlu0 %2254
    %2256 = vadd.xlane.f32.xlu0 %v1771
    %v2257 = vpop.xlane.xlu0 %2256
    %2258 = vadd.xlane.f32.xlu0 %v1776
    %v2259 = vpop.xlane.xlu0 %2258
    %2260 = vadd.xlane.f32.xlu0 %v1779
    %v2261 = vpop.xlane.xlu0 %2260
    %2262 = vadd.xlane.f32.xlu0 %v1784
    %v2263 = vpop.xlane.xlu0 %2262
    %2264 = vadd.xlane.f32.xlu0 %v1787
    %v2265 = vpop.xlane.xlu0 %2264
    %2266 = vadd.xlane.f32.xlu0 %v1792
    %v2267 = vpop.xlane.xlu0 %2266
    %2268 = vadd.xlane.f32.xlu0 %v1795
    %v2269 = vpop.xlane.xlu0 %2268
    %2270 = vadd.xlane.f32.xlu0 %v1800
    %v2271 = vpop.xlane.xlu0 %2270
    %2272 = vadd.xlane.f32.xlu0 %v1803
    %v2273 = vpop.xlane.xlu0 %2272
    %2274 = vadd.xlane.f32.xlu0 %v1808
    %v2275 = vpop.xlane.xlu0 %2274
    %2276 = vadd.xlane.f32.xlu0 %v1811
    %v2277 = vpop.xlane.xlu0 %2276
    %2278 = vadd.xlane.f32.xlu0 %v1816
    %v2279 = vpop.xlane.xlu0 %2278
    %2280 = vadd.xlane.f32.xlu0 %v1819
    %v2281 = vpop.xlane.xlu0 %2280
    %2282 = vadd.xlane.f32.xlu0 %v1824
    %v2283 = vpop.xlane.xlu0 %2282
    %2284 = vadd.xlane.f32.xlu0 %v1827
    %v2285 = vpop.xlane.xlu0 %2284
    %2286 = vadd.xlane.f32.xlu0 %v1832
    %v2287 = vpop.xlane.xlu0 %2286
    %2288 = vadd.xlane.f32.xlu0 %v1835
    %v2289 = vpop.xlane.xlu0 %2288
    %2290 = vadd.xlane.f32.xlu0 %v1840
    %v2291 = vpop.xlane.xlu0 %2290
    %2292 = vadd.xlane.f32.xlu0 %v1843
    %v2293 = vpop.xlane.xlu0 %2292
    %2294 = vadd.xlane.f32.xlu0 %v1848
    %v2295 = vpop.xlane.xlu0 %2294
    %2296 = vadd.xlane.f32.xlu0 %v1851
    %v2297 = vpop.xlane.xlu0 %2296
    %2298 = vadd.xlane.f32.xlu0 %v1856
    %v2299 = vpop.xlane.xlu0 %2298
    %2300 = vadd.xlane.f32.xlu0 %v1859
    %v2301 = vpop.xlane.xlu0 %2300
    %2302 = vadd.xlane.f32.xlu0 %v1864
    %v2303 = vpop.xlane.xlu0 %2302
    %2304 = vadd.xlane.f32.xlu0 %v1867
    %v2305 = vpop.xlane.xlu0 %2304
    %2306 = vadd.xlane.f32.xlu0 %v1872
    %v2307 = vpop.xlane.xlu0 %2306
    %2308 = vadd.xlane.f32.xlu0 %v1875
    %v2309 = vpop.xlane.xlu0 %2308
    %2310 = vadd.xlane.f32.xlu0 %v1880
    %v2311 = vpop.xlane.xlu0 %2310
    %2312 = vadd.xlane.f32.xlu0 %v1883
    %v2313 = vpop.xlane.xlu0 %2312
    %2314 = vadd.xlane.f32.xlu0 %v1888
    %v2315 = vpop.xlane.xlu0 %2314
    %2316 = vadd.xlane.f32.xlu0 %v1891
    %v2317 = vpop.xlane.xlu0 %2316
    %2318 = vadd.xlane.f32.xlu0 %v1896
    %v2319 = vpop.xlane.xlu0 %2318
    %2320 = vadd.xlane.f32.xlu0 %v1899
    %v2321 = vpop.xlane.xlu0 %2320
    %2322 = vadd.xlane.f32.xlu0 %v1904
    %v2323 = vpop.xlane.xlu0 %2322
    %2324 = vadd.xlane.f32.xlu0 %v1907
    %v2325 = vpop.xlane.xlu0 %2324
    %2326 = vadd.xlane.f32.xlu0 %v1912
    %v2327 = vpop.xlane.xlu0 %2326
    %2328 = vadd.xlane.f32.xlu0 %v1915
    %v2329 = vpop.xlane.xlu0 %2328
    %2330 = vadd.xlane.f32.xlu0 %v1920
    %v2331 = vpop.xlane.xlu0 %2330
    %2332 = vadd.xlane.f32.xlu0 %v1923
    %v2333 = vpop.xlane.xlu0 %2332
    %2334 = vadd.xlane.f32.xlu0 %v1928
    %v2335 = vpop.xlane.xlu0 %2334
    %2336 = vadd.xlane.f32.xlu0 %v1931
    %v2337 = vpop.xlane.xlu0 %2336
    %2338 = vadd.xlane.f32.xlu0 %v1936
    %v2339 = vpop.xlane.xlu0 %2338
    %2340 = vadd.xlane.f32.xlu0 %v1939
    %v2341 = vpop.xlane.xlu0 %2340
    %2342 = vadd.xlane.f32.xlu0 %v1944
    %v2343 = vpop.xlane.xlu0 %2342
    %2344 = vadd.xlane.f32.xlu0 %v1947
    %v2345 = vpop.xlane.xlu0 %2344
    %2346 = vadd.xlane.f32.xlu0 %v1952
    %v2347 = vpop.xlane.xlu0 %2346
    %2348 = vadd.xlane.f32.xlu0 %v1955
    %v2349 = vpop.xlane.xlu0 %2348
    %2350 = vadd.xlane.f32.xlu0 %v1960
    %v2351 = vpop.xlane.xlu0 %2350
    %2352 = vadd.xlane.f32.xlu0 %v1963
    %v2353 = vpop.xlane.xlu0 %2352
    %2354 = vadd.xlane.f32.xlu0 %v1968
    %v2355 = vpop.xlane.xlu0 %2354
    %2356 = vadd.xlane.f32.xlu0 %v1971
    %v2357 = vpop.xlane.xlu0 %2356
    %2358 = vadd.xlane.f32.xlu0 %v1976
    %v2359 = vpop.xlane.xlu0 %2358
    %2360 = vadd.xlane.f32.xlu0 %v1979
    %v2361 = vpop.xlane.xlu0 %2360
    %2362 = vadd.xlane.f32.xlu0 %v1984
    %v2363 = vpop.xlane.xlu0 %2362
    %2364 = vadd.xlane.f32.xlu0 %v1987
    %v2365 = vpop.xlane.xlu0 %2364
    %2366 = vadd.xlane.f32.xlu0 %v1992
    %v2367 = vpop.xlane.xlu0 %2366
    %2368 = vadd.xlane.f32.xlu0 %v1995
    %v2369 = vpop.xlane.xlu0 %2368
    %2370 = vadd.xlane.f32.xlu0 %v2000
    %v2371 = vpop.xlane.xlu0 %2370
    %2372 = vadd.xlane.f32.xlu0 %v2003
    %v2373 = vpop.xlane.xlu0 %2372
    %2374 = vadd.xlane.f32.xlu0 %v2008
    %v2375 = vpop.xlane.xlu0 %2374
    %2376 = vadd.xlane.f32.xlu0 %v2011
    %v2377 = vpop.xlane.xlu0 %2376
    %2378 = vadd.xlane.f32.xlu0 %v2016
    %v2379 = vpop.xlane.xlu0 %2378
    %2380 = vadd.xlane.f32.xlu0 %v2019
    %v2381 = vpop.xlane.xlu0 %2380
    %2382 = vadd.xlane.f32.xlu0 %v2024
    %v2383 = vpop.xlane.xlu0 %2382
    %2384 = vadd.xlane.f32.xlu0 %v2027
    %v2385 = vpop.xlane.xlu0 %2384
    %2386 = vadd.xlane.f32.xlu0 %v2032
    %v2387 = vpop.xlane.xlu0 %2386
    %2388 = vadd.xlane.f32.xlu0 %v2035
    %v2389 = vpop.xlane.xlu0 %2388
    %2390 = vadd.xlane.f32.xlu0 %v2040
    %v2391 = vpop.xlane.xlu0 %2390
    %2392 = vadd.xlane.f32.xlu0 %v2043
    %v2393 = vpop.xlane.xlu0 %2392
    %2394 = vadd.xlane.f32.xlu0 %v2048
    %v2395 = vpop.xlane.xlu0 %2394
    %2396 = vadd.xlane.f32.xlu0 %v2051
    %v2397 = vpop.xlane.xlu0 %2396
    %2398 = vadd.xlane.f32.xlu0 %v2056
    %v2399 = vpop.xlane.xlu0 %2398
    %2400 = vadd.xlane.f32.xlu0 %v2059
    %v2401 = vpop.xlane.xlu0 %2400
    %2402 = vadd.xlane.f32.xlu0 %v2064
    %v2403 = vpop.xlane.xlu0 %2402
    %2404 = vadd.xlane.f32.xlu0 %v2067
    %v2405 = vpop.xlane.xlu0 %2404
    %2406 = vadd.xlane.f32.xlu0 %v2072
    %v2407 = vpop.xlane.xlu0 %2406
    %2408 = vadd.xlane.f32.xlu0 %v2075
    %v2409 = vpop.xlane.xlu0 %2408
    %2410 = vadd.xlane.f32.xlu0 %v2080
    %v2411 = vpop.xlane.xlu0 %2410
    %2412 = vadd.xlane.f32.xlu0 %v2083
    %v2413 = vpop.xlane.xlu0 %2412
    %2414 = vadd.xlane.f32.xlu0 %v2088
    %v2415 = vpop.xlane.xlu0 %2414
    %2416 = vadd.xlane.f32.xlu0 %v2091
    %v2417 = vpop.xlane.xlu0 %2416
    %2418 = vadd.xlane.f32.xlu0 %v2096
    %v2419 = vpop.xlane.xlu0 %2418
    %2420 = vadd.xlane.f32.xlu0 %v2099
    %v2421 = vpop.xlane.xlu0 %2420
    %2422 = vadd.xlane.f32.xlu0 %v2104
    %v2423 = vpop.xlane.xlu0 %2422
    %2424 = vadd.xlane.f32.xlu0 %v2107
    %v2425 = vpop.xlane.xlu0 %2424
    %2426 = vadd.xlane.f32.xlu0 %v2112
    %v2427 = vpop.xlane.xlu0 %2426
    %2428 = vadd.xlane.f32.xlu0 %v2115
    %v2429 = vpop.xlane.xlu0 %2428
    %2430 = vadd.xlane.f32.xlu0 %v2120
    %v2431 = vpop.xlane.xlu0 %2430
    %2432 = vadd.xlane.f32.xlu0 %v2123
    %v2433 = vpop.xlane.xlu0 %2432
    %2434 = vadd.xlane.f32.xlu0 %v2128
    %v2435 = vpop.xlane.xlu0 %2434
    %2436 = vadd.xlane.f32.xlu0 %v2131
    %v2437 = vpop.xlane.xlu0 %2436
    %2438 = vadd.xlane.f32.xlu0 %v2136
    %v2439 = vpop.xlane.xlu0 %2438
    %2440 = vadd.xlane.f32.xlu0 %v2139
    %v2441 = vpop.xlane.xlu0 %2440
    %2442 = vadd.xlane.f32.xlu0 %v2144
    %v2443 = vpop.xlane.xlu0 %2442
    %2444 = vadd.xlane.f32.xlu0 %v2147
    %v2445 = vpop.xlane.xlu0 %2444
    %2446 = vadd.xlane.f32.xlu0 %v2152
    %v2447 = vpop.xlane.xlu0 %2446
    %2448 = vadd.xlane.f32.xlu0 %v2155
    %v2449 = vpop.xlane.xlu0 %2448
    %2450 = vadd.xlane.f32.xlu0 %v2160
    %v2451 = vpop.xlane.xlu0 %2450
    %2452 = vadd.xlane.f32.xlu0 %v2163
    %v2453 = vpop.xlane.xlu0 %2452
    %2454 = vadd.xlane.f32.xlu0 %v2168
    %v2455 = vpop.xlane.xlu0 %2454
    %2456 = vadd.xlane.f32.xlu0 %v2171
    %v2457 = vpop.xlane.xlu0 %2456
    %2458 = vadd.xlane.f32.xlu0 %v2176
    %v2459 = vpop.xlane.xlu0 %2458
    %2460 = vadd.xlane.f32.xlu0 %v2179
    %v2461 = vpop.xlane.xlu0 %2460
    %2462 = vadd.xlane.f32.xlu0 %v2184
    %v2463 = vpop.xlane.xlu0 %2462
    %2464 = vadd.xlane.f32.xlu0 %v2187
    %v2465 = vpop.xlane.xlu0 %2464
    %2466 = vadd.xlane.f32.xlu0 %v2192
    %v2467 = vpop.xlane.xlu0 %2466
    %2468 = vadd.xlane.f32.xlu0 %v2195
    %v2469 = vpop.xlane.xlu0 %2468
    %2470 = vadd.xlane.f32.xlu0 %v2200
    %v2471 = vpop.xlane.xlu0 %2470
    %2472 = vadd.xlane.f32.xlu0 %v2203
    %v2473 = vpop.xlane.xlu0 %2472
    %2474 = vadd.xlane.f32.xlu0 %v2208
    %v2475 = vpop.xlane.xlu0 %2474
    %2476 = vadd.xlane.f32.xlu0 %v2211
    %v2477 = vpop.xlane.xlu0 %2476
    %2478 = vadd.xlane.f32.xlu0 %v2216
    %v2479 = vpop.xlane.xlu0 %2478
    %2480 = vadd.xlane.f32.xlu0 %v2219
    %v2481 = vpop.xlane.xlu0 %2480
    %2482 = vadd.xlane.f32.xlu0 %v2224
    %v2483 = vpop.xlane.xlu0 %2482
    %2484 = vadd.xlane.f32.xlu0 %v2227
    %v2485 = vpop.xlane.xlu0 %2484
    %v2486 = vlaneseq
    %v2487 = vand.u32 %v2486, 127
    %vm2488 = vcmp.lt.s32.totalorder %v2487, 8
    %v2617 = vlaneseq
    %v2618 = vshrl.u32 %v2617, 7
    %v2619 = vsub.s32 %v2487, %v2618
    %v2620 = vrot.slane %v2231, %v2619
    %v2621 = vadd.s32 %v2487, 4294967288
    %v2622 = vlaneseq
    %v2623 = vshrl.u32 %v2622, 7
    %v2624 = vsub.s32 %v2621, %v2623
    %v2625 = vrot.slane %v2233, %v2624
    %vm2626 = vcmask 130112
    %v2627 = vsel %vm2626, %v2625, %v2620
    %v2628 = vadd.s32 %v2487, 4294967280
    %v2629 = vlaneseq
    %v2630 = vshrl.u32 %v2629, 7
    %v2631 = vsub.s32 %v2628, %v2630
    %v2632 = vrot.slane %v2235, %v2631
    %vm2633 = vcmask 195712
    %v2634 = vsel %vm2633, %v2632, %v2627
    %v2635 = vadd.s32 %v2487, 4294967272
    %v2636 = vlaneseq
    %v2637 = vshrl.u32 %v2636, 7
    %v2638 = vsub.s32 %v2635, %v2637
    %v2639 = vrot.slane %v2237, %v2638
    %vm2640 = vcmask 261312
    %v2641 = vsel %vm2640, %v2639, %v2634
    %v2642 = vadd.s32 %v2487, 4294967264
    %v2643 = vlaneseq
    %v2644 = vshrl.u32 %v2643, 7
    %v2645 = vsub.s32 %v2642, %v2644
    %v2646 = vrot.slane %v2239, %v2645
    %vm2647 = vcmask 326912
    %v2648 = vsel %vm2647, %v2646, %v2641
    %v2649 = vadd.s32 %v2487, 4294967256
    %v2650 = vlaneseq
    %v2651 = vshrl.u32 %v2650, 7
    %v2652 = vsub.s32 %v2649, %v2651
    %v2653 = vrot.slane %v2241, %v2652
    %vm2654 = vcmask 392512
    %v2655 = vsel %vm2654, %v2653, %v2648
    %v2656 = vadd.s32 %v2487, 4294967248
    %v2657 = vlaneseq
    %v2658 = vshrl.u32 %v2657, 7
    %v2659 = vsub.s32 %v2656, %v2658
    %v2660 = vrot.slane %v2243, %v2659
    %vm2661 = vcmask 458112
    %v2662 = vsel %vm2661, %v2660, %v2655
    %v2663 = vadd.s32 %v2487, 4294967240
    %v2664 = vlaneseq
    %v2665 = vshrl.u32 %v2664, 7
    %v2666 = vsub.s32 %v2663, %v2665
    %v2667 = vrot.slane %v2245, %v2666
    %vm2668 = vcmask 523712
    %v2669 = vsel %vm2668, %v2667, %v2662
    %v2670 = vadd.s32 %v2487, 4294967232
    %v2671 = vlaneseq
    %v2672 = vshrl.u32 %v2671, 7
    %v2673 = vsub.s32 %v2670, %v2672
    %v2674 = vrot.slane %v2247, %v2673
    %vm2675 = vcmask 589312
    %v2676 = vsel %vm2675, %v2674, %v2669
    %v2677 = vadd.s32 %v2487, 4294967224
    %v2678 = vlaneseq
    %v2679 = vshrl.u32 %v2678, 7
    %v2680 = vsub.s32 %v2677, %v2679
    %v2681 = vrot.slane %v2249, %v2680
    %vm2682 = vcmask 654912
    %v2683 = vsel %vm2682, %v2681, %v2676
    %v2684 = vadd.s32 %v2487, 4294967216
    %v2685 = vlaneseq
    %v2686 = vshrl.u32 %v2685, 7
    %v2687 = vsub.s32 %v2684, %v2686
    %v2688 = vrot.slane %v2251, %v2687
    %vm2689 = vcmask 720512
    %v2690 = vsel %vm2689, %v2688, %v2683
    %v2691 = vadd.s32 %v2487, 4294967208
    %v2692 = vlaneseq
    %v2693 = vshrl.u32 %v2692, 7
    %v2694 = vsub.s32 %v2691, %v2693
    %v2695 = vrot.slane %v2253, %v2694
    %vm2696 = vcmask 786112
    %v2697 = vsel %vm2696, %v2695, %v2690
    %v2698 = vadd.s32 %v2487, 4294967200
    %v2699 = vlaneseq
    %v2700 = vshrl.u32 %v2699, 7
    %v2701 = vsub.s32 %v2698, %v2700
    %v2702 = vrot.slane %v2255, %v2701
    %vm2703 = vcmask 851712
    %v2704 = vsel %vm2703, %v2702, %v2697
    %v2705 = vadd.s32 %v2487, 4294967192
    %v2706 = vlaneseq
    %v2707 = vshrl.u32 %v2706, 7
    %v2708 = vsub.s32 %v2705, %v2707
    %v2709 = vrot.slane %v2257, %v2708
    %vm2710 = vcmask 917312
    %v2711 = vsel %vm2710, %v2709, %v2704
    %v2712 = vadd.s32 %v2487, 4294967184
    %v2713 = vlaneseq
    %v2714 = vshrl.u32 %v2713, 7
    %v2715 = vsub.s32 %v2712, %v2714
    %v2716 = vrot.slane %v2259, %v2715
    %vm2717 = vcmask 982912
    %v2718 = vsel %vm2717, %v2716, %v2711
    %v2719 = vadd.s32 %v2487, 4294967176
    %v2720 = vlaneseq
    %v2721 = vshrl.u32 %v2720, 7
    %v2722 = vsub.s32 %v2719, %v2721
    %v2723 = vrot.slane %v2261, %v2722
    %vm2724 = vcmask 1048512
    %v2725 = vsel %vm2724, %v2723, %v2718
    %v2726 = vlaneseq
    %v2727 = vshrl.u32 %v2726, 7
    %v2728 = vsub.s32 %v2487, %v2727
    %v2729 = vrot.slane %v2263, %v2728
    %v2730 = vlaneseq
    %v2731 = vshrl.u32 %v2730, 7
    %v2732 = vsub.s32 %v2621, %v2731
    %v2733 = vrot.slane %v2265, %v2732
    %v2734 = vsel %vm2626, %v2733, %v2729
    %v2735 = vlaneseq
    %v2736 = vshrl.u32 %v2735, 7
    %v2737 = vsub.s32 %v2628, %v2736
    %v2738 = vrot.slane %v2267, %v2737
    %v2739 = vsel %vm2633, %v2738, %v2734
    %v2740 = vlaneseq
    %v2741 = vshrl.u32 %v2740, 7
    %v2742 = vsub.s32 %v2635, %v2741
    %v2743 = vrot.slane %v2269, %v2742
    %v2744 = vsel %vm2640, %v2743, %v2739
    %v2745 = vlaneseq
    %v2746 = vshrl.u32 %v2745, 7
    %v2747 = vsub.s32 %v2642, %v2746
    %v2748 = vrot.slane %v2271, %v2747
    %v2749 = vsel %vm2647, %v2748, %v2744
    %v2750 = vlaneseq
    %v2751 = vshrl.u32 %v2750, 7
    %v2752 = vsub.s32 %v2649, %v2751
    %v2753 = vrot.slane %v2273, %v2752
    %v2754 = vsel %vm2654, %v2753, %v2749
    %v2755 = vlaneseq
    %v2756 = vshrl.u32 %v2755, 7
    %v2757 = vsub.s32 %v2656, %v2756
    %v2758 = vrot.slane %v2275, %v2757
    %v2759 = vsel %vm2661, %v2758, %v2754
    %v2760 = vlaneseq
    %v2761 = vshrl.u32 %v2760, 7
    %v2762 = vsub.s32 %v2663, %v2761
    %v2763 = vrot.slane %v2277, %v2762
    %v2764 = vsel %vm2668, %v2763, %v2759
    %v2765 = vlaneseq
    %v2766 = vshrl.u32 %v2765, 7
    %v2767 = vsub.s32 %v2670, %v2766
    %v2768 = vrot.slane %v2279, %v2767
    %v2769 = vsel %vm2675, %v2768, %v2764
    %v2770 = vlaneseq
    %v2771 = vshrl.u32 %v2770, 7
    %v2772 = vsub.s32 %v2677, %v2771
    %v2773 = vrot.slane %v2281, %v2772
    %v2774 = vsel %vm2682, %v2773, %v2769
    %v2775 = vlaneseq
    %v2776 = vshrl.u32 %v2775, 7
    %v2777 = vsub.s32 %v2684, %v2776
    %v2778 = vrot.slane %v2283, %v2777
    %v2779 = vsel %vm2689, %v2778, %v2774
    %v2780 = vlaneseq
    %v2781 = vshrl.u32 %v2780, 7
    %v2782 = vsub.s32 %v2691, %v2781
    %v2783 = vrot.slane %v2285, %v2782
    %v2784 = vsel %vm2696, %v2783, %v2779
    %v2785 = vlaneseq
    %v2786 = vshrl.u32 %v2785, 7
    %v2787 = vsub.s32 %v2698, %v2786
    %v2788 = vrot.slane %v2287, %v2787
    %v2789 = vsel %vm2703, %v2788, %v2784
    %v2790 = vlaneseq
    %v2791 = vshrl.u32 %v2790, 7
    %v2792 = vsub.s32 %v2705, %v2791
    %v2793 = vrot.slane %v2289, %v2792
    %v2794 = vsel %vm2710, %v2793, %v2789
    %v2795 = vlaneseq
    %v2796 = vshrl.u32 %v2795, 7
    %v2797 = vsub.s32 %v2712, %v2796
    %v2798 = vrot.slane %v2291, %v2797
    %v2799 = vsel %vm2717, %v2798, %v2794
    %v2800 = vlaneseq
    %v2801 = vshrl.u32 %v2800, 7
    %v2802 = vsub.s32 %v2719, %v2801
    %v2803 = vrot.slane %v2293, %v2802
    %v2804 = vsel %vm2724, %v2803, %v2799
    %v2805 = vlaneseq
    %v2806 = vshrl.u32 %v2805, 7
    %v2807 = vsub.s32 %v2487, %v2806
    %v2808 = vrot.slane %v2295, %v2807
    %v2809 = vlaneseq
    %v2810 = vshrl.u32 %v2809, 7
    %v2811 = vsub.s32 %v2621, %v2810
    %v2812 = vrot.slane %v2297, %v2811
    %v2813 = vsel %vm2626, %v2812, %v2808
    %v2814 = vlaneseq
    %v2815 = vshrl.u32 %v2814, 7
    %v2816 = vsub.s32 %v2628, %v2815
    %v2817 = vrot.slane %v2299, %v2816
    %v2818 = vsel %vm2633, %v2817, %v2813
    %v2819 = vlaneseq
    %v2820 = vshrl.u32 %v2819, 7
    %v2821 = vsub.s32 %v2635, %v2820
    %v2822 = vrot.slane %v2301, %v2821
    %v2823 = vsel %vm2640, %v2822, %v2818
    %v2824 = vlaneseq
    %v2825 = vshrl.u32 %v2824, 7
    %v2826 = vsub.s32 %v2642, %v2825
    %v2827 = vrot.slane %v2303, %v2826
    %v2828 = vsel %vm2647, %v2827, %v2823
    %v2829 = vlaneseq
    %v2830 = vshrl.u32 %v2829, 7
    %v2831 = vsub.s32 %v2649, %v2830
    %v2832 = vrot.slane %v2305, %v2831
    %v2833 = vsel %vm2654, %v2832, %v2828
    %v2834 = vlaneseq
    %v2835 = vshrl.u32 %v2834, 7
    %v2836 = vsub.s32 %v2656, %v2835
    %v2837 = vrot.slane %v2307, %v2836
    %v2838 = vsel %vm2661, %v2837, %v2833
    %v2839 = vlaneseq
    %v2840 = vshrl.u32 %v2839, 7
    %v2841 = vsub.s32 %v2663, %v2840
    %v2842 = vrot.slane %v2309, %v2841
    %v2843 = vsel %vm2668, %v2842, %v2838
    %v2844 = vlaneseq
    %v2845 = vshrl.u32 %v2844, 7
    %v2846 = vsub.s32 %v2670, %v2845
    %v2847 = vrot.slane %v2311, %v2846
    %v2848 = vsel %vm2675, %v2847, %v2843
    %v2849 = vlaneseq
    %v2850 = vshrl.u32 %v2849, 7
    %v2851 = vsub.s32 %v2677, %v2850
    %v2852 = vrot.slane %v2313, %v2851
    %v2853 = vsel %vm2682, %v2852, %v2848
    %v2854 = vlaneseq
    %v2855 = vshrl.u32 %v2854, 7
    %v2856 = vsub.s32 %v2684, %v2855
    %v2857 = vrot.slane %v2315, %v2856
    %v2858 = vsel %vm2689, %v2857, %v2853
    %v2859 = vlaneseq
    %v2860 = vshrl.u32 %v2859, 7
    %v2861 = vsub.s32 %v2691, %v2860
    %v2862 = vrot.slane %v2317, %v2861
    %v2863 = vsel %vm2696, %v2862, %v2858
    %v2864 = vlaneseq
    %v2865 = vshrl.u32 %v2864, 7
    %v2866 = vsub.s32 %v2698, %v2865
    %v2867 = vrot.slane %v2319, %v2866
    %v2868 = vsel %vm2703, %v2867, %v2863
    %v2869 = vlaneseq
    %v2870 = vshrl.u32 %v2869, 7
    %v2871 = vsub.s32 %v2705, %v2870
    %v2872 = vrot.slane %v2321, %v2871
    %v2873 = vsel %vm2710, %v2872, %v2868
    %v2874 = vlaneseq
    %v2875 = vshrl.u32 %v2874, 7
    %v2876 = vsub.s32 %v2712, %v2875
    %v2877 = vrot.slane %v2323, %v2876
    %v2878 = vsel %vm2717, %v2877, %v2873
    %v2879 = vlaneseq
    %v2880 = vshrl.u32 %v2879, 7
    %v2881 = vsub.s32 %v2719, %v2880
    %v2882 = vrot.slane %v2325, %v2881
    %v2883 = vsel %vm2724, %v2882, %v2878
    %v2884 = vlaneseq
    %v2885 = vshrl.u32 %v2884, 7
    %v2886 = vsub.s32 %v2487, %v2885
    %v2887 = vrot.slane %v2327, %v2886
    %v2888 = vlaneseq
    %v2889 = vshrl.u32 %v2888, 7
    %v2890 = vsub.s32 %v2621, %v2889
    %v2891 = vrot.slane %v2329, %v2890
    %v2892 = vsel %vm2626, %v2891, %v2887
    %v2893 = vlaneseq
    %v2894 = vshrl.u32 %v2893, 7
    %v2895 = vsub.s32 %v2628, %v2894
    %v2896 = vrot.slane %v2331, %v2895
    %v2897 = vsel %vm2633, %v2896, %v2892
    %v2898 = vlaneseq
    %v2899 = vshrl.u32 %v2898, 7
    %v2900 = vsub.s32 %v2635, %v2899
    %v2901 = vrot.slane %v2333, %v2900
    %v2902 = vsel %vm2640, %v2901, %v2897
    %v2903 = vlaneseq
    %v2904 = vshrl.u32 %v2903, 7
    %v2905 = vsub.s32 %v2642, %v2904
    %v2906 = vrot.slane %v2335, %v2905
    %v2907 = vsel %vm2647, %v2906, %v2902
    %v2908 = vlaneseq
    %v2909 = vshrl.u32 %v2908, 7
    %v2910 = vsub.s32 %v2649, %v2909
    %v2911 = vrot.slane %v2337, %v2910
    %v2912 = vsel %vm2654, %v2911, %v2907
    %v2913 = vlaneseq
    %v2914 = vshrl.u32 %v2913, 7
    %v2915 = vsub.s32 %v2656, %v2914
    %v2916 = vrot.slane %v2339, %v2915
    %v2917 = vsel %vm2661, %v2916, %v2912
    %v2918 = vlaneseq
    %v2919 = vshrl.u32 %v2918, 7
    %v2920 = vsub.s32 %v2663, %v2919
    %v2921 = vrot.slane %v2341, %v2920
    %v2922 = vsel %vm2668, %v2921, %v2917
    %v2923 = vlaneseq
    %v2924 = vshrl.u32 %v2923, 7
    %v2925 = vsub.s32 %v2670, %v2924
    %v2926 = vrot.slane %v2343, %v2925
    %v2927 = vsel %vm2675, %v2926, %v2922
    %v2928 = vlaneseq
    %v2929 = vshrl.u32 %v2928, 7
    %v2930 = vsub.s32 %v2677, %v2929
    %v2931 = vrot.slane %v2345, %v2930
    %v2932 = vsel %vm2682, %v2931, %v2927
    %v2933 = vlaneseq
    %v2934 = vshrl.u32 %v2933, 7
    %v2935 = vsub.s32 %v2684, %v2934
    %v2936 = vrot.slane %v2347, %v2935
    %v2937 = vsel %vm2689, %v2936, %v2932
    %v2938 = vlaneseq
    %v2939 = vshrl.u32 %v2938, 7
    %v2940 = vsub.s32 %v2691, %v2939
    %v2941 = vrot.slane %v2349, %v2940
    %v2942 = vsel %vm2696, %v2941, %v2937
    %v2943 = vlaneseq
    %v2944 = vshrl.u32 %v2943, 7
    %v2945 = vsub.s32 %v2698, %v2944
    %v2946 = vrot.slane %v2351, %v2945
    %v2947 = vsel %vm2703, %v2946, %v2942
    %v2948 = vlaneseq
    %v2949 = vshrl.u32 %v2948, 7
    %v2950 = vsub.s32 %v2705, %v2949
    %v2951 = vrot.slane %v2353, %v2950
    %v2952 = vsel %vm2710, %v2951, %v2947
    %v2953 = vlaneseq
    %v2954 = vshrl.u32 %v2953, 7
    %v2955 = vsub.s32 %v2712, %v2954
    %v2956 = vrot.slane %v2355, %v2955
    %v2957 = vsel %vm2717, %v2956, %v2952
    %v2958 = vlaneseq
    %v2959 = vshrl.u32 %v2958, 7
    %v2960 = vsub.s32 %v2719, %v2959
    %v2961 = vrot.slane %v2357, %v2960
    %v2962 = vsel %vm2724, %v2961, %v2957
    %v2963 = vlaneseq
    %v2964 = vshrl.u32 %v2963, 7
    %v2965 = vsub.s32 %v2487, %v2964
    %v2966 = vrot.slane %v2359, %v2965
    %v2967 = vlaneseq
    %v2968 = vshrl.u32 %v2967, 7
    %v2969 = vsub.s32 %v2621, %v2968
    %v2970 = vrot.slane %v2361, %v2969
    %v2971 = vsel %vm2626, %v2970, %v2966
    %v2972 = vlaneseq
    %v2973 = vshrl.u32 %v2972, 7
    %v2974 = vsub.s32 %v2628, %v2973
    %v2975 = vrot.slane %v2363, %v2974
    %v2976 = vsel %vm2633, %v2975, %v2971
    %v2977 = vlaneseq
    %v2978 = vshrl.u32 %v2977, 7
    %v2979 = vsub.s32 %v2635, %v2978
    %v2980 = vrot.slane %v2365, %v2979
    %v2981 = vsel %vm2640, %v2980, %v2976
    %v2982 = vlaneseq
    %v2983 = vshrl.u32 %v2982, 7
    %v2984 = vsub.s32 %v2642, %v2983
    %v2985 = vrot.slane %v2367, %v2984
    %v2986 = vsel %vm2647, %v2985, %v2981
    %v2987 = vlaneseq
    %v2988 = vshrl.u32 %v2987, 7
    %v2989 = vsub.s32 %v2649, %v2988
    %v2990 = vrot.slane %v2369, %v2989
    %v2991 = vsel %vm2654, %v2990, %v2986
    %v2992 = vlaneseq
    %v2993 = vshrl.u32 %v2992, 7
    %v2994 = vsub.s32 %v2656, %v2993
    %v2995 = vrot.slane %v2371, %v2994
    %v2996 = vsel %vm2661, %v2995, %v2991
    %v2997 = vlaneseq
    %v2998 = vshrl.u32 %v2997, 7
    %v2999 = vsub.s32 %v2663, %v2998
    %v3000 = vrot.slane %v2373, %v2999
    %v3001 = vsel %vm2668, %v3000, %v2996
    %v3002 = vlaneseq
    %v3003 = vshrl.u32 %v3002, 7
    %v3004 = vsub.s32 %v2670, %v3003
    %v3005 = vrot.slane %v2375, %v3004
    %v3006 = vsel %vm2675, %v3005, %v3001
    %v3007 = vlaneseq
    %v3008 = vshrl.u32 %v3007, 7
    %v3009 = vsub.s32 %v2677, %v3008
    %v3010 = vrot.slane %v2377, %v3009
    %v3011 = vsel %vm2682, %v3010, %v3006
    %v3012 = vlaneseq
    %v3013 = vshrl.u32 %v3012, 7
    %v3014 = vsub.s32 %v2684, %v3013
    %v3015 = vrot.slane %v2379, %v3014
    %v3016 = vsel %vm2689, %v3015, %v3011
    %v3017 = vlaneseq
    %v3018 = vshrl.u32 %v3017, 7
    %v3019 = vsub.s32 %v2691, %v3018
    %v3020 = vrot.slane %v2381, %v3019
    %v3021 = vsel %vm2696, %v3020, %v3016
    %v3022 = vlaneseq
    %v3023 = vshrl.u32 %v3022, 7
    %v3024 = vsub.s32 %v2698, %v3023
    %v3025 = vrot.slane %v2383, %v3024
    %v3026 = vsel %vm2703, %v3025, %v3021
    %v3027 = vlaneseq
    %v3028 = vshrl.u32 %v3027, 7
    %v3029 = vsub.s32 %v2705, %v3028
    %v3030 = vrot.slane %v2385, %v3029
    %v3031 = vsel %vm2710, %v3030, %v3026
    %v3032 = vlaneseq
    %v3033 = vshrl.u32 %v3032, 7
    %v3034 = vsub.s32 %v2712, %v3033
    %v3035 = vrot.slane %v2387, %v3034
    %v3036 = vsel %vm2717, %v3035, %v3031
    %v3037 = vlaneseq
    %v3038 = vshrl.u32 %v3037, 7
    %v3039 = vsub.s32 %v2719, %v3038
    %v3040 = vrot.slane %v2389, %v3039
    %v3041 = vsel %vm2724, %v3040, %v3036
    %v3042 = vlaneseq
    %v3043 = vshrl.u32 %v3042, 7
    %v3044 = vsub.s32 %v2487, %v3043
    %v3045 = vrot.slane %v2391, %v3044
    %v3046 = vlaneseq
    %v3047 = vshrl.u32 %v3046, 7
    %v3048 = vsub.s32 %v2621, %v3047
    %v3049 = vrot.slane %v2393, %v3048
    %v3050 = vsel %vm2626, %v3049, %v3045
    %v3051 = vlaneseq
    %v3052 = vshrl.u32 %v3051, 7
    %v3053 = vsub.s32 %v2628, %v3052
    %v3054 = vrot.slane %v2395, %v3053
    %v3055 = vsel %vm2633, %v3054, %v3050
    %v3056 = vlaneseq
    %v3057 = vshrl.u32 %v3056, 7
    %v3058 = vsub.s32 %v2635, %v3057
    %v3059 = vrot.slane %v2397, %v3058
    %v3060 = vsel %vm2640, %v3059, %v3055
    %v3061 = vlaneseq
    %v3062 = vshrl.u32 %v3061, 7
    %v3063 = vsub.s32 %v2642, %v3062
    %v3064 = vrot.slane %v2399, %v3063
    %v3065 = vsel %vm2647, %v3064, %v3060
    %v3066 = vlaneseq
    %v3067 = vshrl.u32 %v3066, 7
    %v3068 = vsub.s32 %v2649, %v3067
    %v3069 = vrot.slane %v2401, %v3068
    %v3070 = vsel %vm2654, %v3069, %v3065
    %v3071 = vlaneseq
    %v3072 = vshrl.u32 %v3071, 7
    %v3073 = vsub.s32 %v2656, %v3072
    %v3074 = vrot.slane %v2403, %v3073
    %v3075 = vsel %vm2661, %v3074, %v3070
    %v3076 = vlaneseq
    %v3077 = vshrl.u32 %v3076, 7
    %v3078 = vsub.s32 %v2663, %v3077
    %v3079 = vrot.slane %v2405, %v3078
    %v3080 = vsel %vm2668, %v3079, %v3075
    %v3081 = vlaneseq
    %v3082 = vshrl.u32 %v3081, 7
    %v3083 = vsub.s32 %v2670, %v3082
    %v3084 = vrot.slane %v2407, %v3083
    %v3085 = vsel %vm2675, %v3084, %v3080
    %v3086 = vlaneseq
    %v3087 = vshrl.u32 %v3086, 7
    %v3088 = vsub.s32 %v2677, %v3087
    %v3089 = vrot.slane %v2409, %v3088
    %v3090 = vsel %vm2682, %v3089, %v3085
    %v3091 = vlaneseq
    %v3092 = vshrl.u32 %v3091, 7
    %v3093 = vsub.s32 %v2684, %v3092
    %v3094 = vrot.slane %v2411, %v3093
    %v3095 = vsel %vm2689, %v3094, %v3090
    %v3096 = vlaneseq
    %v3097 = vshrl.u32 %v3096, 7
    %v3098 = vsub.s32 %v2691, %v3097
    %v3099 = vrot.slane %v2413, %v3098
    %v3100 = vsel %vm2696, %v3099, %v3095
    %v3101 = vlaneseq
    %v3102 = vshrl.u32 %v3101, 7
    %v3103 = vsub.s32 %v2698, %v3102
    %v3104 = vrot.slane %v2415, %v3103
    %v3105 = vsel %vm2703, %v3104, %v3100
    %v3106 = vlaneseq
    %v3107 = vshrl.u32 %v3106, 7
    %v3108 = vsub.s32 %v2705, %v3107
    %v3109 = vrot.slane %v2417, %v3108
    %v3110 = vsel %vm2710, %v3109, %v3105
    %v3111 = vlaneseq
    %v3112 = vshrl.u32 %v3111, 7
    %v3113 = vsub.s32 %v2712, %v3112
    %v3114 = vrot.slane %v2419, %v3113
    %v3115 = vsel %vm2717, %v3114, %v3110
    %v3116 = vlaneseq
    %v3117 = vshrl.u32 %v3116, 7
    %v3118 = vsub.s32 %v2719, %v3117
    %v3119 = vrot.slane %v2421, %v3118
    %v3120 = vsel %vm2724, %v3119, %v3115
    %v3121 = vlaneseq
    %v3122 = vshrl.u32 %v3121, 7
    %v3123 = vsub.s32 %v2487, %v3122
    %v3124 = vrot.slane %v2423, %v3123
    %v3125 = vlaneseq
    %v3126 = vshrl.u32 %v3125, 7
    %v3127 = vsub.s32 %v2621, %v3126
    %v3128 = vrot.slane %v2425, %v3127
    %v3129 = vsel %vm2626, %v3128, %v3124
    %v3130 = vlaneseq
    %v3131 = vshrl.u32 %v3130, 7
    %v3132 = vsub.s32 %v2628, %v3131
    %v3133 = vrot.slane %v2427, %v3132
    %v3134 = vsel %vm2633, %v3133, %v3129
    %v3135 = vlaneseq
    %v3136 = vshrl.u32 %v3135, 7
    %v3137 = vsub.s32 %v2635, %v3136
    %v3138 = vrot.slane %v2429, %v3137
    %v3139 = vsel %vm2640, %v3138, %v3134
    %v3140 = vlaneseq
    %v3141 = vshrl.u32 %v3140, 7
    %v3142 = vsub.s32 %v2642, %v3141
    %v3143 = vrot.slane %v2431, %v3142
    %v3144 = vsel %vm2647, %v3143, %v3139
    %v3145 = vlaneseq
    %v3146 = vshrl.u32 %v3145, 7
    %v3147 = vsub.s32 %v2649, %v3146
    %v3148 = vrot.slane %v2433, %v3147
    %v3149 = vsel %vm2654, %v3148, %v3144
    %v3150 = vlaneseq
    %v3151 = vshrl.u32 %v3150, 7
    %v3152 = vsub.s32 %v2656, %v3151
    %v3153 = vrot.slane %v2435, %v3152
    %v3154 = vsel %vm2661, %v3153, %v3149
    %v3155 = vlaneseq
    %v3156 = vshrl.u32 %v3155, 7
    %v3157 = vsub.s32 %v2663, %v3156
    %v3158 = vrot.slane %v2437, %v3157
    %v3159 = vsel %vm2668, %v3158, %v3154
    %v3160 = vlaneseq
    %v3161 = vshrl.u32 %v3160, 7
    %v3162 = vsub.s32 %v2670, %v3161
    %v3163 = vrot.slane %v2439, %v3162
    %v3164 = vsel %vm2675, %v3163, %v3159
    %v3165 = vlaneseq
    %v3166 = vshrl.u32 %v3165, 7
    %v3167 = vsub.s32 %v2677, %v3166
    %v3168 = vrot.slane %v2441, %v3167
    %v3169 = vsel %vm2682, %v3168, %v3164
    %v3170 = vlaneseq
    %v3171 = vshrl.u32 %v3170, 7
    %v3172 = vsub.s32 %v2684, %v3171
    %v3173 = vrot.slane %v2443, %v3172
    %v3174 = vsel %vm2689, %v3173, %v3169
    %v3175 = vlaneseq
    %v3176 = vshrl.u32 %v3175, 7
    %v3177 = vsub.s32 %v2691, %v3176
    %v3178 = vrot.slane %v2445, %v3177
    %v3179 = vsel %vm2696, %v3178, %v3174
    %v3180 = vlaneseq
    %v3181 = vshrl.u32 %v3180, 7
    %v3182 = vsub.s32 %v2698, %v3181
    %v3183 = vrot.slane %v2447, %v3182
    %v3184 = vsel %vm2703, %v3183, %v3179
    %v3185 = vlaneseq
    %v3186 = vshrl.u32 %v3185, 7
    %v3187 = vsub.s32 %v2705, %v3186
    %v3188 = vrot.slane %v2449, %v3187
    %v3189 = vsel %vm2710, %v3188, %v3184
    %v3190 = vlaneseq
    %v3191 = vshrl.u32 %v3190, 7
    %v3192 = vsub.s32 %v2712, %v3191
    %v3193 = vrot.slane %v2451, %v3192
    %v3194 = vsel %vm2717, %v3193, %v3189
    %v3195 = vlaneseq
    %v3196 = vshrl.u32 %v3195, 7
    %v3197 = vsub.s32 %v2719, %v3196
    %v3198 = vrot.slane %v2453, %v3197
    %v3199 = vsel %vm2724, %v3198, %v3194
    %v3200 = vlaneseq
    %v3201 = vshrl.u32 %v3200, 7
    %v3202 = vsub.s32 %v2487, %v3201
    %v3203 = vrot.slane %v2455, %v3202
    %v3204 = vlaneseq
    %v3205 = vshrl.u32 %v3204, 7
    %v3206 = vsub.s32 %v2621, %v3205
    %v3207 = vrot.slane %v2457, %v3206
    %v3208 = vsel %vm2626, %v3207, %v3203
    %v3209 = vlaneseq
    %v3210 = vshrl.u32 %v3209, 7
    %v3211 = vsub.s32 %v2628, %v3210
    %v3212 = vrot.slane %v2459, %v3211
    %v3213 = vsel %vm2633, %v3212, %v3208
    %v3214 = vlaneseq
    %v3215 = vshrl.u32 %v3214, 7
    %v3216 = vsub.s32 %v2635, %v3215
    %v3217 = vrot.slane %v2461, %v3216
    %v3218 = vsel %vm2640, %v3217, %v3213
    %v3219 = vlaneseq
    %v3220 = vshrl.u32 %v3219, 7
    %v3221 = vsub.s32 %v2642, %v3220
    %v3222 = vrot.slane %v2463, %v3221
    %v3223 = vsel %vm2647, %v3222, %v3218
    %v3224 = vlaneseq
    %v3225 = vshrl.u32 %v3224, 7
    %v3226 = vsub.s32 %v2649, %v3225
    %v3227 = vrot.slane %v2465, %v3226
    %v3228 = vsel %vm2654, %v3227, %v3223
    %v3229 = vlaneseq
    %v3230 = vshrl.u32 %v3229, 7
    %v3231 = vsub.s32 %v2656, %v3230
    %v3232 = vrot.slane %v2467, %v3231
    %v3233 = vsel %vm2661, %v3232, %v3228
    %v3234 = vlaneseq
    %v3235 = vshrl.u32 %v3234, 7
    %v3236 = vsub.s32 %v2663, %v3235
    %v3237 = vrot.slane %v2469, %v3236
    %v3238 = vsel %vm2668, %v3237, %v3233
    %v3239 = vlaneseq
    %v3240 = vshrl.u32 %v3239, 7
    %v3241 = vsub.s32 %v2670, %v3240
    %v3242 = vrot.slane %v2471, %v3241
    %v3243 = vsel %vm2675, %v3242, %v3238
    %v3244 = vlaneseq
    %v3245 = vshrl.u32 %v3244, 7
    %v3246 = vsub.s32 %v2677, %v3245
    %v3247 = vrot.slane %v2473, %v3246
    %v3248 = vsel %vm2682, %v3247, %v3243
    %v3249 = vlaneseq
    %v3250 = vshrl.u32 %v3249, 7
    %v3251 = vsub.s32 %v2684, %v3250
    %v3252 = vrot.slane %v2475, %v3251
    %v3253 = vsel %vm2689, %v3252, %v3248
    %v3254 = vlaneseq
    %v3255 = vshrl.u32 %v3254, 7
    %v3256 = vsub.s32 %v2691, %v3255
    %v3257 = vrot.slane %v2477, %v3256
    %v3258 = vsel %vm2696, %v3257, %v3253
    %v3259 = vlaneseq
    %v3260 = vshrl.u32 %v3259, 7
    %v3261 = vsub.s32 %v2698, %v3260
    %v3262 = vrot.slane %v2479, %v3261
    %v3263 = vsel %vm2703, %v3262, %v3258
    %v3264 = vlaneseq
    %v3265 = vshrl.u32 %v3264, 7
    %v3266 = vsub.s32 %v2705, %v3265
    %v3267 = vrot.slane %v2481, %v3266
    %v3268 = vsel %vm2710, %v3267, %v3263
    %v3269 = vlaneseq
    %v3270 = vshrl.u32 %v3269, 7
    %v3271 = vsub.s32 %v2712, %v3270
    %v3272 = vrot.slane %v2483, %v3271
    %v3273 = vsel %vm2717, %v3272, %v3268
    %v3274 = vlaneseq
    %v3275 = vshrl.u32 %v3274, 7
    %v3276 = vsub.s32 %v2719, %v3275
    %v3277 = vrot.slane %v2485, %v3276
    %v3278 = vsel %vm2724, %v3277, %v3273
    %vm3279 = vcmask 1041409
    %v3280 = vsel %vm3279, %v2804, %v2725
    %vm3281 = vcmask 1042434
    %v3282 = vsel %vm3281, %v2883, %v3280
    %vm3283 = vcmask 1043459
    %v3284 = vsel %vm3283, %v2962, %v3282
    %vm3285 = vcmask 1044484
    %v3286 = vsel %vm3285, %v3041, %v3284
    %vm3287 = vcmask 1045509
    %v3288 = vsel %vm3287, %v3120, %v3286
    %vm3289 = vcmask 1046534
    %v3290 = vsel %vm3289, %v3199, %v3288
    %vm3291 = vcmask 1047559
    %v3292 = vsel %vm3291, %v3278, %v3290
    %v3294 = vsel %vm2488, %v3292, -1e+30
    %3295 = vmax.xlane.f32.xlu0 %v3294
    %v3296 = vpop.xlane.xlu0 %3295
    %v3297 = vsub.f32 %v3294, %v3296
    %v3298 = vmul.f32 %v3297, 1.442695
    %v3299 = vpow.pop %v3298
    %3300 = vadd.xlane.f32.xlu0 %v3299
    %v3301 = vpop.xlane.xlu0 %3300
    %v3302 = vrcp.pop %v3301
    %v3303 = vmul.f32 %v3299, %v3302
    %v3304 = vld [vmem:[#allocation7] sm:$0xff]
    %v3305 = vmul.f32 %v3303, %v3304
    %3306 = vadd.xlane.f32.xlu0 %v3305
    %v3307 = vpop.xlane.xlu0 %3306
    %v3308 = vadd.f32 %v3307, 1e-20
    %v3309 = vrcp.pop %v3308
    %v3310 = vmul.f32 %v3305, %v3309
    %v3311 = vunpack.c.l.bf16 %v89
    %v3312 = vunpack.c.l.bf16 %v90
    %v3313 = vunpack.c.l.bf16 %v91
    %v3314 = vunpack.c.l.bf16 %v92
    %v3315 = vunpack.c.l.bf16 %v93
    %v3316 = vunpack.c.l.bf16 %v94
    %v3317 = vunpack.c.l.bf16 %v95
    %v3318 = vunpack.c.l.bf16 %v96
    %v3319 = vunpack.c.l.bf16 %v97
    %v3320 = vunpack.c.l.bf16 %v98
    %v3321 = vunpack.c.l.bf16 %v99
    %v3322 = vunpack.c.l.bf16 %v100
    %v3323 = vunpack.c.l.bf16 %v101
    %v3324 = vunpack.c.l.bf16 %v102
    %v3325 = vunpack.c.l.bf16 %v103
    %v3326 = vunpack.c.l.bf16 %v104
    %v3327 = vunpack.c.l.bf16 %v105
    %v3328 = vunpack.c.l.bf16 %v106
    %v3329 = vunpack.c.l.bf16 %v107
    %v3330 = vunpack.c.l.bf16 %v108
    %v3331 = vunpack.c.l.bf16 %v109
    %v3332 = vunpack.c.l.bf16 %v110
    %v3333 = vunpack.c.l.bf16 %v111
    %v3334 = vunpack.c.l.bf16 %v112
    %v3335 = vunpack.c.l.bf16 %v113
    %v3336 = vunpack.c.l.bf16 %v114
    %v3337 = vunpack.c.l.bf16 %v115
    %v3338 = vunpack.c.l.bf16 %v116
    %v3339 = vunpack.c.l.bf16 %v117
    %v3340 = vunpack.c.l.bf16 %v118
    %v3341 = vunpack.c.l.bf16 %v119
    %v3342 = vunpack.c.l.bf16 %v120
    %v3343 = vunpack.c.l.bf16 %v121
    %v3344 = vunpack.c.l.bf16 %v122
    %v3345 = vunpack.c.l.bf16 %v123
    %v3346 = vunpack.c.l.bf16 %v124
    %v3347 = vunpack.c.l.bf16 %v125
    %v3348 = vunpack.c.l.bf16 %v126
    %v3349 = vunpack.c.l.bf16 %v127
    %v3350 = vunpack.c.l.bf16 %v128
    %v3351 = vunpack.c.l.bf16 %v129
    %v3352 = vunpack.c.l.bf16 %v130
    %v3353 = vunpack.c.l.bf16 %v131
    %v3354 = vunpack.c.l.bf16 %v132
    %v3355 = vunpack.c.l.bf16 %v133
    %v3356 = vunpack.c.l.bf16 %v134
    %v3357 = vunpack.c.l.bf16 %v135
    %v3358 = vunpack.c.l.bf16 %v136
    %v3359 = vunpack.c.l.bf16 %v137
    %v3360 = vunpack.c.l.bf16 %v138
    %v3361 = vunpack.c.l.bf16 %v139
    %v3362 = vunpack.c.l.bf16 %v140
    %v3363 = vunpack.c.l.bf16 %v141
    %v3364 = vunpack.c.l.bf16 %v142
    %v3365 = vunpack.c.l.bf16 %v143
    %v3366 = vunpack.c.l.bf16 %v144
    %v3367 = vunpack.c.l.bf16 %v145
    %v3368 = vunpack.c.l.bf16 %v146
    %v3369 = vunpack.c.l.bf16 %v147
    %v3370 = vunpack.c.l.bf16 %v148
    %v3371 = vunpack.c.l.bf16 %v149
    %v3372 = vunpack.c.l.bf16 %v150
    %v3373 = vunpack.c.l.bf16 %v151
    %v3374 = vunpack.c.l.bf16 %v152
    %v3375 = vunpack.c.l.bf16 %v153
    %v3376 = vunpack.c.l.bf16 %v154
    %v3377 = vunpack.c.l.bf16 %v155
    %v3378 = vunpack.c.l.bf16 %v156
    %v3379 = vunpack.c.l.bf16 %v157
    %v3380 = vunpack.c.l.bf16 %v158
    %v3381 = vunpack.c.l.bf16 %v159
    %v3382 = vunpack.c.l.bf16 %v160
    %v3383 = vunpack.c.l.bf16 %v161
    %v3384 = vunpack.c.l.bf16 %v162
    %v3385 = vunpack.c.l.bf16 %v163
    %v3386 = vunpack.c.l.bf16 %v164
    %v3387 = vunpack.c.l.bf16 %v165
    %v3388 = vunpack.c.l.bf16 %v166
    %v3389 = vunpack.c.l.bf16 %v167
    %v3390 = vunpack.c.l.bf16 %v168
    %v3391 = vunpack.c.l.bf16 %v169
    %v3392 = vunpack.c.l.bf16 %v170
    %v3393 = vunpack.c.l.bf16 %v171
    %v3394 = vunpack.c.l.bf16 %v172
    %v3395 = vunpack.c.l.bf16 %v173
    %v3396 = vunpack.c.l.bf16 %v174
    %v3397 = vunpack.c.l.bf16 %v175
    %v3398 = vunpack.c.l.bf16 %v176
    %v3399 = vunpack.c.l.bf16 %v177
    %v3400 = vunpack.c.l.bf16 %v178
    %v3401 = vunpack.c.l.bf16 %v179
    %v3402 = vunpack.c.l.bf16 %v180
    %v3403 = vunpack.c.l.bf16 %v181
    %v3404 = vunpack.c.l.bf16 %v182
    %v3405 = vunpack.c.l.bf16 %v183
    %v3406 = vunpack.c.l.bf16 %v184
    %v3407 = vunpack.c.l.bf16 %v185
    %v3408 = vunpack.c.l.bf16 %v186
    %v3409 = vunpack.c.l.bf16 %v187
    %v3410 = vunpack.c.l.bf16 %v188
    %v3411 = vunpack.c.l.bf16 %v189
    %v3412 = vunpack.c.l.bf16 %v190
    %v3413 = vunpack.c.l.bf16 %v191
    %v3414 = vunpack.c.l.bf16 %v192
    %v3415 = vunpack.c.l.bf16 %v193
    %v3416 = vunpack.c.l.bf16 %v194
    %v3417 = vunpack.c.l.bf16 %v195
    %v3418 = vunpack.c.l.bf16 %v196
    %v3419 = vunpack.c.l.bf16 %v197
    %v3420 = vunpack.c.l.bf16 %v198
    %v3421 = vunpack.c.l.bf16 %v199
    %v3422 = vunpack.c.l.bf16 %v200
    %v3423 = vunpack.c.l.bf16 %v201
    %v3424 = vunpack.c.l.bf16 %v202
    %v3425 = vunpack.c.l.bf16 %v203
    %v3426 = vunpack.c.l.bf16 %v204
    %v3427 = vunpack.c.l.bf16 %v205
    %v3428 = vunpack.c.l.bf16 %v206
    %v3429 = vunpack.c.l.bf16 %v207
    %v3430 = vunpack.c.l.bf16 %v208
    %v3431 = vunpack.c.l.bf16 %v209
    %v3432 = vunpack.c.l.bf16 %v210
    %v3433 = vunpack.c.l.bf16 %v211
    %v3434 = vunpack.c.l.bf16 %v212
    %v3435 = vunpack.c.l.bf16 %v213
    %v3436 = vunpack.c.l.bf16 %v214
    %v3437 = vunpack.c.l.bf16 %v215
    %v3438 = vunpack.c.l.bf16 %v216
    %v3439 = vlaneseq
    %v3440 = vshrl.u32 %v3439, 7
    %v3441 = vsub.s32 0, %v3440
    %v3442 = vrot.slane %v3310, %v3441
    %3444 = vbcast.lane.b32.xlu0 %v3442, 256
    %v3445 = vpop.permute.xlu0 %3444
    %s3447 = sor.u32 256, 8
    %3448 = vbcast.lane.b32.xlu0 %v3442, %s3447
    %v3449 = vpop.permute.xlu0 %3448
    %s3451 = sor.u32 256, 16
    %3452 = vbcast.lane.b32.xlu0 %v3442, %s3451
    %v3453 = vpop.permute.xlu0 %3452
    %s3455 = sor.u32 256, 24
    %3456 = vbcast.lane.b32.xlu0 %v3442, %s3455
    %v3457 = vpop.permute.xlu0 %3456
    %s3459 = sor.u32 256, 32
    %3460 = vbcast.lane.b32.xlu0 %v3442, %s3459
    %v3461 = vpop.permute.xlu0 %3460
    %s3463 = sor.u32 256, 40
    %3464 = vbcast.lane.b32.xlu0 %v3442, %s3463
    %v3465 = vpop.permute.xlu0 %3464
    %s3467 = sor.u32 256, 48
    %3468 = vbcast.lane.b32.xlu0 %v3442, %s3467
    %v3469 = vpop.permute.xlu0 %3468
    %s3471 = sor.u32 256, 56
    %3472 = vbcast.lane.b32.xlu0 %v3442, %s3471
    %v3473 = vpop.permute.xlu0 %3472
    %s3475 = sor.u32 256, 64
    %3476 = vbcast.lane.b32.xlu0 %v3442, %s3475
    %v3477 = vpop.permute.xlu0 %3476
    %s3479 = sor.u32 256, 72
    %3480 = vbcast.lane.b32.xlu0 %v3442, %s3479
    %v3481 = vpop.permute.xlu0 %3480
    %s3483 = sor.u32 256, 80
    %3484 = vbcast.lane.b32.xlu0 %v3442, %s3483
    %v3485 = vpop.permute.xlu0 %3484
    %s3487 = sor.u32 256, 88
    %3488 = vbcast.lane.b32.xlu0 %v3442, %s3487
    %v3489 = vpop.permute.xlu0 %3488
    %s3491 = sor.u32 256, 96
    %3492 = vbcast.lane.b32.xlu0 %v3442, %s3491
    %v3493 = vpop.permute.xlu0 %3492
    %s3495 = sor.u32 256, 104
    %3496 = vbcast.lane.b32.xlu0 %v3442, %s3495
    %v3497 = vpop.permute.xlu0 %3496
    %s3499 = sor.u32 256, 112
    %3500 = vbcast.lane.b32.xlu0 %v3442, %s3499
    %v3501 = vpop.permute.xlu0 %3500
    %s3503 = sor.u32 256, 120
    %3504 = vbcast.lane.b32.xlu0 %v3442, %s3503
    %v3505 = vpop.permute.xlu0 %3504
    %v3506 = vlaneseq
    %v3507 = vshrl.u32 %v3506, 7
    %v3508 = vsub.s32 1, %v3507
    %v3509 = vrot.slane %v3310, %v3508
    %3511 = vbcast.lane.b32.xlu0 %v3509, 256
    %v3512 = vpop.permute.xlu0 %3511
    %s3514 = sor.u32 256, 8
    %3515 = vbcast.lane.b32.xlu0 %v3509, %s3514
    %v3516 = vpop.permute.xlu0 %3515
    %s3518 = sor.u32 256, 16
    %3519 = vbcast.lane.b32.xlu0 %v3509, %s3518
    %v3520 = vpop.permute.xlu0 %3519
    %s3522 = sor.u32 256, 24
    %3523 = vbcast.lane.b32.xlu0 %v3509, %s3522
    %v3524 = vpop.permute.xlu0 %3523
    %s3526 = sor.u32 256, 32
    %3527 = vbcast.lane.b32.xlu0 %v3509, %s3526
    %v3528 = vpop.permute.xlu0 %3527
    %s3530 = sor.u32 256, 40
    %3531 = vbcast.lane.b32.xlu0 %v3509, %s3530
    %v3532 = vpop.permute.xlu0 %3531
    %s3534 = sor.u32 256, 48
    %3535 = vbcast.lane.b32.xlu0 %v3509, %s3534
    %v3536 = vpop.permute.xlu0 %3535
    %s3538 = sor.u32 256, 56
    %3539 = vbcast.lane.b32.xlu0 %v3509, %s3538
    %v3540 = vpop.permute.xlu0 %3539
    %s3542 = sor.u32 256, 64
    %3543 = vbcast.lane.b32.xlu0 %v3509, %s3542
    %v3544 = vpop.permute.xlu0 %3543
    %s3546 = sor.u32 256, 72
    %3547 = vbcast.lane.b32.xlu0 %v3509, %s3546
    %v3548 = vpop.permute.xlu0 %3547
    %s3550 = sor.u32 256, 80
    %3551 = vbcast.lane.b32.xlu0 %v3509, %s3550
    %v3552 = vpop.permute.xlu0 %3551
    %s3554 = sor.u32 256, 88
    %3555 = vbcast.lane.b32.xlu0 %v3509, %s3554
    %v3556 = vpop.permute.xlu0 %3555
    %s3558 = sor.u32 256, 96
    %3559 = vbcast.lane.b32.xlu0 %v3509, %s3558
    %v3560 = vpop.permute.xlu0 %3559
    %s3562 = sor.u32 256, 104
    %3563 = vbcast.lane.b32.xlu0 %v3509, %s3562
    %v3564 = vpop.permute.xlu0 %3563
    %s3566 = sor.u32 256, 112
    %3567 = vbcast.lane.b32.xlu0 %v3509, %s3566
    %v3568 = vpop.permute.xlu0 %3567
    %s3570 = sor.u32 256, 120
    %3571 = vbcast.lane.b32.xlu0 %v3509, %s3570
    %v3572 = vpop.permute.xlu0 %3571
    %v3573 = vlaneseq
    %v3574 = vshrl.u32 %v3573, 7
    %v3575 = vsub.s32 2, %v3574
    %v3576 = vrot.slane %v3310, %v3575
    %3578 = vbcast.lane.b32.xlu0 %v3576, 256
    %v3579 = vpop.permute.xlu0 %3578
    %s3581 = sor.u32 256, 8
    %3582 = vbcast.lane.b32.xlu0 %v3576, %s3581
    %v3583 = vpop.permute.xlu0 %3582
    %s3585 = sor.u32 256, 16
    %3586 = vbcast.lane.b32.xlu0 %v3576, %s3585
    %v3587 = vpop.permute.xlu0 %3586
    %s3589 = sor.u32 256, 24
    %3590 = vbcast.lane.b32.xlu0 %v3576, %s3589
    %v3591 = vpop.permute.xlu0 %3590
    %s3593 = sor.u32 256, 32
    %3594 = vbcast.lane.b32.xlu0 %v3576, %s3593
    %v3595 = vpop.permute.xlu0 %3594
    %s3597 = sor.u32 256, 40
    %3598 = vbcast.lane.b32.xlu0 %v3576, %s3597
    %v3599 = vpop.permute.xlu0 %3598
    %s3601 = sor.u32 256, 48
    %3602 = vbcast.lane.b32.xlu0 %v3576, %s3601
    %v3603 = vpop.permute.xlu0 %3602
    %s3605 = sor.u32 256, 56
    %3606 = vbcast.lane.b32.xlu0 %v3576, %s3605
    %v3607 = vpop.permute.xlu0 %3606
    %s3609 = sor.u32 256, 64
    %3610 = vbcast.lane.b32.xlu0 %v3576, %s3609
    %v3611 = vpop.permute.xlu0 %3610
    %s3613 = sor.u32 256, 72
    %3614 = vbcast.lane.b32.xlu0 %v3576, %s3613
    %v3615 = vpop.permute.xlu0 %3614
    %s3617 = sor.u32 256, 80
    %3618 = vbcast.lane.b32.xlu0 %v3576, %s3617
    %v3619 = vpop.permute.xlu0 %3618
    %s3621 = sor.u32 256, 88
    %3622 = vbcast.lane.b32.xlu0 %v3576, %s3621
    %v3623 = vpop.permute.xlu0 %3622
    %s3625 = sor.u32 256, 96
    %3626 = vbcast.lane.b32.xlu0 %v3576, %s3625
    %v3627 = vpop.permute.xlu0 %3626
    %s3629 = sor.u32 256, 104
    %3630 = vbcast.lane.b32.xlu0 %v3576, %s3629
    %v3631 = vpop.permute.xlu0 %3630
    %s3633 = sor.u32 256, 112
    %3634 = vbcast.lane.b32.xlu0 %v3576, %s3633
    %v3635 = vpop.permute.xlu0 %3634
    %s3637 = sor.u32 256, 120
    %3638 = vbcast.lane.b32.xlu0 %v3576, %s3637
    %v3639 = vpop.permute.xlu0 %3638
    %v3640 = vlaneseq
    %v3641 = vshrl.u32 %v3640, 7
    %v3642 = vsub.s32 3, %v3641
    %v3643 = vrot.slane %v3310, %v3642
    %3645 = vbcast.lane.b32.xlu0 %v3643, 256
    %v3646 = vpop.permute.xlu0 %3645
    %s3648 = sor.u32 256, 8
    %3649 = vbcast.lane.b32.xlu0 %v3643, %s3648
    %v3650 = vpop.permute.xlu0 %3649
    %s3652 = sor.u32 256, 16
    %3653 = vbcast.lane.b32.xlu0 %v3643, %s3652
    %v3654 = vpop.permute.xlu0 %3653
    %s3656 = sor.u32 256, 24
    %3657 = vbcast.lane.b32.xlu0 %v3643, %s3656
    %v3658 = vpop.permute.xlu0 %3657
    %s3660 = sor.u32 256, 32
    %3661 = vbcast.lane.b32.xlu0 %v3643, %s3660
    %v3662 = vpop.permute.xlu0 %3661
    %s3664 = sor.u32 256, 40
    %3665 = vbcast.lane.b32.xlu0 %v3643, %s3664
    %v3666 = vpop.permute.xlu0 %3665
    %s3668 = sor.u32 256, 48
    %3669 = vbcast.lane.b32.xlu0 %v3643, %s3668
    %v3670 = vpop.permute.xlu0 %3669
    %s3672 = sor.u32 256, 56
    %3673 = vbcast.lane.b32.xlu0 %v3643, %s3672
    %v3674 = vpop.permute.xlu0 %3673
    %s3676 = sor.u32 256, 64
    %3677 = vbcast.lane.b32.xlu0 %v3643, %s3676
    %v3678 = vpop.permute.xlu0 %3677
    %s3680 = sor.u32 256, 72
    %3681 = vbcast.lane.b32.xlu0 %v3643, %s3680
    %v3682 = vpop.permute.xlu0 %3681
    %s3684 = sor.u32 256, 80
    %3685 = vbcast.lane.b32.xlu0 %v3643, %s3684
    %v3686 = vpop.permute.xlu0 %3685
    %s3688 = sor.u32 256, 88
    %3689 = vbcast.lane.b32.xlu0 %v3643, %s3688
    %v3690 = vpop.permute.xlu0 %3689
    %s3692 = sor.u32 256, 96
    %3693 = vbcast.lane.b32.xlu0 %v3643, %s3692
    %v3694 = vpop.permute.xlu0 %3693
    %s3696 = sor.u32 256, 104
    %3697 = vbcast.lane.b32.xlu0 %v3643, %s3696
    %v3698 = vpop.permute.xlu0 %3697
    %s3700 = sor.u32 256, 112
    %3701 = vbcast.lane.b32.xlu0 %v3643, %s3700
    %v3702 = vpop.permute.xlu0 %3701
    %s3704 = sor.u32 256, 120
    %3705 = vbcast.lane.b32.xlu0 %v3643, %s3704
    %v3706 = vpop.permute.xlu0 %3705
    %v3707 = vlaneseq
    %v3708 = vshrl.u32 %v3707, 7
    %v3709 = vsub.s32 4, %v3708
    %v3710 = vrot.slane %v3310, %v3709
    %3712 = vbcast.lane.b32.xlu0 %v3710, 256
    %v3713 = vpop.permute.xlu0 %3712
    %s3715 = sor.u32 256, 8
    %3716 = vbcast.lane.b32.xlu0 %v3710, %s3715
    %v3717 = vpop.permute.xlu0 %3716
    %s3719 = sor.u32 256, 16
    %3720 = vbcast.lane.b32.xlu0 %v3710, %s3719
    %v3721 = vpop.permute.xlu0 %3720
    %s3723 = sor.u32 256, 24
    %3724 = vbcast.lane.b32.xlu0 %v3710, %s3723
    %v3725 = vpop.permute.xlu0 %3724
    %s3727 = sor.u32 256, 32
    %3728 = vbcast.lane.b32.xlu0 %v3710, %s3727
    %v3729 = vpop.permute.xlu0 %3728
    %s3731 = sor.u32 256, 40
    %3732 = vbcast.lane.b32.xlu0 %v3710, %s3731
    %v3733 = vpop.permute.xlu0 %3732
    %s3735 = sor.u32 256, 48
    %3736 = vbcast.lane.b32.xlu0 %v3710, %s3735
    %v3737 = vpop.permute.xlu0 %3736
    %s3739 = sor.u32 256, 56
    %3740 = vbcast.lane.b32.xlu0 %v3710, %s3739
    %v3741 = vpop.permute.xlu0 %3740
    %s3743 = sor.u32 256, 64
    %3744 = vbcast.lane.b32.xlu0 %v3710, %s3743
    %v3745 = vpop.permute.xlu0 %3744
    %s3747 = sor.u32 256, 72
    %3748 = vbcast.lane.b32.xlu0 %v3710, %s3747
    %v3749 = vpop.permute.xlu0 %3748
    %s3751 = sor.u32 256, 80
    %3752 = vbcast.lane.b32.xlu0 %v3710, %s3751
    %v3753 = vpop.permute.xlu0 %3752
    %s3755 = sor.u32 256, 88
    %3756 = vbcast.lane.b32.xlu0 %v3710, %s3755
    %v3757 = vpop.permute.xlu0 %3756
    %s3759 = sor.u32 256, 96
    %3760 = vbcast.lane.b32.xlu0 %v3710, %s3759
    %v3761 = vpop.permute.xlu0 %3760
    %s3763 = sor.u32 256, 104
    %3764 = vbcast.lane.b32.xlu0 %v3710, %s3763
    %v3765 = vpop.permute.xlu0 %3764
    %s3767 = sor.u32 256, 112
    %3768 = vbcast.lane.b32.xlu0 %v3710, %s3767
    %v3769 = vpop.permute.xlu0 %3768
    %s3771 = sor.u32 256, 120
    %3772 = vbcast.lane.b32.xlu0 %v3710, %s3771
    %v3773 = vpop.permute.xlu0 %3772
    %v3774 = vlaneseq
    %v3775 = vshrl.u32 %v3774, 7
    %v3776 = vsub.s32 5, %v3775
    %v3777 = vrot.slane %v3310, %v3776
    %3779 = vbcast.lane.b32.xlu0 %v3777, 256
    %v3780 = vpop.permute.xlu0 %3779
    %s3782 = sor.u32 256, 8
    %3783 = vbcast.lane.b32.xlu0 %v3777, %s3782
    %v3784 = vpop.permute.xlu0 %3783
    %s3786 = sor.u32 256, 16
    %3787 = vbcast.lane.b32.xlu0 %v3777, %s3786
    %v3788 = vpop.permute.xlu0 %3787
    %s3790 = sor.u32 256, 24
    %3791 = vbcast.lane.b32.xlu0 %v3777, %s3790
    %v3792 = vpop.permute.xlu0 %3791
    %s3794 = sor.u32 256, 32
    %3795 = vbcast.lane.b32.xlu0 %v3777, %s3794
    %v3796 = vpop.permute.xlu0 %3795
    %s3798 = sor.u32 256, 40
    %3799 = vbcast.lane.b32.xlu0 %v3777, %s3798
    %v3800 = vpop.permute.xlu0 %3799
    %s3802 = sor.u32 256, 48
    %3803 = vbcast.lane.b32.xlu0 %v3777, %s3802
    %v3804 = vpop.permute.xlu0 %3803
    %s3806 = sor.u32 256, 56
    %3807 = vbcast.lane.b32.xlu0 %v3777, %s3806
    %v3808 = vpop.permute.xlu0 %3807
    %s3810 = sor.u32 256, 64
    %3811 = vbcast.lane.b32.xlu0 %v3777, %s3810
    %v3812 = vpop.permute.xlu0 %3811
    %s3814 = sor.u32 256, 72
    %3815 = vbcast.lane.b32.xlu0 %v3777, %s3814
    %v3816 = vpop.permute.xlu0 %3815
    %s3818 = sor.u32 256, 80
    %3819 = vbcast.lane.b32.xlu0 %v3777, %s3818
    %v3820 = vpop.permute.xlu0 %3819
    %s3822 = sor.u32 256, 88
    %3823 = vbcast.lane.b32.xlu0 %v3777, %s3822
    %v3824 = vpop.permute.xlu0 %3823
    %s3826 = sor.u32 256, 96
    %3827 = vbcast.lane.b32.xlu0 %v3777, %s3826
    %v3828 = vpop.permute.xlu0 %3827
    %s3830 = sor.u32 256, 104
    %3831 = vbcast.lane.b32.xlu0 %v3777, %s3830
    %v3832 = vpop.permute.xlu0 %3831
    %s3834 = sor.u32 256, 112
    %3835 = vbcast.lane.b32.xlu0 %v3777, %s3834
    %v3836 = vpop.permute.xlu0 %3835
    %s3838 = sor.u32 256, 120
    %3839 = vbcast.lane.b32.xlu0 %v3777, %s3838
    %v3840 = vpop.permute.xlu0 %3839
    %v3841 = vlaneseq
    %v3842 = vshrl.u32 %v3841, 7
    %v3843 = vsub.s32 6, %v3842
    %v3844 = vrot.slane %v3310, %v3843
    %3846 = vbcast.lane.b32.xlu0 %v3844, 256
    %v3847 = vpop.permute.xlu0 %3846
    %s3849 = sor.u32 256, 8
    %3850 = vbcast.lane.b32.xlu0 %v3844, %s3849
    %v3851 = vpop.permute.xlu0 %3850
    %s3853 = sor.u32 256, 16
    %3854 = vbcast.lane.b32.xlu0 %v3844, %s3853
    %v3855 = vpop.permute.xlu0 %3854
    %s3857 = sor.u32 256, 24
    %3858 = vbcast.lane.b32.xlu0 %v3844, %s3857
    %v3859 = vpop.permute.xlu0 %3858
    %s3861 = sor.u32 256, 32
    %3862 = vbcast.lane.b32.xlu0 %v3844, %s3861
    %v3863 = vpop.permute.xlu0 %3862
    %s3865 = sor.u32 256, 40
    %3866 = vbcast.lane.b32.xlu0 %v3844, %s3865
    %v3867 = vpop.permute.xlu0 %3866
    %s3869 = sor.u32 256, 48
    %3870 = vbcast.lane.b32.xlu0 %v3844, %s3869
    %v3871 = vpop.permute.xlu0 %3870
    %s3873 = sor.u32 256, 56
    %3874 = vbcast.lane.b32.xlu0 %v3844, %s3873
    %v3875 = vpop.permute.xlu0 %3874
    %s3877 = sor.u32 256, 64
    %3878 = vbcast.lane.b32.xlu0 %v3844, %s3877
    %v3879 = vpop.permute.xlu0 %3878
    %s3881 = sor.u32 256, 72
    %3882 = vbcast.lane.b32.xlu0 %v3844, %s3881
    %v3883 = vpop.permute.xlu0 %3882
    %s3885 = sor.u32 256, 80
    %3886 = vbcast.lane.b32.xlu0 %v3844, %s3885
    %v3887 = vpop.permute.xlu0 %3886
    %s3889 = sor.u32 256, 88
    %3890 = vbcast.lane.b32.xlu0 %v3844, %s3889
    %v3891 = vpop.permute.xlu0 %3890
    %s3893 = sor.u32 256, 96
    %3894 = vbcast.lane.b32.xlu0 %v3844, %s3893
    %v3895 = vpop.permute.xlu0 %3894
    %s3897 = sor.u32 256, 104
    %3898 = vbcast.lane.b32.xlu0 %v3844, %s3897
    %v3899 = vpop.permute.xlu0 %3898
    %s3901 = sor.u32 256, 112
    %3902 = vbcast.lane.b32.xlu0 %v3844, %s3901
    %v3903 = vpop.permute.xlu0 %3902
    %s3905 = sor.u32 256, 120
    %3906 = vbcast.lane.b32.xlu0 %v3844, %s3905
    %v3907 = vpop.permute.xlu0 %3906
    %v3908 = vlaneseq
    %v3909 = vshrl.u32 %v3908, 7
    %v3910 = vsub.s32 7, %v3909
    %v3911 = vrot.slane %v3310, %v3910
    %3913 = vbcast.lane.b32.xlu0 %v3911, 256
    %v3914 = vpop.permute.xlu0 %3913
    %s3916 = sor.u32 256, 8
    %3917 = vbcast.lane.b32.xlu0 %v3911, %s3916
    %v3918 = vpop.permute.xlu0 %3917
    %s3920 = sor.u32 256, 16
    %3921 = vbcast.lane.b32.xlu0 %v3911, %s3920
    %v3922 = vpop.permute.xlu0 %3921
    %s3924 = sor.u32 256, 24
    %3925 = vbcast.lane.b32.xlu0 %v3911, %s3924
    %v3926 = vpop.permute.xlu0 %3925
    %s3928 = sor.u32 256, 32
    %3929 = vbcast.lane.b32.xlu0 %v3911, %s3928
    %v3930 = vpop.permute.xlu0 %3929
    %s3932 = sor.u32 256, 40
    %3933 = vbcast.lane.b32.xlu0 %v3911, %s3932
    %v3934 = vpop.permute.xlu0 %3933
    %s3936 = sor.u32 256, 48
    %3937 = vbcast.lane.b32.xlu0 %v3911, %s3936
    %v3938 = vpop.permute.xlu0 %3937
    %s3940 = sor.u32 256, 56
    %3941 = vbcast.lane.b32.xlu0 %v3911, %s3940
    %v3942 = vpop.permute.xlu0 %3941
    %s3944 = sor.u32 256, 64
    %3945 = vbcast.lane.b32.xlu0 %v3911, %s3944
    %v3946 = vpop.permute.xlu0 %3945
    %s3948 = sor.u32 256, 72
    %3949 = vbcast.lane.b32.xlu0 %v3911, %s3948
    %v3950 = vpop.permute.xlu0 %3949
    %s3952 = sor.u32 256, 80
    %3953 = vbcast.lane.b32.xlu0 %v3911, %s3952
    %v3954 = vpop.permute.xlu0 %3953
    %s3956 = sor.u32 256, 88
    %3957 = vbcast.lane.b32.xlu0 %v3911, %s3956
    %v3958 = vpop.permute.xlu0 %3957
    %s3960 = sor.u32 256, 96
    %3961 = vbcast.lane.b32.xlu0 %v3911, %s3960
    %v3962 = vpop.permute.xlu0 %3961
    %s3964 = sor.u32 256, 104
    %3965 = vbcast.lane.b32.xlu0 %v3911, %s3964
    %v3966 = vpop.permute.xlu0 %3965
    %s3968 = sor.u32 256, 112
    %3969 = vbcast.lane.b32.xlu0 %v3911, %s3968
    %v3970 = vpop.permute.xlu0 %3969
    %s3972 = sor.u32 256, 120
    %3973 = vbcast.lane.b32.xlu0 %v3911, %s3972
    %v3974 = vpop.permute.xlu0 %3973
    %v3975 = vmul.f32 %v3445, %v3311
    %v3976 = vmul.f32 %v3449, %v3312
    %v3977 = vmul.f32 %v3453, %v3313
    %v3978 = vmul.f32 %v3457, %v3314
    %v3979 = vmul.f32 %v3461, %v3315
    %v3980 = vmul.f32 %v3465, %v3316
    %v3981 = vmul.f32 %v3469, %v3317
    %v3982 = vmul.f32 %v3473, %v3318
    %v3983 = vmul.f32 %v3477, %v3319
    %v3984 = vmul.f32 %v3481, %v3320
    %v3985 = vmul.f32 %v3485, %v3321
    %v3986 = vmul.f32 %v3489, %v3322
    %v3987 = vmul.f32 %v3493, %v3323
    %v3988 = vmul.f32 %v3497, %v3324
    %v3989 = vmul.f32 %v3501, %v3325
    %v3990 = vmul.f32 %v3505, %v3326
    %v3991 = vmul.f32 %v3512, %v3327
    %v3992 = vmul.f32 %v3516, %v3328
    %v3993 = vmul.f32 %v3520, %v3329
    %v3994 = vmul.f32 %v3524, %v3330
    %v3995 = vmul.f32 %v3528, %v3331
    %v3996 = vmul.f32 %v3532, %v3332
    %v3997 = vmul.f32 %v3536, %v3333
    %v3998 = vmul.f32 %v3540, %v3334
    %v3999 = vmul.f32 %v3544, %v3335
    %v4000 = vmul.f32 %v3548, %v3336
    %v4001 = vmul.f32 %v3552, %v3337
    %v4002 = vmul.f32 %v3556, %v3338
    %v4003 = vmul.f32 %v3560, %v3339
    %v4004 = vmul.f32 %v3564, %v3340
    %v4005 = vmul.f32 %v3568, %v3341
    %v4006 = vmul.f32 %v3572, %v3342
    %v4007 = vmul.f32 %v3579, %v3343
    %v4008 = vmul.f32 %v3583, %v3344
    %v4009 = vmul.f32 %v3587, %v3345
    %v4010 = vmul.f32 %v3591, %v3346
    %v4011 = vmul.f32 %v3595, %v3347
    %v4012 = vmul.f32 %v3599, %v3348
    %v4013 = vmul.f32 %v3603, %v3349
    %v4014 = vmul.f32 %v3607, %v3350
    %v4015 = vmul.f32 %v3611, %v3351
    %v4016 = vmul.f32 %v3615, %v3352
    %v4017 = vmul.f32 %v3619, %v3353
    %v4018 = vmul.f32 %v3623, %v3354
    %v4019 = vmul.f32 %v3627, %v3355
    %v4020 = vmul.f32 %v3631, %v3356
    %v4021 = vmul.f32 %v3635, %v3357
    %v4022 = vmul.f32 %v3639, %v3358
    %v4023 = vmul.f32 %v3646, %v3359
    %v4024 = vmul.f32 %v3650, %v3360
    %v4025 = vmul.f32 %v3654, %v3361
    %v4026 = vmul.f32 %v3658, %v3362
    %v4027 = vmul.f32 %v3662, %v3363
    %v4028 = vmul.f32 %v3666, %v3364
    %v4029 = vmul.f32 %v3670, %v3365
    %v4030 = vmul.f32 %v3674, %v3366
    %v4031 = vmul.f32 %v3678, %v3367
    %v4032 = vmul.f32 %v3682, %v3368
    %v4033 = vmul.f32 %v3686, %v3369
    %v4034 = vmul.f32 %v3690, %v3370
    %v4035 = vmul.f32 %v3694, %v3371
    %v4036 = vmul.f32 %v3698, %v3372
    %v4037 = vmul.f32 %v3702, %v3373
    %v4038 = vmul.f32 %v3706, %v3374
    %v4039 = vmul.f32 %v3713, %v3375
    %v4040 = vmul.f32 %v3717, %v3376
    %v4041 = vmul.f32 %v3721, %v3377
    %v4042 = vmul.f32 %v3725, %v3378
    %v4043 = vmul.f32 %v3729, %v3379
    %v4044 = vmul.f32 %v3733, %v3380
    %v4045 = vmul.f32 %v3737, %v3381
    %v4046 = vmul.f32 %v3741, %v3382
    %v4047 = vmul.f32 %v3745, %v3383
    %v4048 = vmul.f32 %v3749, %v3384
    %v4049 = vmul.f32 %v3753, %v3385
    %v4050 = vmul.f32 %v3757, %v3386
    %v4051 = vmul.f32 %v3761, %v3387
    %v4052 = vmul.f32 %v3765, %v3388
    %v4053 = vmul.f32 %v3769, %v3389
    %v4054 = vmul.f32 %v3773, %v3390
    %v4055 = vmul.f32 %v3780, %v3391
    %v4056 = vmul.f32 %v3784, %v3392
    %v4057 = vmul.f32 %v3788, %v3393
    %v4058 = vmul.f32 %v3792, %v3394
    %v4059 = vmul.f32 %v3796, %v3395
    %v4060 = vmul.f32 %v3800, %v3396
    %v4061 = vmul.f32 %v3804, %v3397
    %v4062 = vmul.f32 %v3808, %v3398
    %v4063 = vmul.f32 %v3812, %v3399
    %v4064 = vmul.f32 %v3816, %v3400
    %v4065 = vmul.f32 %v3820, %v3401
    %v4066 = vmul.f32 %v3824, %v3402
    %v4067 = vmul.f32 %v3828, %v3403
    %v4068 = vmul.f32 %v3832, %v3404
    %v4069 = vmul.f32 %v3836, %v3405
    %v4070 = vmul.f32 %v3840, %v3406
    %v4071 = vmul.f32 %v3847, %v3407
    %v4072 = vmul.f32 %v3851, %v3408
    %v4073 = vmul.f32 %v3855, %v3409
    %v4074 = vmul.f32 %v3859, %v3410
    %v4075 = vmul.f32 %v3863, %v3411
    %v4076 = vmul.f32 %v3867, %v3412
    %v4077 = vmul.f32 %v3871, %v3413
    %v4078 = vmul.f32 %v3875, %v3414
    %v4079 = vmul.f32 %v3879, %v3415
    %v4080 = vmul.f32 %v3883, %v3416
    %v4081 = vmul.f32 %v3887, %v3417
    %v4082 = vmul.f32 %v3891, %v3418
    %v4083 = vmul.f32 %v3895, %v3419
    %v4084 = vmul.f32 %v3899, %v3420
    %v4085 = vmul.f32 %v3903, %v3421
    %v4086 = vmul.f32 %v3907, %v3422
    %v4087 = vmul.f32 %v3914, %v3423
    %v4088 = vmul.f32 %v3918, %v3424
    %v4089 = vmul.f32 %v3922, %v3425
    %v4090 = vmul.f32 %v3926, %v3426
    %v4091 = vmul.f32 %v3930, %v3427
    %v4092 = vmul.f32 %v3934, %v3428
    %v4093 = vmul.f32 %v3938, %v3429
    %v4094 = vmul.f32 %v3942, %v3430
    %v4095 = vmul.f32 %v3946, %v3431
    %v4096 = vmul.f32 %v3950, %v3432
    %v4097 = vmul.f32 %v3954, %v3433
    %v4098 = vmul.f32 %v3958, %v3434
    %v4099 = vmul.f32 %v3962, %v3435
    %v4100 = vmul.f32 %v3966, %v3436
    %v4101 = vmul.f32 %v3970, %v3437
    %v4102 = vmul.f32 %v3974, %v3438
    %v4103 = vadd.f32 %v3975, %v3976
    %v4104 = vadd.f32 %v4103, %v3977
    %v4105 = vadd.f32 %v4104, %v3978
    %v4106 = vadd.f32 %v4105, %v3979
    %v4107 = vadd.f32 %v4106, %v3980
    %v4108 = vadd.f32 %v4107, %v3981
    %v4109 = vadd.f32 %v4108, %v3982
    %v4110 = vadd.f32 %v4109, %v3983
    %v4111 = vadd.f32 %v4110, %v3984
    %v4112 = vadd.f32 %v4111, %v3985
    %v4113 = vadd.f32 %v4112, %v3986
    %v4114 = vadd.f32 %v4113, %v3987
    %v4115 = vadd.f32 %v4114, %v3988
    %v4116 = vadd.f32 %v4115, %v3989
    %v4117 = vadd.f32 %v4116, %v3990
    %v4118 = vrot.slane %v4117, 4
    %v4119 = vadd.f32 %v4117, %v4118
    %v4120 = vrot.slane %v4119, 2
    %v4121 = vadd.f32 %v4119, %v4120
    %v4122 = vrot.slane %v4121, 1
    %v4123 = vadd.f32 %v4121, %v4122
    %v4124 = vadd.f32 %v3991, %v3992
    %v4125 = vadd.f32 %v4124, %v3993
    %v4126 = vadd.f32 %v4125, %v3994
    %v4127 = vadd.f32 %v4126, %v3995
    %v4128 = vadd.f32 %v4127, %v3996
    %v4129 = vadd.f32 %v4128, %v3997
    %v4130 = vadd.f32 %v4129, %v3998
    %v4131 = vadd.f32 %v4130, %v3999
    %v4132 = vadd.f32 %v4131, %v4000
    %v4133 = vadd.f32 %v4132, %v4001
    %v4134 = vadd.f32 %v4133, %v4002
    %v4135 = vadd.f32 %v4134, %v4003
    %v4136 = vadd.f32 %v4135, %v4004
    %v4137 = vadd.f32 %v4136, %v4005
    %v4138 = vadd.f32 %v4137, %v4006
    %v4139 = vrot.slane %v4138, 4
    %v4140 = vadd.f32 %v4138, %v4139
    %v4141 = vrot.slane %v4140, 2
    %v4142 = vadd.f32 %v4140, %v4141
    %v4143 = vrot.slane %v4142, 1
    %v4144 = vadd.f32 %v4142, %v4143
    %v4145 = vadd.f32 %v4007, %v4008
    %v4146 = vadd.f32 %v4145, %v4009
    %v4147 = vadd.f32 %v4146, %v4010
    %v4148 = vadd.f32 %v4147, %v4011
    %v4149 = vadd.f32 %v4148, %v4012
    %v4150 = vadd.f32 %v4149, %v4013
    %v4151 = vadd.f32 %v4150, %v4014
    %v4152 = vadd.f32 %v4151, %v4015
    %v4153 = vadd.f32 %v4152, %v4016
    %v4154 = vadd.f32 %v4153, %v4017
    %v4155 = vadd.f32 %v4154, %v4018
    %v4156 = vadd.f32 %v4155, %v4019
    %v4157 = vadd.f32 %v4156, %v4020
    %v4158 = vadd.f32 %v4157, %v4021
    %v4159 = vadd.f32 %v4158, %v4022
    %v4160 = vrot.slane %v4159, 4
    %v4161 = vadd.f32 %v4159, %v4160
    %v4162 = vrot.slane %v4161, 2
    %v4163 = vadd.f32 %v4161, %v4162
    %v4164 = vrot.slane %v4163, 1
    %v4165 = vadd.f32 %v4163, %v4164
    %v4166 = vadd.f32 %v4023, %v4024
    %v4167 = vadd.f32 %v4166, %v4025
    %v4168 = vadd.f32 %v4167, %v4026
    %v4169 = vadd.f32 %v4168, %v4027
    %v4170 = vadd.f32 %v4169, %v4028
    %v4171 = vadd.f32 %v4170, %v4029
    %v4172 = vadd.f32 %v4171, %v4030
    %v4173 = vadd.f32 %v4172, %v4031
    %v4174 = vadd.f32 %v4173, %v4032
    %v4175 = vadd.f32 %v4174, %v4033
    %v4176 = vadd.f32 %v4175, %v4034
    %v4177 = vadd.f32 %v4176, %v4035
    %v4178 = vadd.f32 %v4177, %v4036
    %v4179 = vadd.f32 %v4178, %v4037
    %v4180 = vadd.f32 %v4179, %v4038
    %v4181 = vrot.slane %v4180, 4
    %v4182 = vadd.f32 %v4180, %v4181
    %v4183 = vrot.slane %v4182, 2
    %v4184 = vadd.f32 %v4182, %v4183
    %v4185 = vrot.slane %v4184, 1
    %v4186 = vadd.f32 %v4184, %v4185
    %v4187 = vadd.f32 %v4039, %v4040
    %v4188 = vadd.f32 %v4187, %v4041
    %v4189 = vadd.f32 %v4188, %v4042
    %v4190 = vadd.f32 %v4189, %v4043
    %v4191 = vadd.f32 %v4190, %v4044
    %v4192 = vadd.f32 %v4191, %v4045
    %v4193 = vadd.f32 %v4192, %v4046
    %v4194 = vadd.f32 %v4193, %v4047
    %v4195 = vadd.f32 %v4194, %v4048
    %v4196 = vadd.f32 %v4195, %v4049
    %v4197 = vadd.f32 %v4196, %v4050
    %v4198 = vadd.f32 %v4197, %v4051
    %v4199 = vadd.f32 %v4198, %v4052
    %v4200 = vadd.f32 %v4199, %v4053
    %v4201 = vadd.f32 %v4200, %v4054
    %v4202 = vrot.slane %v4201, 4
    %v4203 = vadd.f32 %v4201, %v4202
    %v4204 = vrot.slane %v4203, 2
    %v4205 = vadd.f32 %v4203, %v4204
    %v4206 = vrot.slane %v4205, 1
    %v4207 = vadd.f32 %v4205, %v4206
    %v4208 = vadd.f32 %v4055, %v4056
    %v4209 = vadd.f32 %v4208, %v4057
    %v4210 = vadd.f32 %v4209, %v4058
    %v4211 = vadd.f32 %v4210, %v4059
    %v4212 = vadd.f32 %v4211, %v4060
    %v4213 = vadd.f32 %v4212, %v4061
    %v4214 = vadd.f32 %v4213, %v4062
    %v4215 = vadd.f32 %v4214, %v4063
    %v4216 = vadd.f32 %v4215, %v4064
    %v4217 = vadd.f32 %v4216, %v4065
    %v4218 = vadd.f32 %v4217, %v4066
    %v4219 = vadd.f32 %v4218, %v4067
    %v4220 = vadd.f32 %v4219, %v4068
    %v4221 = vadd.f32 %v4220, %v4069
    %v4222 = vadd.f32 %v4221, %v4070
    %v4223 = vrot.slane %v4222, 4
    %v4224 = vadd.f32 %v4222, %v4223
    %v4225 = vrot.slane %v4224, 2
    %v4226 = vadd.f32 %v4224, %v4225
    %v4227 = vrot.slane %v4226, 1
    %v4228 = vadd.f32 %v4226, %v4227
    %v4229 = vadd.f32 %v4071, %v4072
    %v4230 = vadd.f32 %v4229, %v4073
    %v4231 = vadd.f32 %v4230, %v4074
    %v4232 = vadd.f32 %v4231, %v4075
    %v4233 = vadd.f32 %v4232, %v4076
    %v4234 = vadd.f32 %v4233, %v4077
    %v4235 = vadd.f32 %v4234, %v4078
    %v4236 = vadd.f32 %v4235, %v4079
    %v4237 = vadd.f32 %v4236, %v4080
    %v4238 = vadd.f32 %v4237, %v4081
    %v4239 = vadd.f32 %v4238, %v4082
    %v4240 = vadd.f32 %v4239, %v4083
    %v4241 = vadd.f32 %v4240, %v4084
    %v4242 = vadd.f32 %v4241, %v4085
    %v4243 = vadd.f32 %v4242, %v4086
    %v4244 = vrot.slane %v4243, 4
    %v4245 = vadd.f32 %v4243, %v4244
    %v4246 = vrot.slane %v4245, 2
    %v4247 = vadd.f32 %v4245, %v4246
    %v4248 = vrot.slane %v4247, 1
    %v4249 = vadd.f32 %v4247, %v4248
    %v4250 = vadd.f32 %v4087, %v4088
    %v4251 = vadd.f32 %v4250, %v4089
    %v4252 = vadd.f32 %v4251, %v4090
    %v4253 = vadd.f32 %v4252, %v4091
    %v4254 = vadd.f32 %v4253, %v4092
    %v4255 = vadd.f32 %v4254, %v4093
    %v4256 = vadd.f32 %v4255, %v4094
    %v4257 = vadd.f32 %v4256, %v4095
    %v4258 = vadd.f32 %v4257, %v4096
    %v4259 = vadd.f32 %v4258, %v4097
    %v4260 = vadd.f32 %v4259, %v4098
    %v4261 = vadd.f32 %v4260, %v4099
    %v4262 = vadd.f32 %v4261, %v4100
    %v4263 = vadd.f32 %v4262, %v4101
    %v4264 = vadd.f32 %v4263, %v4102
    %v4265 = vrot.slane %v4264, 4
    %v4266 = vadd.f32 %v4264, %v4265
    %v4267 = vrot.slane %v4266, 2
    %v4268 = vadd.f32 %v4266, %v4267
    %v4269 = vrot.slane %v4268, 1
    %v4270 = vadd.f32 %v4268, %v4269
    %v4279 = vsel %vm3279, %v4144, %v4123
    %v4280 = vsel %vm3281, %v4165, %v4279
    %v4281 = vsel %vm3283, %v4186, %v4280
    %v4282 = vsel %vm3285, %v4207, %v4281
    %v4283 = vsel %vm3287, %v4228, %v4282
    %v4284 = vsel %vm3289, %v4249, %v4283
    %v4285 = vsel %vm3291, %v4270, %v4284
    %4287 = vst [vmem:[#allocation11] sm:$0xff] %v4285
    %4288 = vst [vmem:[#allocation12] sm:$0xff] %v3310
    // Predicated region
    $region42: #{tpu_custom_call.1} parent=1 // pred_check
      _
    $region43: #{tpu_custom_call.1} parent=1 // pred_check_branch
      %4290 = sbr.rel (0) target = $region45
    $region44: #{tpu_custom_call.1} parent=1 // pred_region
      %s4292 = ssub.s32 128, 128
      %4293 = vsyncadd [#allocation4], %s4292
      %s4295 = sshll.u32 [#allocation11], 4
      %s4296 = int_to_ptr.vmem [resolvable:$true] %s4295
      %4298 = dma.vmem_to_hbm [thread:$0]  %s4296, 128, %s5, [#allocation4]
    $region45: #{tpu_custom_call.1} parent=1 // pred_fallthru
      _
    // Predicated region
    $region46: #{tpu_custom_call.1} parent=1 // pred_check
      _
    $region47: #{tpu_custom_call.1} parent=1 // pred_check_branch
      %4300 = sbr.rel (0) target = $region49
    $region48: #{tpu_custom_call.1} parent=1 // pred_region
      %s4302 = ssub.s32 128, 128
      %4303 = vsyncadd [#allocation13], %s4302
      %s4305 = sshll.u32 [#allocation12], 4
      %s4306 = int_to_ptr.vmem [resolvable:$true] %s4305
      %4308 = dma.vmem_to_hbm [thread:$0]  %s4306, 128, %s6, [#allocation13]
    $region49: #{tpu_custom_call.1} parent=1 // pred_fallthru
      _
    // Predicated region
    $region50: #{tpu_custom_call.1} parent=1 // pred_check
      _
    $region51: #{tpu_custom_call.1} parent=1 // pred_check_branch
      %4310 = sbr.rel (0) target = $region53
    $region52: #{tpu_custom_call.1} parent=1 // pred_region
      %4311 = dma.done [#allocation4], 128
    $region53: #{tpu_custom_call.1} parent=1 // pred_fallthru
      _
    // Predicated region
    $region54: #{tpu_custom_call.1} parent=1 // pred_check
      _
    $region55: #{tpu_custom_call.1} parent=1 // pred_check_branch
      %4313 = sbr.rel (0) target = $region57
    $region56: #{tpu_custom_call.1} parent=1 // pred_region
      %4314 = dma.done [#allocation13], 128
    $region57: #{tpu_custom_call.1} parent=1 // pred_fallthru
      _
    %4315 = vsyncpa [#allocation3], 1
    %4316 = vsyncpa [#allocation6], 1
    %4317 = vsyncpa [#allocation9], 1
    %4318 = vsyncpa [#allocation4], 1
    %4319 = vsyncpa [#allocation13], 1

</llo_original>
